<compile_context>
chip_gen: v7x
topology: tpu7x:2x2x1
jax: 0.10.0
libtpu: 0.0.40
codegen_flags: <defaults>
</compile_context>

<pallas_src>
import functools
import math

import jax
import jax.numpy as jnp
from jax import lax
from jax.experimental import pallas as pl
from jax.experimental.pallas import tpu as pltpu


# ---------------------------------------------------------------------------
# Model config (miniature bert-base-cased-shaped encoder)
# ---------------------------------------------------------------------------
VOCAB = 64
MAX_POS = 32
TYPE_VOCAB = 2
HIDDEN = 32            # "bert_dim"
NUM_HEADS = 4
HEAD_DIM = HIDDEN // NUM_HEADS
INTERMEDIATE = 64
NUM_LAYERS = 2
OUTPUT_DIM = 4         # "output_dim"


# ---------------------------------------------------------------------------
# In-kernel helpers (pure value functions)
# ---------------------------------------------------------------------------
def _layernorm(x, g, b, eps=1e-12):
    """LayerNorm over the last dim in f32.  x:(M,H)  g,b:(1,H)."""
    mean = jnp.mean(x, axis=-1, keepdims=True)
    var = jnp.mean(jnp.square(x - mean), axis=-1, keepdims=True)
    return (x - mean) * lax.rsqrt(var + eps) * g + b


def _gelu_erf(x):
    """Exact (erf-form) GELU, as used by BERT."""
    return 0.5 * x * (1.0 + lax.erf(x * (1.0 / math.sqrt(2.0))))


# ---------------------------------------------------------------------------
# Fused encoder kernel: one grid step == one transformer layer
# ---------------------------------------------------------------------------
def _bert_encoder_kernel(
    B, S,
    # inputs
    x_emb_ref, emb_g_ref, emb_b_ref, mask_ref,
    wqkv_ref, bqkv_ref, wo_ref, bo_ref, ln1g_ref, ln1b_ref,
    w1_ref, b1_ref, w2_ref, b2_ref, ln2g_ref, ln2b_ref,
    poolw_ref, poolb_ref, clsw_ref, clsb_ref,
    # outputs
    out_ref,
    # scratch
    x_sc,
):
    layer = pl.program_id(0)

    # ---- layer 0: embedding LayerNorm into the VMEM-resident activation ----
    @pl.when(layer == 0)
    def _():
        x_sc[...] = _layernorm(x_emb_ref[...], emb_g_ref[...], emb_b_ref[...])

    x = x_sc[...]                                   # (B*S, H) f32, stays in VMEM

    # ---- self-attention block (fused QKV, scale folded into Wq) ----
    qkv = jnp.dot(x.astype(jnp.bfloat16), wqkv_ref[...],
                  preferred_element_type=jnp.float32) + bqkv_ref[...]  # (BS, 3H)
    mask = mask_ref[...]                            # (B, S) additive mask

    ctx_rows = []
    for b in range(B):                              # statically unrolled (tiny)
        r0 = b * S
        head_ctx = []
        for h in range(NUM_HEADS):
            c0 = h * HEAD_DIM
            qh = qkv[r0:r0 + S, c0:c0 + HEAD_DIM]                           # (S, dh)
            kh = qkv[r0:r0 + S, HIDDEN + c0:HIDDEN + c0 + HEAD_DIM]         # (S, dh)
            vh = qkv[r0:r0 + S, 2 * HIDDEN + c0:2 * HIDDEN + c0 + HEAD_DIM]  # (S, dh)

            s = jnp.einsum("qd,kd->qk", qh, kh,
                           preferred_element_type=jnp.float32)              # (S, S)
            s = s + mask[b:b + 1, :]
            s = s - jnp.max(s, axis=-1, keepdims=True)
            p = jnp.exp(s)
            p = p * pl.reciprocal(jnp.sum(p, axis=-1, keepdims=True), approx=True)
            head_ctx.append(jnp.einsum("qk,kd->qd", p, vh,
                                       preferred_element_type=jnp.float32))
        ctx_rows.append(jnp.concatenate(head_ctx, axis=-1))                 # (S, H)
    ctx = jnp.concatenate(ctx_rows, axis=0)                                  # (BS, H)

    attn_out = jnp.dot(ctx.astype(jnp.bfloat16), wo_ref[...],
                       preferred_element_type=jnp.float32) + bo_ref[...]
    x = _layernorm(x + attn_out, ln1g_ref[...], ln1b_ref[...])

    # ---- feed-forward block (bias + GELU + residual + LN fused) ----
    hmid = jnp.dot(x.astype(jnp.bfloat16), w1_ref[...],
                   preferred_element_type=jnp.float32) + b1_ref[...]
    hmid = _gelu_erf(hmid)
    ffn = jnp.dot(hmid.astype(jnp.bfloat16), w2_ref[...],
                  preferred_element_type=jnp.float32) + b2_ref[...]
    x = _layernorm(x + ffn, ln2g_ref[...], ln2b_ref[...])
    x_sc[...] = x

    # ---- last layer: pooler -> dropout(identity) -> linear -> relu ----
    @pl.when(layer == pl.num_programs(0) - 1)
    def _():
        cls_tok = jnp.concatenate([x[b * S:b * S + 1, :] for b in range(B)],
                                  axis=0)                                    # (B, H)
        pooled = jnp.tanh(jnp.dot(cls_tok.astype(jnp.bfloat16), poolw_ref[...],
                                  preferred_element_type=jnp.float32)
                          + poolb_ref[...])
        # TODO(synk): dropout is identity here (eval mode); training-mode
        # dropout would use pltpu.prng_seed/prng_random_bits in-kernel.
        logits = jnp.dot(pooled.astype(jnp.bfloat16), clsw_ref[...],
                         preferred_element_type=jnp.float32) + clsb_ref[...]
        out_ref[...] = jnp.maximum(logits, 0.0)


# ---------------------------------------------------------------------------
# Deterministic parameter init (stacked per-layer weights, scale pre-folded)
# ---------------------------------------------------------------------------
def init_params(key):
    def nrm(k, shape, std=0.02):
        return std * jax.random.normal(k, shape, dtype=jnp.float32)

    keys = iter(jax.random.split(key, 64))
    bf16 = jnp.bfloat16

    params = {
        "word_emb": nrm(next(keys), (VOCAB, HIDDEN)),
        "pos_emb": nrm(next(keys), (MAX_POS, HIDDEN)),
        "type_emb": nrm(next(keys), (TYPE_VOCAB, HIDDEN)),
        "emb_ln_g": jnp.ones((1, HIDDEN), jnp.float32),
        "emb_ln_b": jnp.zeros((1, HIDDEN), jnp.float32),
    }

    scale = 1.0 / math.sqrt(HEAD_DIM)   # folded into Wq (and bq==0)
    wqkv, bqkv, wo, bo = [], [], [], []
    ln1g, ln1b, w1, b1, w2, b2, ln2g, ln2b = [], [], [], [], [], [], [], []
    for _ in range(NUM_LAYERS):
        wq = nrm(next(keys), (HIDDEN, HIDDEN)) * scale
        wk = nrm(next(keys), (HIDDEN, HIDDEN))
        wv = nrm(next(keys), (HIDDEN, HIDDEN))
        wqkv.append(jnp.concatenate([wq, wk, wv], axis=1))        # (H, 3H)
        bqkv.append(jnp.zeros((1, 3 * HIDDEN), jnp.float32))
        wo.append(nrm(next(keys), (HIDDEN, HIDDEN)))
        bo.append(jnp.zeros((1, HIDDEN), jnp.float32))
        ln1g.append(jnp.ones((1, HIDDEN), jnp.float32))
        ln1b.append(jnp.zeros((1, HIDDEN), jnp.float32))
        w1.append(nrm(next(keys), (HIDDEN, INTERMEDIATE)))
        b1.append(jnp.zeros((1, INTERMEDIATE), jnp.float32))
        w2.append(nrm(next(keys), (INTERMEDIATE, HIDDEN)))
        b2.append(jnp.zeros((1, HIDDEN), jnp.float32))
        ln2g.append(jnp.ones((1, HIDDEN), jnp.float32))
        ln2b.append(jnp.zeros((1, HIDDEN), jnp.float32))

    params.update({
        "wqkv": jnp.stack(wqkv).astype(bf16),   # (L, H, 3H)  bf16 MXU operands
        "bqkv": jnp.stack(bqkv),                # (L, 1, 3H)  f32
        "wo": jnp.stack(wo).astype(bf16),
        "bo": jnp.stack(bo),
        "ln1_g": jnp.stack(ln1g), "ln1_b": jnp.stack(ln1b),
        "w1": jnp.stack(w1).astype(bf16), "b1": jnp.stack(b1),
        "w2": jnp.stack(w2).astype(bf16), "b2": jnp.stack(b2),
        "ln2_g": jnp.stack(ln2g), "ln2_b": jnp.stack(ln2b),
        "pool_w": nrm(next(keys), (HIDDEN, HIDDEN)).astype(bf16),
        "pool_b": jnp.zeros((1, HIDDEN), jnp.float32),
        "cls_w": nrm(next(keys), (HIDDEN, OUTPUT_DIM)).astype(bf16),
        "cls_b": jnp.zeros((1, OUTPUT_DIM), jnp.float32),
    })
    return params


# ---------------------------------------------------------------------------
# Forward pass (mirrors BertCased.forward)
# ---------------------------------------------------------------------------
@jax.jit
def bert_cased_forward(params, ids, attn_mask):
    B, S = ids.shape
    H = HIDDEN

    # embeddings (gather is glue; LayerNorm happens inside the kernel)
    word = jnp.take(params["word_emb"], ids, axis=0)             # (B,S,H)
    pos = params["pos_emb"][:S][None, :, :]                      # (1,S,H)
    typ = params["type_emb"][0][None, None, :]                   # token_type_ids=0
    x_emb = (word + pos + typ).reshape(B * S, H)

    # additive attention mask (B, S): 0 for valid, -1e9 for masked
    add_mask = (1.0 - attn_mask.astype(jnp.float32)) * -1e9

    kernel = functools.partial(_bert_encoder_kernel, B, S)

    const2 = lambda l: (0, 0)
    per_layer = lambda l: (l, 0, 0)

    out = pl.pallas_call(
        kernel,
        out_shape=jax.ShapeDtypeStruct((B, OUTPUT_DIM), jnp.float32),
        grid=(NUM_LAYERS,),
        in_specs=[
            pl.BlockSpec((B * S, H), const2),                      # x_emb
            pl.BlockSpec((1, H), const2),                          # emb_ln_g
            pl.BlockSpec((1, H), const2),                          # emb_ln_b
            pl.BlockSpec((B, S), const2),                          # add_mask
            pl.BlockSpec((None, H, 3 * H), per_layer),             # wqkv
            pl.BlockSpec((None, 1, 3 * H), per_layer),             # bqkv
            pl.BlockSpec((None, H, H), per_layer),                 # wo
            pl.BlockSpec((None, 1, H), per_layer),                 # bo
            pl.BlockSpec((None, 1, H), per_layer),                 # ln1_g
            pl.BlockSpec((None, 1, H), per_layer),                 # ln1_b
            pl.BlockSpec((None, H, INTERMEDIATE), per_layer),      # w1
            pl.BlockSpec((None, 1, INTERMEDIATE), per_layer),      # b1
            pl.BlockSpec((None, INTERMEDIATE, H), per_layer),      # w2
            pl.BlockSpec((None, 1, H), per_layer),                 # b2
            pl.BlockSpec((None, 1, H), per_layer),                 # ln2_g
            pl.BlockSpec((None, 1, H), per_layer),                 # ln2_b
            pl.BlockSpec((H, H), const2),                          # pool_w
            pl.BlockSpec((1, H), const2),                          # pool_b
            pl.BlockSpec((H, OUTPUT_DIM), const2),                 # cls_w
            pl.BlockSpec((1, OUTPUT_DIM), const2),                 # cls_b
        ],
        out_specs=pl.BlockSpec((B, OUTPUT_DIM), const2),
        scratch_shapes=[pltpu.VMEM((B * S, H), jnp.float32)],      # resident x
        compiler_params=pltpu.CompilerParams(
            dimension_semantics=("arbitrary",)),
    )(
        x_emb, params["emb_ln_g"], params["emb_ln_b"], add_mask,
        params["wqkv"], params["bqkv"], params["wo"], params["bo"],
        params["ln1_g"], params["ln1_b"], params["w1"], params["b1"],
        params["w2"], params["b2"], params["ln2_g"], params["ln2_b"],
        params["pool_w"], params["pool_b"], params["cls_w"], params["cls_b"],
    )
    return out


# ---------------------------------------------------------------------------

if __name__ == "__main__":
    key = jax.random.PRNGKey(0)
    kp, kid = jax.random.split(key)

    params = init_params(kp)

    B, S = 2, 8
    ids = jax.random.randint(kid, (B, S), 0, VOCAB, dtype=jnp.int32)
    mask = jnp.array([[1, 1, 1, 1, 1, 1, 1, 1],
                      [1, 1, 1, 1, 1, 1, 0, 0]], dtype=jnp.int32)

    inputs = {"ids": ids, "mask": mask}
    out = bert_cased_forward(params, inputs["ids"], inputs["mask"])
    out = jax.block_until_ready(out)

    assert out.shape == (B, OUTPUT_DIM)
    assert bool(jnp.all(out >= 0.0))          # ReLU output
    assert bool(jnp.all(jnp.isfinite(out)))
    print("KERNEL_OK")
</pallas_src>

<mosaic_0001>
module attributes {stable_mosaic.version = 11 : i64} {
  func.func @_bert_encoder_kernel(%arg0: i32, %arg1: memref<16x32xf32, #tpu.memory_space<vmem>>, %arg2: memref<1x32xf32, #tpu.memory_space<vmem>>, %arg3: memref<1x32xf32, #tpu.memory_space<vmem>>, %arg4: memref<2x8xf32, #tpu.memory_space<vmem>>, %arg5: memref<1x32x96xbf16, #tpu.memory_space<vmem>>, %arg6: memref<1x1x96xf32, #tpu.memory_space<vmem>>, %arg7: memref<1x32x32xbf16, #tpu.memory_space<vmem>>, %arg8: memref<1x1x32xf32, #tpu.memory_space<vmem>>, %arg9: memref<1x1x32xf32, #tpu.memory_space<vmem>>, %arg10: memref<1x1x32xf32, #tpu.memory_space<vmem>>, %arg11: memref<1x32x64xbf16, #tpu.memory_space<vmem>>, %arg12: memref<1x1x64xf32, #tpu.memory_space<vmem>>, %arg13: memref<1x64x32xbf16, #tpu.memory_space<vmem>>, %arg14: memref<1x1x32xf32, #tpu.memory_space<vmem>>, %arg15: memref<1x1x32xf32, #tpu.memory_space<vmem>>, %arg16: memref<1x1x32xf32, #tpu.memory_space<vmem>>, %arg17: memref<32x32xbf16, #tpu.memory_space<vmem>>, %arg18: memref<1x32xf32, #tpu.memory_space<vmem>>, %arg19: memref<32x4xbf16, #tpu.memory_space<vmem>>, %arg20: memref<1x4xf32, #tpu.memory_space<vmem>>, %arg21: memref<2x4xf32, #tpu.memory_space<vmem>>, %arg22: memref<16x32xf32, #tpu.memory_space<vmem>>) attributes {dimension_semantics = [#tpu.dimension_semantics<arbitrary>], iteration_bounds = array<i64: 2>, scalar_prefetch = 0 : i64, scratch_operands = 1 : i64, tpu.core_type = #tpu.core_type<tc>, window_params = [{pipeline_mode = #tpu.pipeline_mode<synchronous>, transform_indices = @transform_0, window_bounds = array<i64: 16, 32>}, {pipeline_mode = #tpu.pipeline_mode<synchronous>, transform_indices = @transform_1, window_bounds = array<i64: 1, 32>}, {pipeline_mode = #tpu.pipeline_mode<synchronous>, transform_indices = @transform_2, window_bounds = array<i64: 1, 32>}, {pipeline_mode = #tpu.pipeline_mode<synchronous>, transform_indices = @transform_3, window_bounds = array<i64: 2, 8>}, {transform_indices = @transform_4, window_bounds = array<i64: 1, 32, 96>}, {transform_indices = @transform_5, window_bounds = array<i64: 1, 1, 96>}, {transform_indices = @transform_6, window_bounds = array<i64: 1, 32, 32>}, {transform_indices = @transform_7, window_bounds = array<i64: 1, 1, 32>}, {transform_indices = @transform_8, window_bounds = array<i64: 1, 1, 32>}, {transform_indices = @transform_9, window_bounds = array<i64: 1, 1, 32>}, {transform_indices = @transform_10, window_bounds = array<i64: 1, 32, 64>}, {transform_indices = @transform_11, window_bounds = array<i64: 1, 1, 64>}, {transform_indices = @transform_12, window_bounds = array<i64: 1, 64, 32>}, {transform_indices = @transform_13, window_bounds = array<i64: 1, 1, 32>}, {transform_indices = @transform_14, window_bounds = array<i64: 1, 1, 32>}, {transform_indices = @transform_15, window_bounds = array<i64: 1, 1, 32>}, {pipeline_mode = #tpu.pipeline_mode<synchronous>, transform_indices = @transform_16, window_bounds = array<i64: 32, 32>}, {pipeline_mode = #tpu.pipeline_mode<synchronous>, transform_indices = @transform_17, window_bounds = array<i64: 1, 32>}, {pipeline_mode = #tpu.pipeline_mode<synchronous>, transform_indices = @transform_18, window_bounds = array<i64: 32, 4>}, {pipeline_mode = #tpu.pipeline_mode<synchronous>, transform_indices = @transform_19, window_bounds = array<i64: 1, 4>}, {pipeline_mode = #tpu.pipeline_mode<synchronous>, transform_indices = @transform_20, window_bounds = array<i64: 2, 4>}]} {
    %c0_i32 = arith.constant 0 : i32
    %0 = arith.cmpi eq, %arg0, %c0_i32 : i32
    %1 = arith.extui %0 : i1 to i32
    %c0_i32_0 = arith.constant 0 : i32
    %2 = arith.cmpi ne, %1, %c0_i32_0 : i32
    scf.if %2 {
      %c0_91 = arith.constant 0 : index
      %c0_92 = arith.constant 0 : index
      %250 = vector.load %arg1[%c0_91, %c0_92] : memref<16x32xf32, #tpu.memory_space<vmem>>, vector<16x32xf32>
      %c0_93 = arith.constant 0 : index
      %c0_94 = arith.constant 0 : index
      %251 = vector.load %arg2[%c0_93, %c0_94] : memref<1x32xf32, #tpu.memory_space<vmem>>, vector<1x32xf32>
      %c0_95 = arith.constant 0 : index
      %c0_96 = arith.constant 0 : index
      %252 = vector.load %arg3[%c0_95, %c0_96] : memref<1x32xf32, #tpu.memory_space<vmem>>, vector<1x32xf32>
      %cst_97 = arith.constant dense<0.000000e+00> : vector<16xf32>
      %253 = vector.multi_reduction <add>, %250, %cst_97 [1] : vector<16x32xf32> to vector<16xf32>
      %254 = vector.shape_cast %253 : vector<16xf32> to vector<16x1xf32>
      %cst_98 = arith.constant 3.200000e+01 : f32
      %255 = vector.broadcast %cst_98 : f32 to vector<16x1xf32>
      %256 = arith.divf %254, %255 : vector<16x1xf32>
      %257 = vector.broadcast %256 : vector<16x1xf32> to vector<16x32xf32>
      %258 = arith.subf %250, %257 : vector<16x32xf32>
      %259 = arith.mulf %258, %258 : vector<16x32xf32>
      %cst_99 = arith.constant dense<0.000000e+00> : vector<16xf32>
      %260 = vector.multi_reduction <add>, %259, %cst_99 [1] : vector<16x32xf32> to vector<16xf32>
      %261 = vector.shape_cast %260 : vector<16xf32> to vector<16x1xf32>
      %cst_100 = arith.constant 3.200000e+01 : f32
      %262 = vector.broadcast %cst_100 : f32 to vector<16x1xf32>
      %263 = arith.divf %261, %262 : vector<16x1xf32>
      %264 = vector.broadcast %256 : vector<16x1xf32> to vector<16x32xf32>
      %265 = arith.subf %250, %264 : vector<16x32xf32>
      %cst_101 = arith.constant 9.99999996E-13 : f32
      %266 = vector.broadcast %cst_101 : f32 to vector<16x1xf32>
      %267 = arith.addf %263, %266 : vector<16x1xf32>
      %268 = math.rsqrt %267 : vector<16x1xf32>
      %269 = vector.broadcast %268 : vector<16x1xf32> to vector<16x32xf32>
      %270 = arith.mulf %265, %269 : vector<16x32xf32>
      %271 = vector.broadcast %251 : vector<1x32xf32> to vector<16x32xf32>
      %272 = arith.mulf %270, %271 : vector<16x32xf32>
      %273 = vector.broadcast %252 : vector<1x32xf32> to vector<16x32xf32>
      %274 = arith.addf %272, %273 : vector<16x32xf32>
      %c0_102 = arith.constant 0 : index
      %c0_103 = arith.constant 0 : index
      %275 = vector.load %arg22[%c0_102, %c0_103] : memref<16x32xf32, #tpu.memory_space<vmem>>, vector<16x32xf32>
      tpu.vector_store %arg22[%c0_102, %c0_103], %274 {strides = array<i32>} : memref<16x32xf32, #tpu.memory_space<vmem>>, vector<16x32xf32>,
    } else {
    }
    %c0 = arith.constant 0 : index
    %c0_1 = arith.constant 0 : index
    %3 = vector.load %arg22[%c0, %c0_1] : memref<16x32xf32, #tpu.memory_space<vmem>>, vector<16x32xf32>
    %4 = arith.truncf %3 : vector<16x32xf32> to vector<16x32xbf16>
    %c0_2 = arith.constant 0 : index
    %c0_3 = arith.constant 0 : index
    %c0_4 = arith.constant 0 : index
    %5 = vector.load %arg5[%c0_2, %c0_3, %c0_4] : memref<1x32x96xbf16, #tpu.memory_space<vmem>>, vector<1x32x96xbf16>
    %6 = vector.shape_cast %5 : vector<1x32x96xbf16> to vector<32x96xbf16>
    %cst = arith.constant dense<0.000000e+00> : vector<16x96xf32>
    %7 = tpu.matmul %4, %6, %cst {dimension_numbers = #tpu.dot_dimension_numbers<[1], [0], [0], [1], [0, 0, 1, 1], [], []>} : vector<16x32xbf16>, vector<32x96xbf16>, vector<16x96xf32> -> vector<16x96xf32>
    %c0_5 = arith.constant 0 : index
    %c0_6 = arith.constant 0 : index
    %c0_7 = arith.constant 0 : index
    %8 = vector.load %arg6[%c0_5, %c0_6, %c0_7] : memref<1x1x96xf32, #tpu.memory_space<vmem>>, vector<1x1x96xf32>
    %9 = vector.shape_cast %8 : vector<1x1x96xf32> to vector<1x96xf32>
    %10 = vector.broadcast %9 : vector<1x96xf32> to vector<16x96xf32>
    %11 = arith.addf %7, %10 : vector<16x96xf32>
    %c0_8 = arith.constant 0 : index
    %c0_9 = arith.constant 0 : index
    %12 = vector.load %arg4[%c0_8, %c0_9] : memref<2x8xf32, #tpu.memory_space<vmem>>, vector<2x8xf32>
    %13 = vector.extract_strided_slice %11 {offsets = [0, 0], sizes = [8, 8], strides = [1, 1]} : vector<16x96xf32> to vector<8x8xf32>
    %14 = vector.extract_strided_slice %11 {offsets = [0, 32], sizes = [8, 8], strides = [1, 1]} : vector<16x96xf32> to vector<8x8xf32>
    %15 = vector.extract_strided_slice %11 {offsets = [0, 64], sizes = [8, 8], strides = [1, 1]} : vector<16x96xf32> to vector<8x8xf32>
    "tpu.trace_start"() <{level = 10 : i32, message = "qd,kd->qk"}> : () -> ()
    %cst_10 = arith.constant dense<0.000000e+00> : vector<8x8xf32>
    %16 = tpu.matmul %13, %14, %cst_10 {dimension_numbers = #tpu.dot_dimension_numbers<[1], [1], [0], [0], [0, 0, 1, 0], [], []>} : vector<8x8xf32>, vector<8x8xf32>, vector<8x8xf32> -> vector<8x8xf32>
    "tpu.trace_stop"() : () -> ()
    %17 = vector.extract_strided_slice %12 {offsets = [0, 0], sizes = [1, 8], strides = [1, 1]} : vector<2x8xf32> to vector<1x8xf32>
    %18 = vector.broadcast %17 : vector<1x8xf32> to vector<8x8xf32>
    %19 = arith.addf %16, %18 : vector<8x8xf32>
    %cst_11 = arith.constant dense<0xFF800000> : vector<8xf32>
    %20 = vector.multi_reduction <maximumf>, %19, %cst_11 [1] : vector<8x8xf32> to vector<8xf32>
    %21 = vector.shape_cast %20 : vector<8xf32> to vector<8x1xf32>
    %22 = vector.broadcast %21 : vector<8x1xf32> to vector<8x8xf32>
    %23 = arith.subf %19, %22 : vector<8x8xf32>
    %24 = math.exp %23 : vector<8x8xf32>
    %cst_12 = arith.constant dense<0.000000e+00> : vector<8xf32>
    %25 = vector.multi_reduction <add>, %24, %cst_12 [1] : vector<8x8xf32> to vector<8xf32>
    %26 = vector.shape_cast %25 : vector<8xf32> to vector<8x1xf32>
    %27 = tpu.reciprocal %26 {approx = true} : vector<8x1xf32> -> vector<8x1xf32>
    %28 = vector.broadcast %27 : vector<8x1xf32> to vector<8x8xf32>
    %29 = arith.mulf %24, %28 : vector<8x8xf32>
    "tpu.trace_start"() <{level = 10 : i32, message = "qk,kd->qd"}> : () -> ()
    %cst_13 = arith.constant dense<0.000000e+00> : vector<8x8xf32>
    %30 = tpu.matmul %29, %15, %cst_13 {dimension_numbers = #tpu.dot_dimension_numbers<[1], [0], [0], [1], [0, 0, 1, 1], [], []>} : vector<8x8xf32>, vector<8x8xf32>, vector<8x8xf32> -> vector<8x8xf32>
    "tpu.trace_stop"() : () -> ()
    %31 = vector.extract_strided_slice %11 {offsets = [0, 8], sizes = [8, 8], strides = [1, 1]} : vector<16x96xf32> to vector<8x8xf32>
    %32 = vector.extract_strided_slice %11 {offsets = [0, 40], sizes = [8, 8], strides = [1, 1]} : vector<16x96xf32> to vector<8x8xf32>
    %33 = vector.extract_strided_slice %11 {offsets = [0, 72], sizes = [8, 8], strides = [1, 1]} : vector<16x96xf32> to vector<8x8xf32>
    "tpu.trace_start"() <{level = 10 : i32, message = "qd,kd->qk"}> : () -> ()
    %cst_14 = arith.constant dense<0.000000e+00> : vector<8x8xf32>
    %34 = tpu.matmul %31, %32, %cst_14 {dimension_numbers = #tpu.dot_dimension_numbers<[1], [1], [0], [0], [0, 0, 1, 0], [], []>} : vector<8x8xf32>, vector<8x8xf32>, vector<8x8xf32> -> vector<8x8xf32>
    "tpu.trace_stop"() : () -> ()
    %35 = vector.extract_strided_slice %12 {offsets = [0, 0], sizes = [1, 8], strides = [1, 1]} : vector<2x8xf32> to vector<1x8xf32>
    %36 = vector.broadcast %35 : vector<1x8xf32> to vector<8x8xf32>
    %37 = arith.addf %34, %36 : vector<8x8xf32>
    %cst_15 = arith.constant dense<0xFF800000> : vector<8xf32>
    %38 = vector.multi_reduction <maximumf>, %37, %cst_15 [1] : vector<8x8xf32> to vector<8xf32>
    %39 = vector.shape_cast %38 : vector<8xf32> to vector<8x1xf32>
    %40 = vector.broadcast %39 : vector<8x1xf32> to vector<8x8xf32>
    %41 = arith.subf %37, %40 : vector<8x8xf32>
    %42 = math.exp %41 : vector<8x8xf32>
    %cst_16 = arith.constant dense<0.000000e+00> : vector<8xf32>
    %43 = vector.multi_reduction <add>, %42, %cst_16 [1] : vector<8x8xf32> to vector<8xf32>
    %44 = vector.shape_cast %43 : vector<8xf32> to vector<8x1xf32>
    %45 = tpu.reciprocal %44 {approx = true} : vector<8x1xf32> -> vector<8x1xf32>
    %46 = vector.broadcast %45 : vector<8x1xf32> to vector<8x8xf32>
    %47 = arith.mulf %42, %46 : vector<8x8xf32>
    "tpu.trace_start"() <{level = 10 : i32, message = "qk,kd->qd"}> : () -> ()
    %cst_17 = arith.constant dense<0.000000e+00> : vector<8x8xf32>
    %48 = tpu.matmul %47, %33, %cst_17 {dimension_numbers = #tpu.dot_dimension_numbers<[1], [0], [0], [1], [0, 0, 1, 1], [], []>} : vector<8x8xf32>, vector<8x8xf32>, vector<8x8xf32> -> vector<8x8xf32>
    "tpu.trace_stop"() : () -> ()
    %49 = vector.extract_strided_slice %11 {offsets = [0, 16], sizes = [8, 8], strides = [1, 1]} : vector<16x96xf32> to vector<8x8xf32>
    %50 = vector.extract_strided_slice %11 {offsets = [0, 48], sizes = [8, 8], strides = [1, 1]} : vector<16x96xf32> to vector<8x8xf32>
    %51 = vector.extract_strided_slice %11 {offsets = [0, 80], sizes = [8, 8], strides = [1, 1]} : vector<16x96xf32> to vector<8x8xf32>
    "tpu.trace_start"() <{level = 10 : i32, message = "qd,kd->qk"}> : () -> ()
    %cst_18 = arith.constant dense<0.000000e+00> : vector<8x8xf32>
    %52 = tpu.matmul %49, %50, %cst_18 {dimension_numbers = #tpu.dot_dimension_numbers<[1], [1], [0], [0], [0, 0, 1, 0], [], []>} : vector<8x8xf32>, vector<8x8xf32>, vector<8x8xf32> -> vector<8x8xf32>
    "tpu.trace_stop"() : () -> ()
    %53 = vector.extract_strided_slice %12 {offsets = [0, 0], sizes = [1, 8], strides = [1, 1]} : vector<2x8xf32> to vector<1x8xf32>
    %54 = vector.broadcast %53 : vector<1x8xf32> to vector<8x8xf32>
    %55 = arith.addf %52, %54 : vector<8x8xf32>
    %cst_19 = arith.constant dense<0xFF800000> : vector<8xf32>
    %56 = vector.multi_reduction <maximumf>, %55, %cst_19 [1] : vector<8x8xf32> to vector<8xf32>
    %57 = vector.shape_cast %56 : vector<8xf32> to vector<8x1xf32>
    %58 = vector.broadcast %57 : vector<8x1xf32> to vector<8x8xf32>
    %59 = arith.subf %55, %58 : vector<8x8xf32>
    %60 = math.exp %59 : vector<8x8xf32>
    %cst_20 = arith.constant dense<0.000000e+00> : vector<8xf32>
    %61 = vector.multi_reduction <add>, %60, %cst_20 [1] : vector<8x8xf32> to vector<8xf32>
    %62 = vector.shape_cast %61 : vector<8xf32> to vector<8x1xf32>
    %63 = tpu.reciprocal %62 {approx = true} : vector<8x1xf32> -> vector<8x1xf32>
    %64 = vector.broadcast %63 : vector<8x1xf32> to vector<8x8xf32>
    %65 = arith.mulf %60, %64 : vector<8x8xf32>
    "tpu.trace_start"() <{level = 10 : i32, message = "qk,kd->qd"}> : () -> ()
    %cst_21 = arith.constant dense<0.000000e+00> : vector<8x8xf32>
    %66 = tpu.matmul %65, %51, %cst_21 {dimension_numbers = #tpu.dot_dimension_numbers<[1], [0], [0], [1], [0, 0, 1, 1], [], []>} : vector<8x8xf32>, vector<8x8xf32>, vector<8x8xf32> -> vector<8x8xf32>
    "tpu.trace_stop"() : () -> ()
    %67 = vector.extract_strided_slice %11 {offsets = [0, 24], sizes = [8, 8], strides = [1, 1]} : vector<16x96xf32> to vector<8x8xf32>
    %68 = vector.extract_strided_slice %11 {offsets = [0, 56], sizes = [8, 8], strides = [1, 1]} : vector<16x96xf32> to vector<8x8xf32>
    %69 = vector.extract_strided_slice %11 {offsets = [0, 88], sizes = [8, 8], strides = [1, 1]} : vector<16x96xf32> to vector<8x8xf32>
    "tpu.trace_start"() <{level = 10 : i32, message = "qd,kd->qk"}> : () -> ()
    %cst_22 = arith.constant dense<0.000000e+00> : vector<8x8xf32>
    %70 = tpu.matmul %67, %68, %cst_22 {dimension_numbers = #tpu.dot_dimension_numbers<[1], [1], [0], [0], [0, 0, 1, 0], [], []>} : vector<8x8xf32>, vector<8x8xf32>, vector<8x8xf32> -> vector<8x8xf32>
    "tpu.trace_stop"() : () -> ()
    %71 = vector.extract_strided_slice %12 {offsets = [0, 0], sizes = [1, 8], strides = [1, 1]} : vector<2x8xf32> to vector<1x8xf32>
    %72 = vector.broadcast %71 : vector<1x8xf32> to vector<8x8xf32>
    %73 = arith.addf %70, %72 : vector<8x8xf32>
    %cst_23 = arith.constant dense<0xFF800000> : vector<8xf32>
    %74 = vector.multi_reduction <maximumf>, %73, %cst_23 [1] : vector<8x8xf32> to vector<8xf32>
    %75 = vector.shape_cast %74 : vector<8xf32> to vector<8x1xf32>
    %76 = vector.broadcast %75 : vector<8x1xf32> to vector<8x8xf32>
    %77 = arith.subf %73, %76 : vector<8x8xf32>
    %78 = math.exp %77 : vector<8x8xf32>
    %cst_24 = arith.constant dense<0.000000e+00> : vector<8xf32>
    %79 = vector.multi_reduction <add>, %78, %cst_24 [1] : vector<8x8xf32> to vector<8xf32>
    %80 = vector.shape_cast %79 : vector<8xf32> to vector<8x1xf32>
    %81 = tpu.reciprocal %80 {approx = true} : vector<8x1xf32> -> vector<8x1xf32>
    %82 = vector.broadcast %81 : vector<8x1xf32> to vector<8x8xf32>
    %83 = arith.mulf %78, %82 : vector<8x8xf32>
    "tpu.trace_start"() <{level = 10 : i32, message = "qk,kd->qd"}> : () -> ()
    %cst_25 = arith.constant dense<0.000000e+00> : vector<8x8xf32>
    %84 = tpu.matmul %83, %69, %cst_25 {dimension_numbers = #tpu.dot_dimension_numbers<[1], [0], [0], [1], [0, 0, 1, 1], [], []>} : vector<8x8xf32>, vector<8x8xf32>, vector<8x8xf32> -> vector<8x8xf32>
    "tpu.trace_stop"() : () -> ()
    %85 = tpu.concatenate %30, %48, %66, %84 in 1 : vector<8x8xf32>, vector<8x8xf32>, vector<8x8xf32>, vector<8x8xf32> -> vector<8x32xf32>
    %86 = vector.extract_strided_slice %11 {offsets = [8, 0], sizes = [8, 8], strides = [1, 1]} : vector<16x96xf32> to vector<8x8xf32>
    %87 = vector.extract_strided_slice %11 {offsets = [8, 32], sizes = [8, 8], strides = [1, 1]} : vector<16x96xf32> to vector<8x8xf32>
    %88 = vector.extract_strided_slice %11 {offsets = [8, 64], sizes = [8, 8], strides = [1, 1]} : vector<16x96xf32> to vector<8x8xf32>
    "tpu.trace_start"() <{level = 10 : i32, message = "qd,kd->qk"}> : () -> ()
    %cst_26 = arith.constant dense<0.000000e+00> : vector<8x8xf32>
    %89 = tpu.matmul %86, %87, %cst_26 {dimension_numbers = #tpu.dot_dimension_numbers<[1], [1], [0], [0], [0, 0, 1, 0], [], []>} : vector<8x8xf32>, vector<8x8xf32>, vector<8x8xf32> -> vector<8x8xf32>
    "tpu.trace_stop"() : () -> ()
    %90 = vector.extract_strided_slice %12 {offsets = [1, 0], sizes = [1, 8], strides = [1, 1]} : vector<2x8xf32> to vector<1x8xf32>
    %91 = vector.broadcast %90 : vector<1x8xf32> to vector<8x8xf32>
    %92 = arith.addf %89, %91 : vector<8x8xf32>
    %cst_27 = arith.constant dense<0xFF800000> : vector<8xf32>
    %93 = vector.multi_reduction <maximumf>, %92, %cst_27 [1] : vector<8x8xf32> to vector<8xf32>
    %94 = vector.shape_cast %93 : vector<8xf32> to vector<8x1xf32>
    %95 = vector.broadcast %94 : vector<8x1xf32> to vector<8x8xf32>
    %96 = arith.subf %92, %95 : vector<8x8xf32>
    %97 = math.exp %96 : vector<8x8xf32>
    %cst_28 = arith.constant dense<0.000000e+00> : vector<8xf32>
    %98 = vector.multi_reduction <add>, %97, %cst_28 [1] : vector<8x8xf32> to vector<8xf32>
    %99 = vector.shape_cast %98 : vector<8xf32> to vector<8x1xf32>
    %100 = tpu.reciprocal %99 {approx = true} : vector<8x1xf32> -> vector<8x1xf32>
    %101 = vector.broadcast %100 : vector<8x1xf32> to vector<8x8xf32>
    %102 = arith.mulf %97, %101 : vector<8x8xf32>
    "tpu.trace_start"() <{level = 10 : i32, message = "qk,kd->qd"}> : () -> ()
    %cst_29 = arith.constant dense<0.000000e+00> : vector<8x8xf32>
    %103 = tpu.matmul %102, %88, %cst_29 {dimension_numbers = #tpu.dot_dimension_numbers<[1], [0], [0], [1], [0, 0, 1, 1], [], []>} : vector<8x8xf32>, vector<8x8xf32>, vector<8x8xf32> -> vector<8x8xf32>
    "tpu.trace_stop"() : () -> ()
    %104 = vector.extract_strided_slice %11 {offsets = [8, 8], sizes = [8, 8], strides = [1, 1]} : vector<16x96xf32> to vector<8x8xf32>
    %105 = vector.extract_strided_slice %11 {offsets = [8, 40], sizes = [8, 8], strides = [1, 1]} : vector<16x96xf32> to vector<8x8xf32>
    %106 = vector.extract_strided_slice %11 {offsets = [8, 72], sizes = [8, 8], strides = [1, 1]} : vector<16x96xf32> to vector<8x8xf32>
    "tpu.trace_start"() <{level = 10 : i32, message = "qd,kd->qk"}> : () -> ()
    %cst_30 = arith.constant dense<0.000000e+00> : vector<8x8xf32>
    %107 = tpu.matmul %104, %105, %cst_30 {dimension_numbers = #tpu.dot_dimension_numbers<[1], [1], [0], [0], [0, 0, 1, 0], [], []>} : vector<8x8xf32>, vector<8x8xf32>, vector<8x8xf32> -> vector<8x8xf32>
    "tpu.trace_stop"() : () -> ()
    %108 = vector.extract_strided_slice %12 {offsets = [1, 0], sizes = [1, 8], strides = [1, 1]} : vector<2x8xf32> to vector<1x8xf32>
    %109 = vector.broadcast %108 : vector<1x8xf32> to vector<8x8xf32>
    %110 = arith.addf %107, %109 : vector<8x8xf32>
    %cst_31 = arith.constant dense<0xFF800000> : vector<8xf32>
    %111 = vector.multi_reduction <maximumf>, %110, %cst_31 [1] : vector<8x8xf32> to vector<8xf32>
    %112 = vector.shape_cast %111 : vector<8xf32> to vector<8x1xf32>
    %113 = vector.broadcast %112 : vector<8x1xf32> to vector<8x8xf32>
    %114 = arith.subf %110, %113 : vector<8x8xf32>
    %115 = math.exp %114 : vector<8x8xf32>
    %cst_32 = arith.constant dense<0.000000e+00> : vector<8xf32>
    %116 = vector.multi_reduction <add>, %115, %cst_32 [1] : vector<8x8xf32> to vector<8xf32>
    %117 = vector.shape_cast %116 : vector<8xf32> to vector<8x1xf32>
    %118 = tpu.reciprocal %117 {approx = true} : vector<8x1xf32> -> vector<8x1xf32>
    %119 = vector.broadcast %118 : vector<8x1xf32> to vector<8x8xf32>
    %120 = arith.mulf %115, %119 : vector<8x8xf32>
    "tpu.trace_start"() <{level = 10 : i32, message = "qk,kd->qd"}> : () -> ()
    %cst_33 = arith.constant dense<0.000000e+00> : vector<8x8xf32>
    %121 = tpu.matmul %120, %106, %cst_33 {dimension_numbers = #tpu.dot_dimension_numbers<[1], [0], [0], [1], [0, 0, 1, 1], [], []>} : vector<8x8xf32>, vector<8x8xf32>, vector<8x8xf32> -> vector<8x8xf32>
    "tpu.trace_stop"() : () -> ()
    %122 = vector.extract_strided_slice %11 {offsets = [8, 16], sizes = [8, 8], strides = [1, 1]} : vector<16x96xf32> to vector<8x8xf32>
    %123 = vector.extract_strided_slice %11 {offsets = [8, 48], sizes = [8, 8], strides = [1, 1]} : vector<16x96xf32> to vector<8x8xf32>
    %124 = vector.extract_strided_slice %11 {offsets = [8, 80], sizes = [8, 8], strides = [1, 1]} : vector<16x96xf32> to vector<8x8xf32>
    "tpu.trace_start"() <{level = 10 : i32, message = "qd,kd->qk"}> : () -> ()
    %cst_34 = arith.constant dense<0.000000e+00> : vector<8x8xf32>
    %125 = tpu.matmul %122, %123, %cst_34 {dimension_numbers = #tpu.dot_dimension_numbers<[1], [1], [0], [0], [0, 0, 1, 0], [], []>} : vector<8x8xf32>, vector<8x8xf32>, vector<8x8xf32> -> vector<8x8xf32>
    "tpu.trace_stop"() : () -> ()
    %126 = vector.extract_strided_slice %12 {offsets = [1, 0], sizes = [1, 8], strides = [1, 1]} : vector<2x8xf32> to vector<1x8xf32>
    %127 = vector.broadcast %126 : vector<1x8xf32> to vector<8x8xf32>
    %128 = arith.addf %125, %127 : vector<8x8xf32>
    %cst_35 = arith.constant dense<0xFF800000> : vector<8xf32>
    %129 = vector.multi_reduction <maximumf>, %128, %cst_35 [1] : vector<8x8xf32> to vector<8xf32>
    %130 = vector.shape_cast %129 : vector<8xf32> to vector<8x1xf32>
    %131 = vector.broadcast %130 : vector<8x1xf32> to vector<8x8xf32>
    %132 = arith.subf %128, %131 : vector<8x8xf32>
    %133 = math.exp %132 : vector<8x8xf32>
    %cst_36 = arith.constant dense<0.000000e+00> : vector<8xf32>
    %134 = vector.multi_reduction <add>, %133, %cst_36 [1] : vector<8x8xf32> to vector<8xf32>
    %135 = vector.shape_cast %134 : vector<8xf32> to vector<8x1xf32>
    %136 = tpu.reciprocal %135 {approx = true} : vector<8x1xf32> -> vector<8x1xf32>
    %137 = vector.broadcast %136 : vector<8x1xf32> to vector<8x8xf32>
    %138 = arith.mulf %133, %137 : vector<8x8xf32>
    "tpu.trace_start"() <{level = 10 : i32, message = "qk,kd->qd"}> : () -> ()
    %cst_37 = arith.constant dense<0.000000e+00> : vector<8x8xf32>
    %139 = tpu.matmul %138, %124, %cst_37 {dimension_numbers = #tpu.dot_dimension_numbers<[1], [0], [0], [1], [0, 0, 1, 1], [], []>} : vector<8x8xf32>, vector<8x8xf32>, vector<8x8xf32> -> vector<8x8xf32>
    "tpu.trace_stop"() : () -> ()
    %140 = vector.extract_strided_slice %11 {offsets = [8, 24], sizes = [8, 8], strides = [1, 1]} : vector<16x96xf32> to vector<8x8xf32>
    %141 = vector.extract_strided_slice %11 {offsets = [8, 56], sizes = [8, 8], strides = [1, 1]} : vector<16x96xf32> to vector<8x8xf32>
    %142 = vector.extract_strided_slice %11 {offsets = [8, 88], sizes = [8, 8], strides = [1, 1]} : vector<16x96xf32> to vector<8x8xf32>
    "tpu.trace_start"() <{level = 10 : i32, message = "qd,kd->qk"}> : () -> ()
    %cst_38 = arith.constant dense<0.000000e+00> : vector<8x8xf32>
    %143 = tpu.matmul %140, %141, %cst_38 {dimension_numbers = #tpu.dot_dimension_numbers<[1], [1], [0], [0], [0, 0, 1, 0], [], []>} : vector<8x8xf32>, vector<8x8xf32>, vector<8x8xf32> -> vector<8x8xf32>
    "tpu.trace_stop"() : () -> ()
    %144 = vector.extract_strided_slice %12 {offsets = [1, 0], sizes = [1, 8], strides = [1, 1]} : vector<2x8xf32> to vector<1x8xf32>
    %145 = vector.broadcast %144 : vector<1x8xf32> to vector<8x8xf32>
    %146 = arith.addf %143, %145 : vector<8x8xf32>
    %cst_39 = arith.constant dense<0xFF800000> : vector<8xf32>
    %147 = vector.multi_reduction <maximumf>, %146, %cst_39 [1] : vector<8x8xf32> to vector<8xf32>
    %148 = vector.shape_cast %147 : vector<8xf32> to vector<8x1xf32>
    %149 = vector.broadcast %148 : vector<8x1xf32> to vector<8x8xf32>
    %150 = arith.subf %146, %149 : vector<8x8xf32>
    %151 = math.exp %150 : vector<8x8xf32>
    %cst_40 = arith.constant dense<0.000000e+00> : vector<8xf32>
    %152 = vector.multi_reduction <add>, %151, %cst_40 [1] : vector<8x8xf32> to vector<8xf32>
    %153 = vector.shape_cast %152 : vector<8xf32> to vector<8x1xf32>
    %154 = tpu.reciprocal %153 {approx = true} : vector<8x1xf32> -> vector<8x1xf32>
    %155 = vector.broadcast %154 : vector<8x1xf32> to vector<8x8xf32>
    %156 = arith.mulf %151, %155 : vector<8x8xf32>
    "tpu.trace_start"() <{level = 10 : i32, message = "qk,kd->qd"}> : () -> ()
    %cst_41 = arith.constant dense<0.000000e+00> : vector<8x8xf32>
    %157 = tpu.matmul %156, %142, %cst_41 {dimension_numbers = #tpu.dot_dimension_numbers<[1], [0], [0], [1], [0, 0, 1, 1], [], []>} : vector<8x8xf32>, vector<8x8xf32>, vector<8x8xf32> -> vector<8x8xf32>
    "tpu.trace_stop"() : () -> ()
    %158 = tpu.concatenate %103, %121, %139, %157 in 1 : vector<8x8xf32>, vector<8x8xf32>, vector<8x8xf32>, vector<8x8xf32> -> vector<8x32xf32>
    %159 = tpu.concatenate %85, %158 in 0 : vector<8x32xf32>, vector<8x32xf32> -> vector<16x32xf32>
    %160 = arith.truncf %159 : vector<16x32xf32> to vector<16x32xbf16>
    %c0_42 = arith.constant 0 : index
    %c0_43 = arith.constant 0 : index
    %c0_44 = arith.constant 0 : index
    %161 = vector.load %arg7[%c0_42, %c0_43, %c0_44] : memref<1x32x32xbf16, #tpu.memory_space<vmem>>, vector<1x32x32xbf16>
    %162 = vector.shape_cast %161 : vector<1x32x32xbf16> to vector<32x32xbf16>
    %cst_45 = arith.constant dense<0.000000e+00> : vector<16x32xf32>
    %163 = tpu.matmul %160, %162, %cst_45 {dimension_numbers = #tpu.dot_dimension_numbers<[1], [0], [0], [1], [0, 0, 1, 1], [], []>} : vector<16x32xbf16>, vector<32x32xbf16>, vector<16x32xf32> -> vector<16x32xf32>
    %c0_46 = arith.constant 0 : index
    %c0_47 = arith.constant 0 : index
    %c0_48 = arith.constant 0 : index
    %164 = vector.load %arg8[%c0_46, %c0_47, %c0_48] : memref<1x1x32xf32, #tpu.memory_space<vmem>>, vector<1x1x32xf32>
    %165 = vector.shape_cast %164 : vector<1x1x32xf32> to vector<1x32xf32>
    %166 = vector.broadcast %165 : vector<1x32xf32> to vector<16x32xf32>
    %167 = arith.addf %163, %166 : vector<16x32xf32>
    %168 = arith.addf %3, %167 : vector<16x32xf32>
    %c0_49 = arith.constant 0 : index
    %c0_50 = arith.constant 0 : index
    %c0_51 = arith.constant 0 : index
    %169 = vector.load %arg9[%c0_49, %c0_50, %c0_51] : memref<1x1x32xf32, #tpu.memory_space<vmem>>, vector<1x1x32xf32>
    %170 = vector.shape_cast %169 : vector<1x1x32xf32> to vector<1x32xf32>
    %c0_52 = arith.constant 0 : index
    %c0_53 = arith.constant 0 : index
    %c0_54 = arith.constant 0 : index
    %171 = vector.load %arg10[%c0_52, %c0_53, %c0_54] : memref<1x1x32xf32, #tpu.memory_space<vmem>>, vector<1x1x32xf32>
    %172 = vector.shape_cast %171 : vector<1x1x32xf32> to vector<1x32xf32>
    %cst_55 = arith.constant dense<0.000000e+00> : vector<16xf32>
    %173 = vector.multi_reduction <add>, %168, %cst_55 [1] : vector<16x32xf32> to vector<16xf32>
    %174 = vector.shape_cast %173 : vector<16xf32> to vector<16x1xf32>
    %cst_56 = arith.constant 3.200000e+01 : f32
    %175 = vector.broadcast %cst_56 : f32 to vector<16x1xf32>
    %176 = arith.divf %174, %175 : vector<16x1xf32>
    %177 = vector.broadcast %176 : vector<16x1xf32> to vector<16x32xf32>
    %178 = arith.subf %168, %177 : vector<16x32xf32>
    %179 = arith.mulf %178, %178 : vector<16x32xf32>
    %cst_57 = arith.constant dense<0.000000e+00> : vector<16xf32>
    %180 = vector.multi_reduction <add>, %179, %cst_57 [1] : vector<16x32xf32> to vector<16xf32>
    %181 = vector.shape_cast %180 : vector<16xf32> to vector<16x1xf32>
    %cst_58 = arith.constant 3.200000e+01 : f32
    %182 = vector.broadcast %cst_58 : f32 to vector<16x1xf32>
    %183 = arith.divf %181, %182 : vector<16x1xf32>
    %184 = vector.broadcast %176 : vector<16x1xf32> to vector<16x32xf32>
    %185 = arith.subf %168, %184 : vector<16x32xf32>
    %cst_59 = arith.constant 9.99999996E-13 : f32
    %186 = vector.broadcast %cst_59 : f32 to vector<16x1xf32>
    %187 = arith.addf %183, %186 : vector<16x1xf32>
    %188 = math.rsqrt %187 : vector<16x1xf32>
    %189 = vector.broadcast %188 : vector<16x1xf32> to vector<16x32xf32>
    %190 = arith.mulf %185, %189 : vector<16x32xf32>
    %191 = vector.broadcast %170 : vector<1x32xf32> to vector<16x32xf32>
    %192 = arith.mulf %190, %191 : vector<16x32xf32>
    %193 = vector.broadcast %172 : vector<1x32xf32> to vector<16x32xf32>
    %194 = arith.addf %192, %193 : vector<16x32xf32>
    %195 = arith.truncf %194 : vector<16x32xf32> to vector<16x32xbf16>
    %c0_60 = arith.constant 0 : index
    %c0_61 = arith.constant 0 : index
    %c0_62 = arith.constant 0 : index
    %196 = vector.load %arg11[%c0_60, %c0_61, %c0_62] : memref<1x32x64xbf16, #tpu.memory_space<vmem>>, vector<1x32x64xbf16>
    %197 = vector.shape_cast %196 : vector<1x32x64xbf16> to vector<32x64xbf16>
    %cst_63 = arith.constant dense<0.000000e+00> : vector<16x64xf32>
    %198 = tpu.matmul %195, %197, %cst_63 {dimension_numbers = #tpu.dot_dimension_numbers<[1], [0], [0], [1], [0, 0, 1, 1], [], []>} : vector<16x32xbf16>, vector<32x64xbf16>, vector<16x64xf32> -> vector<16x64xf32>
    %c0_64 = arith.constant 0 : index
    %c0_65 = arith.constant 0 : index
    %c0_66 = arith.constant 0 : index
    %199 = vector.load %arg12[%c0_64, %c0_65, %c0_66] : memref<1x1x64xf32, #tpu.memory_space<vmem>>, vector<1x1x64xf32>
    %200 = vector.shape_cast %199 : vector<1x1x64xf32> to vector<1x64xf32>
    %201 = vector.broadcast %200 : vector<1x64xf32> to vector<16x64xf32>
    %202 = arith.addf %198, %201 : vector<16x64xf32>
    %cst_67 = arith.constant 5.000000e-01 : f32
    %203 = vector.broadcast %cst_67 : f32 to vector<16x64xf32>
    %204 = arith.mulf %203, %202 : vector<16x64xf32>
    %cst_68 = arith.constant 0.707106769 : f32
    %205 = vector.broadcast %cst_68 : f32 to vector<16x64xf32>
    %206 = arith.mulf %202, %205 : vector<16x64xf32>
    %207 = math.erf %206 : vector<16x64xf32>
    %cst_69 = arith.constant 1.000000e+00 : f32
    %208 = vector.broadcast %cst_69 : f32 to vector<16x64xf32>
    %209 = arith.addf %208, %207 : vector<16x64xf32>
    %210 = arith.mulf %204, %209 : vector<16x64xf32>
    %211 = arith.truncf %210 : vector<16x64xf32> to vector<16x64xbf16>
    %c0_70 = arith.constant 0 : index
    %c0_71 = arith.constant 0 : index
    %c0_72 = arith.constant 0 : index
    %212 = vector.load %arg13[%c0_70, %c0_71, %c0_72] : memref<1x64x32xbf16, #tpu.memory_space<vmem>>, vector<1x64x32xbf16>
    %213 = vector.shape_cast %212 : vector<1x64x32xbf16> to vector<64x32xbf16>
    %cst_73 = arith.constant dense<0.000000e+00> : vector<16x32xf32>
    %214 = tpu.matmul %211, %213, %cst_73 {dimension_numbers = #tpu.dot_dimension_numbers<[1], [0], [0], [1], [0, 0, 1, 1], [], []>} : vector<16x64xbf16>, vector<64x32xbf16>, vector<16x32xf32> -> vector<16x32xf32>
    %c0_74 = arith.constant 0 : index
    %c0_75 = arith.constant 0 : index
    %c0_76 = arith.constant 0 : index
    %215 = vector.load %arg14[%c0_74, %c0_75, %c0_76] : memref<1x1x32xf32, #tpu.memory_space<vmem>>, vector<1x1x32xf32>
    %216 = vector.shape_cast %215 : vector<1x1x32xf32> to vector<1x32xf32>
    %217 = vector.broadcast %216 : vector<1x32xf32> to vector<16x32xf32>
    %218 = arith.addf %214, %217 : vector<16x32xf32>
    %219 = arith.addf %194, %218 : vector<16x32xf32>
    %c0_77 = arith.constant 0 : index
    %c0_78 = arith.constant 0 : index
    %c0_79 = arith.constant 0 : index
    %220 = vector.load %arg15[%c0_77, %c0_78, %c0_79] : memref<1x1x32xf32, #tpu.memory_space<vmem>>, vector<1x1x32xf32>
    %221 = vector.shape_cast %220 : vector<1x1x32xf32> to vector<1x32xf32>
    %c0_80 = arith.constant 0 : index
    %c0_81 = arith.constant 0 : index
    %c0_82 = arith.constant 0 : index
    %222 = vector.load %arg16[%c0_80, %c0_81, %c0_82] : memref<1x1x32xf32, #tpu.memory_space<vmem>>, vector<1x1x32xf32>
    %223 = vector.shape_cast %222 : vector<1x1x32xf32> to vector<1x32xf32>
    %cst_83 = arith.constant dense<0.000000e+00> : vector<16xf32>
    %224 = vector.multi_reduction <add>, %219, %cst_83 [1] : vector<16x32xf32> to vector<16xf32>
    %225 = vector.shape_cast %224 : vector<16xf32> to vector<16x1xf32>
    %cst_84 = arith.constant 3.200000e+01 : f32
    %226 = vector.broadcast %cst_84 : f32 to vector<16x1xf32>
    %227 = arith.divf %225, %226 : vector<16x1xf32>
    %228 = vector.broadcast %227 : vector<16x1xf32> to vector<16x32xf32>
    %229 = arith.subf %219, %228 : vector<16x32xf32>
    %230 = arith.mulf %229, %229 : vector<16x32xf32>
    %cst_85 = arith.constant dense<0.000000e+00> : vector<16xf32>
    %231 = vector.multi_reduction <add>, %230, %cst_85 [1] : vector<16x32xf32> to vector<16xf32>
    %232 = vector.shape_cast %231 : vector<16xf32> to vector<16x1xf32>
    %cst_86 = arith.constant 3.200000e+01 : f32
    %233 = vector.broadcast %cst_86 : f32 to vector<16x1xf32>
    %234 = arith.divf %232, %233 : vector<16x1xf32>
    %235 = vector.broadcast %227 : vector<16x1xf32> to vector<16x32xf32>
    %236 = arith.subf %219, %235 : vector<16x32xf32>
    %cst_87 = arith.constant 9.99999996E-13 : f32
    %237 = vector.broadcast %cst_87 : f32 to vector<16x1xf32>
    %238 = arith.addf %234, %237 : vector<16x1xf32>
    %239 = math.rsqrt %238 : vector<16x1xf32>
    %240 = vector.broadcast %239 : vector<16x1xf32> to vector<16x32xf32>
    %241 = arith.mulf %236, %240 : vector<16x32xf32>
    %242 = vector.broadcast %221 : vector<1x32xf32> to vector<16x32xf32>
    %243 = arith.mulf %241, %242 : vector<16x32xf32>
    %244 = vector.broadcast %223 : vector<1x32xf32> to vector<16x32xf32>
    %245 = arith.addf %243, %244 : vector<16x32xf32>
    %c0_88 = arith.constant 0 : index
    %c0_89 = arith.constant 0 : index
    %246 = vector.load %arg22[%c0_88, %c0_89] : memref<16x32xf32, #tpu.memory_space<vmem>>, vector<16x32xf32>
    tpu.vector_store %arg22[%c0_88, %c0_89], %245 {strides = array<i32>} : memref<16x32xf32, #tpu.memory_space<vmem>>, vector<16x32xf32>,
    %c1_i32 = arith.constant 1 : i32
    %247 = arith.cmpi eq, %arg0, %c1_i32 : i32
    %248 = arith.extui %247 : i1 to i32
    %c0_i32_90 = arith.constant 0 : i32
    %249 = arith.cmpi ne, %248, %c0_i32_90 : i32
    scf.if %249 {
      %250 = vector.extract_strided_slice %245 {offsets = [0, 0], sizes = [1, 32], strides = [1, 1]} : vector<16x32xf32> to vector<1x32xf32>
      %251 = vector.extract_strided_slice %245 {offsets = [8, 0], sizes = [1, 32], strides = [1, 1]} : vector<16x32xf32> to vector<1x32xf32>
      %252 = tpu.concatenate %250, %251 in 0 : vector<1x32xf32>, vector<1x32xf32> -> vector<2x32xf32>
      %253 = arith.truncf %252 : vector<2x32xf32> to vector<2x32xbf16>
      %c0_91 = arith.constant 0 : index
      %c0_92 = arith.constant 0 : index
      %254 = vector.load %arg17[%c0_91, %c0_92] : memref<32x32xbf16, #tpu.memory_space<vmem>>, vector<32x32xbf16>
      %cst_93 = arith.constant dense<0.000000e+00> : vector<2x32xf32>
      %255 = tpu.matmul %253, %254, %cst_93 {dimension_numbers = #tpu.dot_dimension_numbers<[1], [0], [0], [1], [0, 0, 1, 1], [], []>} : vector<2x32xbf16>, vector<32x32xbf16>, vector<2x32xf32> -> vector<2x32xf32>
      %c0_94 = arith.constant 0 : index
      %c0_95 = arith.constant 0 : index
      %256 = vector.load %arg18[%c0_94, %c0_95] : memref<1x32xf32, #tpu.memory_space<vmem>>, vector<1x32xf32>
      %257 = vector.broadcast %256 : vector<1x32xf32> to vector<2x32xf32>
      %258 = arith.addf %255, %257 : vector<2x32xf32>
      %259 = math.tanh %258 : vector<2x32xf32>
      %260 = arith.truncf %259 : vector<2x32xf32> to vector<2x32xbf16>
      %c0_96 = arith.constant 0 : index
      %c0_97 = arith.constant 0 : index
      %261 = vector.load %arg19[%c0_96, %c0_97] : memref<32x4xbf16, #tpu.memory_space<vmem>>, vector<32x4xbf16>
      %cst_98 = arith.constant dense<0.000000e+00> : vector<2x4xf32>
      %262 = tpu.matmul %260, %261, %cst_98 {dimension_numbers = #tpu.dot_dimension_numbers<[1], [0], [0], [1], [0, 0, 1, 1], [], []>} : vector<2x32xbf16>, vector<32x4xbf16>, vector<2x4xf32> -> vector<2x4xf32>
      %c0_99 = arith.constant 0 : index
      %c0_100 = arith.constant 0 : index
      %263 = vector.load %arg20[%c0_99, %c0_100] : memref<1x4xf32, #tpu.memory_space<vmem>>, vector<1x4xf32>
      %264 = vector.broadcast %263 : vector<1x4xf32> to vector<2x4xf32>
      %265 = arith.addf %262, %264 : vector<2x4xf32>
      %cst_101 = arith.constant 0.000000e+00 : f32
      %266 = vector.broadcast %cst_101 : f32 to vector<2x4xf32>
      %267 = arith.maximumf %265, %266 : vector<2x4xf32>
      %c0_102 = arith.constant 0 : index
      %c0_103 = arith.constant 0 : index
      %268 = vector.load %arg21[%c0_102, %c0_103] : memref<2x4xf32, #tpu.memory_space<vmem>>, vector<2x4xf32>
      tpu.vector_store %arg21[%c0_102, %c0_103], %267 {strides = array<i32>} : memref<2x4xf32, #tpu.memory_space<vmem>>, vector<2x4xf32>,
    } else {
    }
    return
  }
  func.func @transform_0(%arg0: i32) -> (i32, i32) {
    %c0_i32 = arith.constant 0 : i32
    %c0_i32_0 = arith.constant 0 : i32
    %c0_i32_1 = arith.constant 0 : i32
    return %c0_i32, %c0_i32_0 : i32, i32
  }
  func.func @transform_1(%arg0: i32) -> (i32, i32) {
    %c0_i32 = arith.constant 0 : i32
    %c0_i32_0 = arith.constant 0 : i32
    %c0_i32_1 = arith.constant 0 : i32
    return %c0_i32, %c0_i32_0 : i32, i32
  }
  func.func @transform_2(%arg0: i32) -> (i32, i32) {
    %c0_i32 = arith.constant 0 : i32
    %c0_i32_0 = arith.constant 0 : i32
    %c0_i32_1 = arith.constant 0 : i32
    return %c0_i32, %c0_i32_0 : i32, i32
  }
  func.func @transform_3(%arg0: i32) -> (i32, i32) {
    %c0_i32 = arith.constant 0 : i32
    %c0_i32_0 = arith.constant 0 : i32
    %c0_i32_1 = arith.constant 0 : i32
    return %c0_i32, %c0_i32_0 : i32, i32
  }
  func.func @transform_4(%arg0: i32) -> (i32, i32, i32) {
    %c0_i32 = arith.constant 0 : i32
    %c0_i32_0 = arith.constant 0 : i32
    %c0_i32_1 = arith.constant 0 : i32
    return %arg0, %c0_i32, %c0_i32_0 : i32, i32, i32
  }
  func.func @transform_5(%arg0: i32) -> (i32, i32, i32) {
    %c0_i32 = arith.constant 0 : i32
    %c0_i32_0 = arith.constant 0 : i32
    %c0_i32_1 = arith.constant 0 : i32
    return %arg0, %c0_i32, %c0_i32_0 : i32, i32, i32
  }
  func.func @transform_6(%arg0: i32) -> (i32, i32, i32) {
    %c0_i32 = arith.constant 0 : i32
    %c0_i32_0 = arith.constant 0 : i32
    %c0_i32_1 = arith.constant 0 : i32
    return %arg0, %c0_i32, %c0_i32_0 : i32, i32, i32
  }
  func.func @transform_7(%arg0: i32) -> (i32, i32, i32) {
    %c0_i32 = arith.constant 0 : i32
    %c0_i32_0 = arith.constant 0 : i32
    %c0_i32_1 = arith.constant 0 : i32
    return %arg0, %c0_i32, %c0_i32_0 : i32, i32, i32
  }
  func.func @transform_8(%arg0: i32) -> (i32, i32, i32) {
    %c0_i32 = arith.constant 0 : i32
    %c0_i32_0 = arith.constant 0 : i32
    %c0_i32_1 = arith.constant 0 : i32
    return %arg0, %c0_i32, %c0_i32_0 : i32, i32, i32
  }
  func.func @transform_9(%arg0: i32) -> (i32, i32, i32) {
    %c0_i32 = arith.constant 0 : i32
    %c0_i32_0 = arith.constant 0 : i32
    %c0_i32_1 = arith.constant 0 : i32
    return %arg0, %c0_i32, %c0_i32_0 : i32, i32, i32
  }
  func.func @transform_10(%arg0: i32) -> (i32, i32, i32) {
    %c0_i32 = arith.constant 0 : i32
    %c0_i32_0 = arith.constant 0 : i32
    %c0_i32_1 = arith.constant 0 : i32
    return %arg0, %c0_i32, %c0_i32_0 : i32, i32, i32
  }
  func.func @transform_11(%arg0: i32) -> (i32, i32, i32) {
    %c0_i32 = arith.constant 0 : i32
    %c0_i32_0 = arith.constant 0 : i32
    %c0_i32_1 = arith.constant 0 : i32
    return %arg0, %c0_i32, %c0_i32_0 : i32, i32, i32
  }
  func.func @transform_12(%arg0: i32) -> (i32, i32, i32) {
    %c0_i32 = arith.constant 0 : i32
    %c0_i32_0 = arith.constant 0 : i32
    %c0_i32_1 = arith.constant 0 : i32
    return %arg0, %c0_i32, %c0_i32_0 : i32, i32, i32
  }
  func.func @transform_13(%arg0: i32) -> (i32, i32, i32) {
    %c0_i32 = arith.constant 0 : i32
    %c0_i32_0 = arith.constant 0 : i32
    %c0_i32_1 = arith.constant 0 : i32
    return %arg0, %c0_i32, %c0_i32_0 : i32, i32, i32
  }
  func.func @transform_14(%arg0: i32) -> (i32, i32, i32) {
    %c0_i32 = arith.constant 0 : i32
    %c0_i32_0 = arith.constant 0 : i32
    %c0_i32_1 = arith.constant 0 : i32
    return %arg0, %c0_i32, %c0_i32_0 : i32, i32, i32
  }
  func.func @transform_15(%arg0: i32) -> (i32, i32, i32) {
    %c0_i32 = arith.constant 0 : i32
    %c0_i32_0 = arith.constant 0 : i32
    %c0_i32_1 = arith.constant 0 : i32
    return %arg0, %c0_i32, %c0_i32_0 : i32, i32, i32
  }
  func.func @transform_16(%arg0: i32) -> (i32, i32) {
    %c0_i32 = arith.constant 0 : i32
    %c0_i32_0 = arith.constant 0 : i32
    %c0_i32_1 = arith.constant 0 : i32
    return %c0_i32, %c0_i32_0 : i32, i32
  }
  func.func @transform_17(%arg0: i32) -> (i32, i32) {
    %c0_i32 = arith.constant 0 : i32
    %c0_i32_0 = arith.constant 0 : i32
    %c0_i32_1 = arith.constant 0 : i32
    return %c0_i32, %c0_i32_0 : i32, i32
  }
  func.func @transform_18(%arg0: i32) -> (i32, i32) {
    %c0_i32 = arith.constant 0 : i32
    %c0_i32_0 = arith.constant 0 : i32
    %c0_i32_1 = arith.constant 0 : i32
    return %c0_i32, %c0_i32_0 : i32, i32
  }
  func.func @transform_19(%arg0: i32) -> (i32, i32) {
    %c0_i32 = arith.constant 0 : i32
    %c0_i32_0 = arith.constant 0 : i32
    %c0_i32_1 = arith.constant 0 : i32
    return %c0_i32, %c0_i32_0 : i32, i32
  }
  func.func @transform_20(%arg0: i32) -> (i32, i32) {
    %c0_i32 = arith.constant 0 : i32
    %c0_i32_0 = arith.constant 0 : i32
    %c0_i32_1 = arith.constant 0 : i32
    return %c0_i32, %c0_i32_0 : i32, i32
  }
}

</mosaic_0001>

<llo_original>
// kernel: bert_cased_forward.1
$region0: #{bert_cased_forward.1}
  #allocation0 [shape = 'u32[]', space=smem, size = 0x4, offset = 0x4, fixed_abs, tag = 'smem constant byte address 0x4 - core index']
  #allocation1 [shape = 'u32[144,128]{1,0:T(1,128)}', space=vmem, size = 0x12000, scoped, tag = 'internal scratch']
  #allocation2 [shape = 'f32[16,32]{1,0:T(8,128)}', space=vmem, size = 0x2000, scoped, tag = 'scratch operand']
  %s0 = inlined_call_operand.vmem [shape: f32[16,32], index: 0, kind: input, shape index: {}]
  %s1 = inlined_call_operand.vmem [shape: f32[1,32], index: 1, kind: input, shape index: {}]
  %s2 = inlined_call_operand.vmem [shape: f32[1,32], index: 2, kind: input, shape index: {}]
  %s3 = inlined_call_operand.vmem [shape: f32[2,8], index: 3, kind: input, shape index: {}]
  %s4 = inlined_call_operand.vmem [shape: bf16[2,32,96], index: 4, kind: input, shape index: {}]
  %s5 = inlined_call_operand.vmem [shape: f32[2,1,96], index: 5, kind: input, shape index: {}]
  %s6 = inlined_call_operand.vmem [shape: bf16[2,32,32], index: 6, kind: input, shape index: {}]
  %s7 = inlined_call_operand.vmem [shape: f32[2,1,32], index: 7, kind: input, shape index: {}]
  %s8 = inlined_call_operand.vmem [shape: f32[2,1,32], index: 8, kind: input, shape index: {}]
  %s9 = inlined_call_operand.vmem [shape: f32[2,1,32], index: 9, kind: input, shape index: {}]
  %s10 = inlined_call_operand.vmem [shape: bf16[2,32,64], index: 10, kind: input, shape index: {}]
  %s11 = inlined_call_operand.vmem [shape: f32[2,1,64], index: 11, kind: input, shape index: {}]
  %s12 = inlined_call_operand.vmem [shape: bf16[2,64,32], index: 12, kind: input, shape index: {}]
  %s13 = inlined_call_operand.vmem [shape: f32[2,1,32], index: 13, kind: input, shape index: {}]
  %s14 = inlined_call_operand.vmem [shape: f32[2,1,32], index: 14, kind: input, shape index: {}]
  %s15 = inlined_call_operand.vmem [shape: f32[2,1,32], index: 15, kind: input, shape index: {}]
  %s16 = inlined_call_operand.vmem [shape: bf16[32,32], index: 16, kind: input, shape index: {}]
  %s17 = inlined_call_operand.vmem [shape: f32[1,32], index: 17, kind: input, shape index: {}]
  %s18 = inlined_call_operand.vmem [shape: bf16[32,4], index: 18, kind: input, shape index: {}]
  %s19 = inlined_call_operand.vmem [shape: f32[1,4], index: 19, kind: input, shape index: {}]
  %s20 = inlined_call_operand.hbm [shape: f32[2,4], index: 20, kind: output, shape index: {}]
  %s21 = sld [smem:[#allocation0]]
  $region121: #{bert_cased_forward.1} parent=0
    _
  %s23 = ssub.s32 1, %s21
  %s24 = scalar_select 0, %s23, %s21
  $region1: #{bert_cased_forward.1} parent=0
    #allocation3 [shape = 'u8[1024]{0}', space=vmem, size = 0x400, scoped, tag = 'output window, operand 0, single buffered']
    #allocation4 [shape = 's32[2]{0}', space=sflag, size = 0x8, scoped, tag = 'scoped memory for bert_cased_forward.1']
    %25 = vsyncpa [#allocation4], 0
    loop: start=0, step=1, limit=4
    $region2: #{bert_cased_forward.1} parent=1 // loop_pre_header
      _
    $region3: #{bert_cased_forward.1} parent=1 // loop_header
      %s27 = sphi 0, %s31
      %p28 = scmp.ge.s32.totalorder %s27, 4
      %s35 = sphi 0, %s35
      %s37 = sphi 0, %s35
      %s38 = sphi 0, %s37
      %s52 = sphi 0, %s38
      %s56 = sphi 0, %s56
      %s58 = sphi 0, %s56
      %s59 = sphi 0, %s58
      %s73 = sphi 0, %s59
      %s77 = sphi 0, %s77
      %s79 = sphi 0, %s77
      %s80 = sphi 0, %s79
      %s94 = sphi 0, %s80
      %s98 = sphi 0, %s98
      %s100 = sphi 0, %s98
      %s101 = sphi 0, %s100
      %s115 = sphi 0, %s101
      %s121 = sphi 0, %s123
      %s124 = sphi 0, %s121
      %s125 = sphi 0, %s124
      %s141 = sphi 0, %s125
      %s147 = sphi 0, %s149
      %s150 = sphi 0, %s147
      %s151 = sphi 0, %s150
      %s167 = sphi 0, %s151
      %s173 = sphi 0, %s175
      %s176 = sphi 0, %s173
      %s177 = sphi 0, %s176
      %s193 = sphi 0, %s177
      %s199 = sphi 0, %s201
      %s202 = sphi 0, %s199
      %s203 = sphi 0, %s202
      %s219 = sphi 0, %s203
      %s225 = sphi 0, %s227
      %s228 = sphi 0, %s225
      %s229 = sphi 0, %s228
      %s245 = sphi 0, %s229
      %s251 = sphi 0, %s253
      %s254 = sphi 0, %s251
      %s255 = sphi 0, %s254
      %s271 = sphi 0, %s255
      %s277 = sphi 0, %s279
      %s280 = sphi 0, %s277
      %s281 = sphi 0, %s280
      %s297 = sphi 0, %s281
      %s303 = sphi 0, %s305
      %s306 = sphi 0, %s303
      %s307 = sphi 0, %s306
      %s323 = sphi 0, %s307
      %s329 = sphi 0, %s331
      %s332 = sphi 0, %s329
      %s333 = sphi 0, %s332
      %s349 = sphi 0, %s333
      %s355 = sphi 0, %s357
      %s358 = sphi 0, %s355
      %s359 = sphi 0, %s358
      %s375 = sphi 0, %s359
      %s381 = sphi 0, %s383
      %s384 = sphi 0, %s381
      %s385 = sphi 0, %s384
      %s401 = sphi 0, %s385
      %s407 = sphi 0, %s409
      %s410 = sphi 0, %s407
      %s411 = sphi 0, %s410
      %s427 = sphi 0, %s411
      %s431 = sphi 0, %s431
      %s433 = sphi 0, %s431
      %s434 = sphi 0, %s433
      %s448 = sphi 0, %s434
      %s452 = sphi 0, %s452
      %s454 = sphi 0, %s452
      %s455 = sphi 0, %s454
      %s469 = sphi 0, %s455
      %s473 = sphi 0, %s473
      %s475 = sphi 0, %s473
      %s476 = sphi 0, %s475
      %s490 = sphi 0, %s476
      %s494 = sphi 0, %s494
      %s496 = sphi 0, %s494
      %s497 = sphi 0, %s496
      %s511 = sphi 0, %s497
      %s515 = sphi 0, %s515
      %s517 = sphi 0, %s515
      %s518 = sphi 0, %s517
      %s532 = sphi 0, %s518
    $region4: #{bert_cased_forward.1} parent=1 // loop_header_branch
      %30 = sbr.rel (%p28) target = $region8
    $region5: #{bert_cased_forward.1} parent=1 // loop_body
      %s32 = ssub.s32 %s27, 1
      %s33 = ssub.s32 %s27, 2
      %s34 = sadd.s32 %s27, 1
      %s36 = sadd.s32 %s35, 1
      %p39 = scmp.eq.s32.totalorder %s27, 1
      %p40 = scmp.ne.s32.totalorder %s35, %s37
      %p41 = scmp.eq.s32.totalorder %s27, 0
      %p42 = por %p40, %p41
      %p43 = scmp.ne.s32.totalorder %s35, %s37
      %p44 = scmp.eq.s32.totalorder %s32, 1
      %p45 = por %p43, %p44
      %p46 = scmp.ne.s32.totalorder %s37, %s38
      %p47 = scmp.eq.s32.totalorder %s32, 0
      %p48 = por %p46, %p47
      %p49 = scmp.ne.s32.totalorder %s37, %s38
      %p50 = scmp.eq.s32.totalorder %s33, 1
      %p51 = por %p49, %p50
      %p53 = scmp.ne.s32.totalorder %s38, %s52
      %p54 = scmp.eq.s32.totalorder %s33, 0
      %p55 = por %p53, %p54
      %s57 = sadd.s32 %s56, 1
      %p60 = scmp.eq.s32.totalorder %s27, 1
      %p61 = scmp.ne.s32.totalorder %s56, %s58
      %p62 = scmp.eq.s32.totalorder %s27, 0
      %p63 = por %p61, %p62
      %p64 = scmp.ne.s32.totalorder %s56, %s58
      %p65 = scmp.eq.s32.totalorder %s32, 1
      %p66 = por %p64, %p65
      %p67 = scmp.ne.s32.totalorder %s58, %s59
      %p68 = scmp.eq.s32.totalorder %s32, 0
      %p69 = por %p67, %p68
      %p70 = scmp.ne.s32.totalorder %s58, %s59
      %p71 = scmp.eq.s32.totalorder %s33, 1
      %p72 = por %p70, %p71
      %p74 = scmp.ne.s32.totalorder %s59, %s73
      %p75 = scmp.eq.s32.totalorder %s33, 0
      %p76 = por %p74, %p75
      %s78 = sadd.s32 %s77, 1
      %p81 = scmp.eq.s32.totalorder %s27, 1
      %p82 = scmp.ne.s32.totalorder %s77, %s79
      %p83 = scmp.eq.s32.totalorder %s27, 0
      %p84 = por %p82, %p83
      %p85 = scmp.ne.s32.totalorder %s77, %s79
      %p86 = scmp.eq.s32.totalorder %s32, 1
      %p87 = por %p85, %p86
      %p88 = scmp.ne.s32.totalorder %s79, %s80
      %p89 = scmp.eq.s32.totalorder %s32, 0
      %p90 = por %p88, %p89
      %p91 = scmp.ne.s32.totalorder %s79, %s80
      %p92 = scmp.eq.s32.totalorder %s33, 1
      %p93 = por %p91, %p92
      %p95 = scmp.ne.s32.totalorder %s80, %s94
      %p96 = scmp.eq.s32.totalorder %s33, 0
      %p97 = por %p95, %p96
      %s99 = sadd.s32 %s98, 1
      %p102 = scmp.eq.s32.totalorder %s27, 1
      %p103 = scmp.ne.s32.totalorder %s98, %s100
      %p104 = scmp.eq.s32.totalorder %s27, 0
      %p105 = por %p103, %p104
      %p106 = scmp.ne.s32.totalorder %s98, %s100
      %p107 = scmp.eq.s32.totalorder %s32, 1
      %p108 = por %p106, %p107
      %p109 = scmp.ne.s32.totalorder %s100, %s101
      %p110 = scmp.eq.s32.totalorder %s32, 0
      %p111 = por %p109, %p110
      %p112 = scmp.ne.s32.totalorder %s100, %s101
      %p113 = scmp.eq.s32.totalorder %s33, 1
      %p114 = por %p112, %p113
      %p116 = scmp.ne.s32.totalorder %s101, %s115
      %p117 = scmp.eq.s32.totalorder %s33, 0
      %p118 = por %p116, %p117
      %s119 = ssub.s32 %s27, %s34
      %p120 = scmp.eq.s32.totalorder %s119, 0
      %s122 = sadd.s32 %s121, 1
      %s123 = scalar_select %p120, %s121, %s122
      %p126 = pneg %p120
      %p127 = scmp.eq.s32.totalorder %s27, 1
      %p128 = por %p126, %p127
      %p129 = scmp.ne.s32.totalorder %s121, %s124
      %p130 = scmp.eq.s32.totalorder %s27, 0
      %p131 = por %p129, %p130
      %p132 = scmp.ne.s32.totalorder %s121, %s124
      %p133 = scmp.eq.s32.totalorder %s32, 1
      %p134 = por %p132, %p133
      %p135 = scmp.ne.s32.totalorder %s124, %s125
      %p136 = scmp.eq.s32.totalorder %s32, 0
      %p137 = por %p135, %p136
      %p138 = scmp.ne.s32.totalorder %s124, %s125
      %p139 = scmp.eq.s32.totalorder %s33, 1
      %p140 = por %p138, %p139
      %p142 = scmp.ne.s32.totalorder %s125, %s141
      %p143 = scmp.eq.s32.totalorder %s33, 0
      %p144 = por %p142, %p143
      %s145 = ssub.s32 %s27, %s34
      %p146 = scmp.eq.s32.totalorder %s145, 0
      %s148 = sadd.s32 %s147, 1
      %s149 = scalar_select %p146, %s147, %s148
      %p152 = pneg %p146
      %p153 = scmp.eq.s32.totalorder %s27, 1
      %p154 = por %p152, %p153
      %p155 = scmp.ne.s32.totalorder %s147, %s150
      %p156 = scmp.eq.s32.totalorder %s27, 0
      %p157 = por %p155, %p156
      %p158 = scmp.ne.s32.totalorder %s147, %s150
      %p159 = scmp.eq.s32.totalorder %s32, 1
      %p160 = por %p158, %p159
      %p161 = scmp.ne.s32.totalorder %s150, %s151
      %p162 = scmp.eq.s32.totalorder %s32, 0
      %p163 = por %p161, %p162
      %p164 = scmp.ne.s32.totalorder %s150, %s151
      %p165 = scmp.eq.s32.totalorder %s33, 1
      %p166 = por %p164, %p165
      %p168 = scmp.ne.s32.totalorder %s151, %s167
      %p169 = scmp.eq.s32.totalorder %s33, 0
      %p170 = por %p168, %p169
      %s171 = ssub.s32 %s27, %s34
      %p172 = scmp.eq.s32.totalorder %s171, 0
      %s174 = sadd.s32 %s173, 1
      %s175 = scalar_select %p172, %s173, %s174
      %p178 = pneg %p172
      %p179 = scmp.eq.s32.totalorder %s27, 1
      %p180 = por %p178, %p179
      %p181 = scmp.ne.s32.totalorder %s173, %s176
      %p182 = scmp.eq.s32.totalorder %s27, 0
      %p183 = por %p181, %p182
      %p184 = scmp.ne.s32.totalorder %s173, %s176
      %p185 = scmp.eq.s32.totalorder %s32, 1
      %p186 = por %p184, %p185
      %p187 = scmp.ne.s32.totalorder %s176, %s177
      %p188 = scmp.eq.s32.totalorder %s32, 0
      %p189 = por %p187, %p188
      %p190 = scmp.ne.s32.totalorder %s176, %s177
      %p191 = scmp.eq.s32.totalorder %s33, 1
      %p192 = por %p190, %p191
      %p194 = scmp.ne.s32.totalorder %s177, %s193
      %p195 = scmp.eq.s32.totalorder %s33, 0
      %p196 = por %p194, %p195
      %s197 = ssub.s32 %s27, %s34
      %p198 = scmp.eq.s32.totalorder %s197, 0
      %s200 = sadd.s32 %s199, 1
      %s201 = scalar_select %p198, %s199, %s200
      %p204 = pneg %p198
      %p205 = scmp.eq.s32.totalorder %s27, 1
      %p206 = por %p204, %p205
      %p207 = scmp.ne.s32.totalorder %s199, %s202
      %p208 = scmp.eq.s32.totalorder %s27, 0
      %p209 = por %p207, %p208
      %p210 = scmp.ne.s32.totalorder %s199, %s202
      %p211 = scmp.eq.s32.totalorder %s32, 1
      %p212 = por %p210, %p211
      %p213 = scmp.ne.s32.totalorder %s202, %s203
      %p214 = scmp.eq.s32.totalorder %s32, 0
      %p215 = por %p213, %p214
      %p216 = scmp.ne.s32.totalorder %s202, %s203
      %p217 = scmp.eq.s32.totalorder %s33, 1
      %p218 = por %p216, %p217
      %p220 = scmp.ne.s32.totalorder %s203, %s219
      %p221 = scmp.eq.s32.totalorder %s33, 0
      %p222 = por %p220, %p221
      %s223 = ssub.s32 %s27, %s34
      %p224 = scmp.eq.s32.totalorder %s223, 0
      %s226 = sadd.s32 %s225, 1
      %s227 = scalar_select %p224, %s225, %s226
      %p230 = pneg %p224
      %p231 = scmp.eq.s32.totalorder %s27, 1
      %p232 = por %p230, %p231
      %p233 = scmp.ne.s32.totalorder %s225, %s228
      %p234 = scmp.eq.s32.totalorder %s27, 0
      %p235 = por %p233, %p234
      %p236 = scmp.ne.s32.totalorder %s225, %s228
      %p237 = scmp.eq.s32.totalorder %s32, 1
      %p238 = por %p236, %p237
      %p239 = scmp.ne.s32.totalorder %s228, %s229
      %p240 = scmp.eq.s32.totalorder %s32, 0
      %p241 = por %p239, %p240
      %p242 = scmp.ne.s32.totalorder %s228, %s229
      %p243 = scmp.eq.s32.totalorder %s33, 1
      %p244 = por %p242, %p243
      %p246 = scmp.ne.s32.totalorder %s229, %s245
      %p247 = scmp.eq.s32.totalorder %s33, 0
      %p248 = por %p246, %p247
      %s249 = ssub.s32 %s27, %s34
      %p250 = scmp.eq.s32.totalorder %s249, 0
      %s252 = sadd.s32 %s251, 1
      %s253 = scalar_select %p250, %s251, %s252
      %p256 = pneg %p250
      %p257 = scmp.eq.s32.totalorder %s27, 1
      %p258 = por %p256, %p257
      %p259 = scmp.ne.s32.totalorder %s251, %s254
      %p260 = scmp.eq.s32.totalorder %s27, 0
      %p261 = por %p259, %p260
      %p262 = scmp.ne.s32.totalorder %s251, %s254
      %p263 = scmp.eq.s32.totalorder %s32, 1
      %p264 = por %p262, %p263
      %p265 = scmp.ne.s32.totalorder %s254, %s255
      %p266 = scmp.eq.s32.totalorder %s32, 0
      %p267 = por %p265, %p266
      %p268 = scmp.ne.s32.totalorder %s254, %s255
      %p269 = scmp.eq.s32.totalorder %s33, 1
      %p270 = por %p268, %p269
      %p272 = scmp.ne.s32.totalorder %s255, %s271
      %p273 = scmp.eq.s32.totalorder %s33, 0
      %p274 = por %p272, %p273
      %s275 = ssub.s32 %s27, %s34
      %p276 = scmp.eq.s32.totalorder %s275, 0
      %s278 = sadd.s32 %s277, 1
      %s279 = scalar_select %p276, %s277, %s278
      %p282 = pneg %p276
      %p283 = scmp.eq.s32.totalorder %s27, 1
      %p284 = por %p282, %p283
      %p285 = scmp.ne.s32.totalorder %s277, %s280
      %p286 = scmp.eq.s32.totalorder %s27, 0
      %p287 = por %p285, %p286
      %p288 = scmp.ne.s32.totalorder %s277, %s280
      %p289 = scmp.eq.s32.totalorder %s32, 1
      %p290 = por %p288, %p289
      %p291 = scmp.ne.s32.totalorder %s280, %s281
      %p292 = scmp.eq.s32.totalorder %s32, 0
      %p293 = por %p291, %p292
      %p294 = scmp.ne.s32.totalorder %s280, %s281
      %p295 = scmp.eq.s32.totalorder %s33, 1
      %p296 = por %p294, %p295
      %p298 = scmp.ne.s32.totalorder %s281, %s297
      %p299 = scmp.eq.s32.totalorder %s33, 0
      %p300 = por %p298, %p299
      %s301 = ssub.s32 %s27, %s34
      %p302 = scmp.eq.s32.totalorder %s301, 0
      %s304 = sadd.s32 %s303, 1
      %s305 = scalar_select %p302, %s303, %s304
      %p308 = pneg %p302
      %p309 = scmp.eq.s32.totalorder %s27, 1
      %p310 = por %p308, %p309
      %p311 = scmp.ne.s32.totalorder %s303, %s306
      %p312 = scmp.eq.s32.totalorder %s27, 0
      %p313 = por %p311, %p312
      %p314 = scmp.ne.s32.totalorder %s303, %s306
      %p315 = scmp.eq.s32.totalorder %s32, 1
      %p316 = por %p314, %p315
      %p317 = scmp.ne.s32.totalorder %s306, %s307
      %p318 = scmp.eq.s32.totalorder %s32, 0
      %p319 = por %p317, %p318
      %p320 = scmp.ne.s32.totalorder %s306, %s307
      %p321 = scmp.eq.s32.totalorder %s33, 1
      %p322 = por %p320, %p321
      %p324 = scmp.ne.s32.totalorder %s307, %s323
      %p325 = scmp.eq.s32.totalorder %s33, 0
      %p326 = por %p324, %p325
      %s327 = ssub.s32 %s27, %s34
      %p328 = scmp.eq.s32.totalorder %s327, 0
      %s330 = sadd.s32 %s329, 1
      %s331 = scalar_select %p328, %s329, %s330
      %p334 = pneg %p328
      %p335 = scmp.eq.s32.totalorder %s27, 1
      %p336 = por %p334, %p335
      %p337 = scmp.ne.s32.totalorder %s329, %s332
      %p338 = scmp.eq.s32.totalorder %s27, 0
      %p339 = por %p337, %p338
      %p340 = scmp.ne.s32.totalorder %s329, %s332
      %p341 = scmp.eq.s32.totalorder %s32, 1
      %p342 = por %p340, %p341
      %p343 = scmp.ne.s32.totalorder %s332, %s333
      %p344 = scmp.eq.s32.totalorder %s32, 0
      %p345 = por %p343, %p344
      %p346 = scmp.ne.s32.totalorder %s332, %s333
      %p347 = scmp.eq.s32.totalorder %s33, 1
      %p348 = por %p346, %p347
      %p350 = scmp.ne.s32.totalorder %s333, %s349
      %p351 = scmp.eq.s32.totalorder %s33, 0
      %p352 = por %p350, %p351
      %s353 = ssub.s32 %s27, %s34
      %p354 = scmp.eq.s32.totalorder %s353, 0
      %s356 = sadd.s32 %s355, 1
      %s357 = scalar_select %p354, %s355, %s356
      %p360 = pneg %p354
      %p361 = scmp.eq.s32.totalorder %s27, 1
      %p362 = por %p360, %p361
      %p363 = scmp.ne.s32.totalorder %s355, %s358
      %p364 = scmp.eq.s32.totalorder %s27, 0
      %p365 = por %p363, %p364
      %p366 = scmp.ne.s32.totalorder %s355, %s358
      %p367 = scmp.eq.s32.totalorder %s32, 1
      %p368 = por %p366, %p367
      %p369 = scmp.ne.s32.totalorder %s358, %s359
      %p370 = scmp.eq.s32.totalorder %s32, 0
      %p371 = por %p369, %p370
      %p372 = scmp.ne.s32.totalorder %s358, %s359
      %p373 = scmp.eq.s32.totalorder %s33, 1
      %p374 = por %p372, %p373
      %p376 = scmp.ne.s32.totalorder %s359, %s375
      %p377 = scmp.eq.s32.totalorder %s33, 0
      %p378 = por %p376, %p377
      %s379 = ssub.s32 %s27, %s34
      %p380 = scmp.eq.s32.totalorder %s379, 0
      %s382 = sadd.s32 %s381, 1
      %s383 = scalar_select %p380, %s381, %s382
      %p386 = pneg %p380
      %p387 = scmp.eq.s32.totalorder %s27, 1
      %p388 = por %p386, %p387
      %p389 = scmp.ne.s32.totalorder %s381, %s384
      %p390 = scmp.eq.s32.totalorder %s27, 0
      %p391 = por %p389, %p390
      %p392 = scmp.ne.s32.totalorder %s381, %s384
      %p393 = scmp.eq.s32.totalorder %s32, 1
      %p394 = por %p392, %p393
      %p395 = scmp.ne.s32.totalorder %s384, %s385
      %p396 = scmp.eq.s32.totalorder %s32, 0
      %p397 = por %p395, %p396
      %p398 = scmp.ne.s32.totalorder %s384, %s385
      %p399 = scmp.eq.s32.totalorder %s33, 1
      %p400 = por %p398, %p399
      %p402 = scmp.ne.s32.totalorder %s385, %s401
      %p403 = scmp.eq.s32.totalorder %s33, 0
      %p404 = por %p402, %p403
      %s405 = ssub.s32 %s27, %s34
      %p406 = scmp.eq.s32.totalorder %s405, 0
      %s408 = sadd.s32 %s407, 1
      %s409 = scalar_select %p406, %s407, %s408
      %p412 = pneg %p406
      %p413 = scmp.eq.s32.totalorder %s27, 1
      %p414 = por %p412, %p413
      %p415 = scmp.ne.s32.totalorder %s407, %s410
      %p416 = scmp.eq.s32.totalorder %s27, 0
      %p417 = por %p415, %p416
      %p418 = scmp.ne.s32.totalorder %s407, %s410
      %p419 = scmp.eq.s32.totalorder %s32, 1
      %p420 = por %p418, %p419
      %p421 = scmp.ne.s32.totalorder %s410, %s411
      %p422 = scmp.eq.s32.totalorder %s32, 0
      %p423 = por %p421, %p422
      %p424 = scmp.ne.s32.totalorder %s410, %s411
      %p425 = scmp.eq.s32.totalorder %s33, 1
      %p426 = por %p424, %p425
      %p428 = scmp.ne.s32.totalorder %s411, %s427
      %p429 = scmp.eq.s32.totalorder %s33, 0
      %p430 = por %p428, %p429
      %s432 = sadd.s32 %s431, 1
      %p435 = scmp.eq.s32.totalorder %s27, 1
      %p436 = scmp.ne.s32.totalorder %s431, %s433
      %p437 = scmp.eq.s32.totalorder %s27, 0
      %p438 = por %p436, %p437
      %p439 = scmp.ne.s32.totalorder %s431, %s433
      %p440 = scmp.eq.s32.totalorder %s32, 1
      %p441 = por %p439, %p440
      %p442 = scmp.ne.s32.totalorder %s433, %s434
      %p443 = scmp.eq.s32.totalorder %s32, 0
      %p444 = por %p442, %p443
      %p445 = scmp.ne.s32.totalorder %s433, %s434
      %p446 = scmp.eq.s32.totalorder %s33, 1
      %p447 = por %p445, %p446
      %p449 = scmp.ne.s32.totalorder %s434, %s448
      %p450 = scmp.eq.s32.totalorder %s33, 0
      %p451 = por %p449, %p450
      %s453 = sadd.s32 %s452, 1
      %p456 = scmp.eq.s32.totalorder %s27, 1
      %p457 = scmp.ne.s32.totalorder %s452, %s454
      %p458 = scmp.eq.s32.totalorder %s27, 0
      %p459 = por %p457, %p458
      %p460 = scmp.ne.s32.totalorder %s452, %s454
      %p461 = scmp.eq.s32.totalorder %s32, 1
      %p462 = por %p460, %p461
      %p463 = scmp.ne.s32.totalorder %s454, %s455
      %p464 = scmp.eq.s32.totalorder %s32, 0
      %p465 = por %p463, %p464
      %p466 = scmp.ne.s32.totalorder %s454, %s455
      %p467 = scmp.eq.s32.totalorder %s33, 1
      %p468 = por %p466, %p467
      %p470 = scmp.ne.s32.totalorder %s455, %s469
      %p471 = scmp.eq.s32.totalorder %s33, 0
      %p472 = por %p470, %p471
      %s474 = sadd.s32 %s473, 1
      %p477 = scmp.eq.s32.totalorder %s27, 1
      %p478 = scmp.ne.s32.totalorder %s473, %s475
      %p479 = scmp.eq.s32.totalorder %s27, 0
      %p480 = por %p478, %p479
      %p481 = scmp.ne.s32.totalorder %s473, %s475
      %p482 = scmp.eq.s32.totalorder %s32, 1
      %p483 = por %p481, %p482
      %p484 = scmp.ne.s32.totalorder %s475, %s476
      %p485 = scmp.eq.s32.totalorder %s32, 0
      %p486 = por %p484, %p485
      %p487 = scmp.ne.s32.totalorder %s475, %s476
      %p488 = scmp.eq.s32.totalorder %s33, 1
      %p489 = por %p487, %p488
      %p491 = scmp.ne.s32.totalorder %s476, %s490
      %p492 = scmp.eq.s32.totalorder %s33, 0
      %p493 = por %p491, %p492
      %s495 = sadd.s32 %s494, 1
      %p498 = scmp.eq.s32.totalorder %s27, 1
      %p499 = scmp.ne.s32.totalorder %s494, %s496
      %p500 = scmp.eq.s32.totalorder %s27, 0
      %p501 = por %p499, %p500
      %p502 = scmp.ne.s32.totalorder %s494, %s496
      %p503 = scmp.eq.s32.totalorder %s32, 1
      %p504 = por %p502, %p503
      %p505 = scmp.ne.s32.totalorder %s496, %s497
      %p506 = scmp.eq.s32.totalorder %s32, 0
      %p507 = por %p505, %p506
      %p508 = scmp.ne.s32.totalorder %s496, %s497
      %p509 = scmp.eq.s32.totalorder %s33, 1
      %p510 = por %p508, %p509
      %p512 = scmp.ne.s32.totalorder %s497, %s511
      %p513 = scmp.eq.s32.totalorder %s33, 0
      %p514 = por %p512, %p513
      %s516 = sadd.s32 %s515, 1
      %p519 = scmp.eq.s32.totalorder %s27, 1
      %p520 = scmp.ne.s32.totalorder %s515, %s517
      %p521 = scmp.eq.s32.totalorder %s27, 0
      %p522 = por %p520, %p521
      %p523 = scmp.ne.s32.totalorder %s515, %s517
      %p524 = scmp.eq.s32.totalorder %s32, 1
      %p525 = por %p523, %p524
      %p526 = scmp.ne.s32.totalorder %s517, %s518
      %p527 = scmp.eq.s32.totalorder %s32, 0
      %p528 = por %p526, %p527
      %p529 = scmp.ne.s32.totalorder %s517, %s518
      %p530 = scmp.eq.s32.totalorder %s33, 1
      %p531 = por %p529, %p530
      %p533 = scmp.ne.s32.totalorder %s518, %s532
      %p534 = scmp.eq.s32.totalorder %s33, 0
      %p535 = por %p533, %p534
      %p536 = scmp.le.s32.totalorder 1, %s27
      %p537 = scmp.lt.s32.totalorder %s27, 3
      %p538 = pnand %p536, %p537
      %p539 = pneg %p538
      // Predicated region
      $region9: #{bert_cased_forward.1} parent=5 // pred_check
        _
      $region10: #{bert_cased_forward.1} parent=5 // pred_check_branch
        %541 = sbr.rel (%p538) target = $region12
      $region11: #{bert_cased_forward.1} parent=5 // pred_region
        %s542 = ssub.s32 %s27, 1
        // Predicated region
        $region13: #{bert_cased_forward.1} parent=11 // pred_check
          %p543 = pneg %p48
        $region14: #{bert_cased_forward.1} parent=11 // pred_check_branch
          %545 = sbr.rel (%p543) target = $region16
        $region15: #{bert_cased_forward.1} parent=11 // pred_region
          _
        $region16: #{bert_cased_forward.1} parent=11 // pred_fallthru
          _
        // Predicated region
        $region17: #{bert_cased_forward.1} parent=11 // pred_check
          %p546 = pneg %p69
        $region18: #{bert_cased_forward.1} parent=11 // pred_check_branch
          %548 = sbr.rel (%p546) target = $region20
        $region19: #{bert_cased_forward.1} parent=11 // pred_region
          _
        $region20: #{bert_cased_forward.1} parent=11 // pred_fallthru
          _
        // Predicated region
        $region21: #{bert_cased_forward.1} parent=11 // pred_check
          %p549 = pneg %p90
        $region22: #{bert_cased_forward.1} parent=11 // pred_check_branch
          %551 = sbr.rel (%p549) target = $region24
        $region23: #{bert_cased_forward.1} parent=11 // pred_region
          _
        $region24: #{bert_cased_forward.1} parent=11 // pred_fallthru
          _
        // Predicated region
        $region25: #{bert_cased_forward.1} parent=11 // pred_check
          %p552 = pneg %p111
        $region26: #{bert_cased_forward.1} parent=11 // pred_check_branch
          %554 = sbr.rel (%p552) target = $region28
        $region27: #{bert_cased_forward.1} parent=11 // pred_region
          _
        $region28: #{bert_cased_forward.1} parent=11 // pred_fallthru
          _
        // Predicated region
        $region29: #{bert_cased_forward.1} parent=11 // pred_check
          %p555 = pneg %p444
        $region30: #{bert_cased_forward.1} parent=11 // pred_check_branch
          %557 = sbr.rel (%p555) target = $region32
        $region31: #{bert_cased_forward.1} parent=11 // pred_region
          _
        $region32: #{bert_cased_forward.1} parent=11 // pred_fallthru
          _
        // Predicated region
        $region33: #{bert_cased_forward.1} parent=11 // pred_check
          %p558 = pneg %p465
        $region34: #{bert_cased_forward.1} parent=11 // pred_check_branch
          %560 = sbr.rel (%p558) target = $region36
        $region35: #{bert_cased_forward.1} parent=11 // pred_region
          _
        $region36: #{bert_cased_forward.1} parent=11 // pred_fallthru
          _
        // Predicated region
        $region37: #{bert_cased_forward.1} parent=11 // pred_check
          %p561 = pneg %p486
        $region38: #{bert_cased_forward.1} parent=11 // pred_check_branch
          %563 = sbr.rel (%p561) target = $region40
        $region39: #{bert_cased_forward.1} parent=11 // pred_region
          _
        $region40: #{bert_cased_forward.1} parent=11 // pred_fallthru
          _
        // Predicated region
        $region41: #{bert_cased_forward.1} parent=11 // pred_check
          %p564 = pneg %p507
        $region42: #{bert_cased_forward.1} parent=11 // pred_check_branch
          %566 = sbr.rel (%p564) target = $region44
        $region43: #{bert_cased_forward.1} parent=11 // pred_region
          _
        $region44: #{bert_cased_forward.1} parent=11 // pred_fallthru
          _
      $region12: #{bert_cased_forward.1} parent=5 // pred_fallthru
        _
      %p567 = scmp.lt.s32.totalorder %s27, 2
      // Predicated region
      $region45: #{bert_cased_forward.1} parent=5 // pred_check
        %p568 = pneg %p567
      $region46: #{bert_cased_forward.1} parent=5 // pred_check_branch
        %570 = sbr.rel (%p568) target = $region48
      $region47: #{bert_cased_forward.1} parent=5 // pred_region
        // Predicated region
        $region49: #{bert_cased_forward.1} parent=47 // pred_check
          %p571 = pneg %p131
        $region50: #{bert_cased_forward.1} parent=47 // pred_check_branch
          %573 = sbr.rel (%p571) target = $region52
        $region51: #{bert_cased_forward.1} parent=47 // pred_region
          %p574 = scmp.lt.s32.totalorder %s27, 1
          %s575 = scalar_select %p574, %s27, 1
          %s576 = smul.addr %s575, 4
          %s577 = smul.addr %s576, 4
          %s578 = scalar_lea.vmem %s4, %s577
        $region52: #{bert_cased_forward.1} parent=47 // pred_fallthru
          _
        // Predicated region
        $region53: #{bert_cased_forward.1} parent=47 // pred_check
          %p579 = pneg %p157
        $region54: #{bert_cased_forward.1} parent=47 // pred_check_branch
          %581 = sbr.rel (%p579) target = $region56
        $region55: #{bert_cased_forward.1} parent=47 // pred_region
          %p582 = scmp.lt.s32.totalorder %s27, 1
          %s583 = scalar_select %p582, %s27, 1
          %s584 = scalar_lea.vmem %s5, %s583
        $region56: #{bert_cased_forward.1} parent=47 // pred_fallthru
          _
        // Predicated region
        $region57: #{bert_cased_forward.1} parent=47 // pred_check
          %p585 = pneg %p183
        $region58: #{bert_cased_forward.1} parent=47 // pred_check_branch
          %587 = sbr.rel (%p585) target = $region60
        $region59: #{bert_cased_forward.1} parent=47 // pred_region
          %p588 = scmp.lt.s32.totalorder %s27, 1
          %s589 = scalar_select %p588, %s27, 1
          %s590 = smul.addr %s589, 4
          %s591 = smul.addr %s590, 4
          %s592 = scalar_lea.vmem %s6, %s591
        $region60: #{bert_cased_forward.1} parent=47 // pred_fallthru
          _
        // Predicated region
        $region61: #{bert_cased_forward.1} parent=47 // pred_check
          %p593 = pneg %p209
        $region62: #{bert_cased_forward.1} parent=47 // pred_check_branch
          %595 = sbr.rel (%p593) target = $region64
        $region63: #{bert_cased_forward.1} parent=47 // pred_region
          %p596 = scmp.lt.s32.totalorder %s27, 1
          %s597 = scalar_select %p596, %s27, 1
          %s598 = scalar_lea.vmem %s7, %s597
        $region64: #{bert_cased_forward.1} parent=47 // pred_fallthru
          _
        // Predicated region
        $region65: #{bert_cased_forward.1} parent=47 // pred_check
          %p599 = pneg %p235
        $region66: #{bert_cased_forward.1} parent=47 // pred_check_branch
          %601 = sbr.rel (%p599) target = $region68
        $region67: #{bert_cased_forward.1} parent=47 // pred_region
          %p602 = scmp.lt.s32.totalorder %s27, 1
          %s603 = scalar_select %p602, %s27, 1
          %s604 = scalar_lea.vmem %s8, %s603
        $region68: #{bert_cased_forward.1} parent=47 // pred_fallthru
          _
        // Predicated region
        $region69: #{bert_cased_forward.1} parent=47 // pred_check
          %p605 = pneg %p261
        $region70: #{bert_cased_forward.1} parent=47 // pred_check_branch
          %607 = sbr.rel (%p605) target = $region72
        $region71: #{bert_cased_forward.1} parent=47 // pred_region
          %p608 = scmp.lt.s32.totalorder %s27, 1
          %s609 = scalar_select %p608, %s27, 1
          %s610 = scalar_lea.vmem %s9, %s609
        $region72: #{bert_cased_forward.1} parent=47 // pred_fallthru
          _
        // Predicated region
        $region73: #{bert_cased_forward.1} parent=47 // pred_check
          %p611 = pneg %p287
        $region74: #{bert_cased_forward.1} parent=47 // pred_check_branch
          %613 = sbr.rel (%p611) target = $region76
        $region75: #{bert_cased_forward.1} parent=47 // pred_region
          %p614 = scmp.lt.s32.totalorder %s27, 1
          %s615 = scalar_select %p614, %s27, 1
          %s616 = smul.addr %s615, 4
          %s617 = smul.addr %s616, 4
          %s618 = scalar_lea.vmem %s10, %s617
        $region76: #{bert_cased_forward.1} parent=47 // pred_fallthru
          _
        // Predicated region
        $region77: #{bert_cased_forward.1} parent=47 // pred_check
          %p619 = pneg %p313
        $region78: #{bert_cased_forward.1} parent=47 // pred_check_branch
          %621 = sbr.rel (%p619) target = $region80
        $region79: #{bert_cased_forward.1} parent=47 // pred_region
          %p622 = scmp.lt.s32.totalorder %s27, 1
          %s623 = scalar_select %p622, %s27, 1
          %s624 = scalar_lea.vmem %s11, %s623
        $region80: #{bert_cased_forward.1} parent=47 // pred_fallthru
          _
        // Predicated region
        $region81: #{bert_cased_forward.1} parent=47 // pred_check
          %p625 = pneg %p339
        $region82: #{bert_cased_forward.1} parent=47 // pred_check_branch
          %627 = sbr.rel (%p625) target = $region84
        $region83: #{bert_cased_forward.1} parent=47 // pred_region
          %p628 = scmp.lt.s32.totalorder %s27, 1
          %s629 = scalar_select %p628, %s27, 1
          %s630 = smul.addr %s629, 8
          %s631 = smul.addr %s630, 4
          %s632 = scalar_lea.vmem %s12, %s631
        $region84: #{bert_cased_forward.1} parent=47 // pred_fallthru
          _
        // Predicated region
        $region85: #{bert_cased_forward.1} parent=47 // pred_check
          %p633 = pneg %p365
        $region86: #{bert_cased_forward.1} parent=47 // pred_check_branch
          %635 = sbr.rel (%p633) target = $region88
        $region87: #{bert_cased_forward.1} parent=47 // pred_region
          %p636 = scmp.lt.s32.totalorder %s27, 1
          %s637 = scalar_select %p636, %s27, 1
          %s638 = scalar_lea.vmem %s13, %s637
        $region88: #{bert_cased_forward.1} parent=47 // pred_fallthru
          _
        // Predicated region
        $region89: #{bert_cased_forward.1} parent=47 // pred_check
          %p639 = pneg %p391
        $region90: #{bert_cased_forward.1} parent=47 // pred_check_branch
          %641 = sbr.rel (%p639) target = $region92
        $region91: #{bert_cased_forward.1} parent=47 // pred_region
          %p642 = scmp.lt.s32.totalorder %s27, 1
          %s643 = scalar_select %p642, %s27, 1
          %s644 = scalar_lea.vmem %s14, %s643
        $region92: #{bert_cased_forward.1} parent=47 // pred_fallthru
          _
        // Predicated region
        $region93: #{bert_cased_forward.1} parent=47 // pred_check
          %p645 = pneg %p417
        $region94: #{bert_cased_forward.1} parent=47 // pred_check_branch
          %647 = sbr.rel (%p645) target = $region96
        $region95: #{bert_cased_forward.1} parent=47 // pred_region
          %p648 = scmp.lt.s32.totalorder %s27, 1
          %s649 = scalar_select %p648, %s27, 1
          %s650 = scalar_lea.vmem %s15, %s649
        $region96: #{bert_cased_forward.1} parent=47 // pred_fallthru
          _
      $region48: #{bert_cased_forward.1} parent=5 // pred_fallthru
        _
      %p651 = scmp.le.s32.totalorder 1, %s27
      %p652 = scmp.lt.s32.totalorder %s27, 3
      %p653 = pnand %p651, %p652
      %p654 = pneg %p653
      // Predicated region
      $region97: #{bert_cased_forward.1} parent=5 // pred_check
        _
      $region98: #{bert_cased_forward.1} parent=5 // pred_check_branch
        %656 = sbr.rel (%p653) target = $region100
      $region99: #{bert_cased_forward.1} parent=5 // pred_region
        %s657 = ssub.s32 %s27, 1
        %p658 = pneg %p48
        %p659 = pneg %p45
        %p660 = pneg %p69
        %p661 = pneg %p66
        %p662 = pneg %p90
        %p663 = pneg %p87
        %p664 = pneg %p111
        %p665 = pneg %p108
        %p666 = scmp.lt.s32.totalorder %s32, 1
        %s667 = scalar_select %p666, %s32, 1
        %s668 = smul.addr %s667, 4
        %s669 = smul.addr %s668, 4
        %s670 = scalar_lea.vmem %s4, %s669
        %p671 = pneg %p137
        %p672 = pneg %p134
        %p673 = scmp.lt.s32.totalorder %s32, 1
        %s674 = scalar_select %p673, %s32, 1
        %s675 = scalar_lea.vmem %s5, %s674
        %p676 = pneg %p163
        %p677 = pneg %p160
        %p678 = scmp.lt.s32.totalorder %s32, 1
        %s679 = scalar_select %p678, %s32, 1
        %s680 = smul.addr %s679, 4
        %s681 = smul.addr %s680, 4
        %s682 = scalar_lea.vmem %s6, %s681
        %p683 = pneg %p189
        %p684 = pneg %p186
        %p685 = scmp.lt.s32.totalorder %s32, 1
        %s686 = scalar_select %p685, %s32, 1
        %s687 = scalar_lea.vmem %s7, %s686
        %p688 = pneg %p215
        %p689 = pneg %p212
        %p690 = scmp.lt.s32.totalorder %s32, 1
        %s691 = scalar_select %p690, %s32, 1
        %s692 = scalar_lea.vmem %s8, %s691
        %p693 = pneg %p241
        %p694 = pneg %p238
        %p695 = scmp.lt.s32.totalorder %s32, 1
        %s696 = scalar_select %p695, %s32, 1
        %s697 = scalar_lea.vmem %s9, %s696
        %p698 = pneg %p267
        %p699 = pneg %p264
        %p700 = scmp.lt.s32.totalorder %s32, 1
        %s701 = scalar_select %p700, %s32, 1
        %s702 = smul.addr %s701, 4
        %s703 = smul.addr %s702, 4
        %s704 = scalar_lea.vmem %s10, %s703
        %p705 = pneg %p293
        %p706 = pneg %p290
        %p707 = scmp.lt.s32.totalorder %s32, 1
        %s708 = scalar_select %p707, %s32, 1
        %s709 = scalar_lea.vmem %s11, %s708
        %p710 = pneg %p319
        %p711 = pneg %p316
        %p712 = scmp.lt.s32.totalorder %s32, 1
        %s713 = scalar_select %p712, %s32, 1
        %s714 = smul.addr %s713, 8
        %s715 = smul.addr %s714, 4
        %s716 = scalar_lea.vmem %s12, %s715
        %p717 = pneg %p345
        %p718 = pneg %p342
        %p719 = scmp.lt.s32.totalorder %s32, 1
        %s720 = scalar_select %p719, %s32, 1
        %s721 = scalar_lea.vmem %s13, %s720
        %p722 = pneg %p371
        %p723 = pneg %p368
        %p724 = scmp.lt.s32.totalorder %s32, 1
        %s725 = scalar_select %p724, %s32, 1
        %s726 = scalar_lea.vmem %s14, %s725
        %p727 = pneg %p397
        %p728 = pneg %p394
        %p729 = scmp.lt.s32.totalorder %s32, 1
        %s730 = scalar_select %p729, %s32, 1
        %s731 = scalar_lea.vmem %s15, %s730
        %p732 = pneg %p423
        %p733 = pneg %p420
        %p734 = pneg %p444
        %p735 = pneg %p441
        %p736 = pneg %p465
        %p737 = pneg %p462
        %p738 = pneg %p486
        %p739 = pneg %p483
        %p740 = pneg %p507
        %p741 = pneg %p504
        %p742 = pneg %p528
        %p743 = pneg %p525
        %p744 = scmp.lt.s32.totalorder %s32, 1
        %s745 = scalar_select %p744, %s32, 1
        %s746 = smul.addr %s745, 4
        %s747 = smul.addr %s746, 4
        %s748 = scalar_lea.vmem %s4, %s747
        %p749 = scmp.lt.s32.totalorder %s32, 1
        %s750 = scalar_select %p749, %s32, 1
        %s751 = scalar_lea.vmem %s5, %s750
        %p752 = scmp.lt.s32.totalorder %s32, 1
        %s753 = scalar_select %p752, %s32, 1
        %s754 = smul.addr %s753, 4
        %s755 = smul.addr %s754, 4
        %s756 = scalar_lea.vmem %s6, %s755
        %p757 = scmp.lt.s32.totalorder %s32, 1
        %s758 = scalar_select %p757, %s32, 1
        %s759 = scalar_lea.vmem %s7, %s758
        %p760 = scmp.lt.s32.totalorder %s32, 1
        %s761 = scalar_select %p760, %s32, 1
        %s762 = scalar_lea.vmem %s8, %s761
        %p763 = scmp.lt.s32.totalorder %s32, 1
        %s764 = scalar_select %p763, %s32, 1
        %s765 = scalar_lea.vmem %s9, %s764
        %p766 = scmp.lt.s32.totalorder %s32, 1
        %s767 = scalar_select %p766, %s32, 1
        %s768 = smul.addr %s767, 4
        %s769 = smul.addr %s768, 4
        %s770 = scalar_lea.vmem %s10, %s769
        %p771 = scmp.lt.s32.totalorder %s32, 1
        %s772 = scalar_select %p771, %s32, 1
        %s773 = scalar_lea.vmem %s11, %s772
        %p774 = scmp.lt.s32.totalorder %s32, 1
        %s775 = scalar_select %p774, %s32, 1
        %s776 = smul.addr %s775, 8
        %s777 = smul.addr %s776, 4
        %s778 = scalar_lea.vmem %s12, %s777
        %p779 = scmp.lt.s32.totalorder %s32, 1
        %s780 = scalar_select %p779, %s32, 1
        %s781 = scalar_lea.vmem %s13, %s780
        %p782 = scmp.lt.s32.totalorder %s32, 1
        %s783 = scalar_select %p782, %s32, 1
        %s784 = scalar_lea.vmem %s14, %s783
        %p785 = scmp.lt.s32.totalorder %s32, 1
        %s786 = scalar_select %p785, %s32, 1
        %s787 = scalar_lea.vmem %s15, %s786
        %p789 = scmp.eq.s32.totalorder %s32, 0
        // Predicated region
        $region101: #{bert_cased_forward.1} parent=99 // pred_check
          %p790 = pneg %p789
        $region102: #{bert_cased_forward.1} parent=99 // pred_check_branch
          %792 = sbr.rel (%p790) target = $region104
        $region103: #{bert_cased_forward.1} parent=99 // pred_region
          %v793 = vld [vmem:[%s0] sm:$0xff]
          %v794 = vld [vmem:[%s0 + $0x8] sm:$0xff]
          %v795 = vld [vmem:[%s1] sm:$0x1]
          %v796 = vld [vmem:[%s2] sm:$0x1]
          %vm797 = vcmask 261120
          %v798 = vsel %vm797, %v793, 0.0
          %799 = vadd.xlane.f32.xlu0 %v798
          %v800 = vpop.xlane.xlu0 %799
          %v801 = vsel %vm797, %v794, 0.0
          %802 = vadd.xlane.f32.xlu0 %v801
          %v803 = vpop.xlane.xlu0 %802
          %v804 = vrcp.pop 32.0
          %v805 = vmul.f32 %v800, %v804
          %v806 = vmul.f32 %v803, %v804
          %v807 = vsub.f32 %v793, %v805
          %v808 = vsub.f32 %v794, %v806
          %v809 = vmul.f32 %v807, %v807
          %v810 = vmul.f32 %v808, %v808
          %v811 = vsel %vm797, %v809, 0.0
          %812 = vadd.xlane.f32.xlu0 %v811
          %v813 = vpop.xlane.xlu0 %812
          %v814 = vsel %vm797, %v810, 0.0
          %815 = vadd.xlane.f32.xlu0 %v814
          %v816 = vpop.xlane.xlu0 %815
          %v817 = vmul.f32 %v813, %v804
          %v818 = vmul.f32 %v816, %v804
          %v819 = vadd.f32 %v817, 1e-12
          %v820 = vadd.f32 %v818, 1e-12
          %v821 = vrsqrt.pop %v819
          %v822 = vrsqrt.pop %v820
          %v823 = vmul.f32 %v807, %v821
          %v824 = vmul.f32 %v808, %v822
          %v826 = vlaneseq
          %v827 = vshrl.u32 %v826, 7
          %v828 = vsub.s32 0, %v827
          %v829 = vrot.slane %v795, %v828
          %v831 = vmul.f32 %v823, %v829
          %v832 = vmul.f32 %v824, %v829
          %v834 = vlaneseq
          %v835 = vshrl.u32 %v834, 7
          %v836 = vsub.s32 0, %v835
          %v837 = vrot.slane %v796, %v836
          %v839 = vadd.f32 %v831, %v837
          %v840 = vadd.f32 %v832, %v837
          %841 = vst.msk [vmem:[#allocation2] sm:$0xff] %vm797, %v839
          %842 = vst.msk [vmem:[#allocation2 + $0x8] sm:$0xff] %vm797, %v840
        $region104: #{bert_cased_forward.1} parent=99 // pred_fallthru
          _
        %v843 = vld [vmem:[#allocation2] sm:$0xff]
        %v844 = vld [vmem:[#allocation2 + $0x8] sm:$0xff]
        %v845 = vpack.c.bf16 %v844, %v843
        %v846 = vld [vmem:[%s748] sm:$0xf]
        %v847 = vld [vmem:[%s748 + $0x4] sm:$0xf]
        %v848 = vld [vmem:[%s748 + $0x8] sm:$0xf]
        %v849 = vld [vmem:[%s748 + $0xc] sm:$0xf]
        %v850 = vld [vmem:[%s751] sm:$0x1]
        %v852 = vlaneseq
        %v853 = vshrl.u32 %v852, 7
        %v854 = vsub.s32 0, %v853
        %v855 = vrot.slane %v850, %v854
        %v861 = vunpack.c.l.b16 %v846
        %v862 = vunpack.c.l.b16 %v847
        %v863 = vunpack.c.l.b16 %v848
        %v864 = vunpack.c.l.b16 %v849
        %v865 = vpack.c.b16 %v862, %v861
        %v866 = vpack.c.b16 %v864, %v863
        %vm869 = vcmask 261120
        %v871 = vsel %vm869, %v845, 0
        %873 = vmatprep.subr.bf16.mxu0 0
        %874 = vmatpush1.bf16.msra.mxu0 %v865
        %875 = vmatprep.subr.bf16.mxu0 0
        %876 = vmatpush1.bf16.msra.mxu0 %v866
        %877 = vmatprep.subr.bf16.mxu0 0
        %878 = vmatpush1.bf16.msra.mxu0 0
        %879 = vmatprep.subr.bf16.mxu0 0
        %880 = vmatpush1.bf16.msra.mxu0 0
        %881 = vmatprep.subr.bf16.mxu0 0
        %882 = vmatpush1.bf16.msra.mxu0 0
        %883 = vmatprep.subr.bf16.mxu0 0
        %884 = vmatpush1.bf16.msra.mxu0 0
        %885 = vmatprep.subr.bf16.mxu0 0
        %886 = vmatpush1.bf16.msra.mxu0 0
        %887 = vmatprep.subr.bf16.mxu0 0
        %888 = vmatpush1.bf16.msra.mxu0 0
        %889 = vmatprep.subr.bf16.mxu0 0
        %890 = vmatpush1.bf16.msra.mxu0 0
        %891 = vmatprep.subr.bf16.mxu0 0
        %892 = vmatpush1.bf16.msra.mxu0 0
        %893 = vmatprep.subr.bf16.mxu0 0
        %894 = vmatpush1.bf16.msra.mxu0 0
        %895 = vmatprep.subr.bf16.mxu0 0
        %896 = vmatpush1.bf16.msra.mxu0 0
        %897 = vmatprep.subr.bf16.mxu0 0
        %898 = vmatpush1.bf16.msra.mxu0 0
        %899 = vmatprep.subr.bf16.mxu0 0
        %900 = vmatpush1.bf16.msra.mxu0 0
        %901 = vmatprep.subr.bf16.mxu0 0
        %902 = vmatpush1.bf16.msra.mxu0 0
        %903 = vmatprep.subr.bf16.mxu0 0
        %904 = vmatpush1.bf16.msra.mxu0 0
        %905 = vmatprep.mubr.bf16.mxu0 0
        %906 = vmatmul.mubr.bf16.gmra.mrb[0].mxu0 %v871
        %v907 = vpop.f32.mrb[0].mxu0
        %v908 = vadd.f32 %v855, %v907
        %v909 = vpop.f32.mrb[0].mxu0
        %v910 = vpop.f32.mrb[0].mxu0
        %v911 = vadd.f32 %v855, %v910
        %v912 = vpop.f32.mrb[0].mxu0
        %913 = vdwg.mxu0
        %v914 = vld [vmem:[%s3] sm:$0x3]
        %v915 = vlaneseq
        %v916 = vshrl.u32 %v915, 7
        %v917 = vsub.s32 0, %v916
        %v918 = vrot.slane %v914, %v917
        %920 = vrot.lane.b32.xlu0 %v908, 96
        %v921 = vpop.permute.xlu0 %920
        %vm922 = vcmask 64512
        %v923 = vsel %vm922, %v908, 0
        %v925 = vsel %vm922, %v921, 0
        %927 = vmatprep.subr.mxu0 0.0
        %928 = vmatpush1.xpose.msra.mxu0 %v925
        %929 = vmatprep.subr.mxu0 0.0
        %930 = vmatpush1.xpose.msra.mxu0 0.0
        %931 = vmatprep.subr.mxu0 0.0
        %932 = vmatpush1.xpose.msra.mxu0 0.0
        %933 = vmatprep.subr.mxu0 0.0
        %934 = vmatpush1.xpose.msra.mxu0 0.0
        %935 = vmatprep.subr.mxu0 0.0
        %936 = vmatpush1.xpose.msra.mxu0 0.0
        %937 = vmatprep.subr.mxu0 0.0
        %938 = vmatpush1.xpose.msra.mxu0 0.0
        %939 = vmatprep.subr.mxu0 0.0
        %940 = vmatpush1.xpose.msra.mxu0 0.0
        %941 = vmatprep.subr.mxu0 0.0
        %942 = vmatpush1.xpose.msra.mxu0 0.0
        %943 = vmatprep.subr.mxu0 0.0
        %944 = vmatpush1.xpose.msra.mxu0 0.0
        %945 = vmatprep.subr.mxu0 0.0
        %946 = vmatpush1.xpose.msra.mxu0 0.0
        %947 = vmatprep.subr.mxu0 0.0
        %948 = vmatpush1.xpose.msra.mxu0 0.0
        %949 = vmatprep.subr.mxu0 0.0
        %950 = vmatpush1.xpose.msra.mxu0 0.0
        %951 = vmatprep.subr.mxu0 0.0
        %952 = vmatpush1.xpose.msra.mxu0 0.0
        %953 = vmatprep.subr.mxu0 0.0
        %954 = vmatpush1.xpose.msra.mxu0 0.0
        %955 = vmatprep.subr.mxu0 0.0
        %956 = vmatpush1.xpose.msra.mxu0 0.0
        %957 = vmatprep.subr.mxu0 0.0
        %958 = vmatpush1.xpose.msra.mxu0 0.0
        %959 = vmatprep.subr.mxu0 0.0
        %960 = vmatpush1.xpose.msra.mxu0 0.0
        %961 = vmatprep.subr.mxu0 0.0
        %962 = vmatpush1.xpose.msra.mxu0 0.0
        %963 = vmatprep.subr.mxu0 0.0
        %964 = vmatpush1.xpose.msra.mxu0 0.0
        %965 = vmatprep.subr.mxu0 0.0
        %966 = vmatpush1.xpose.msra.mxu0 0.0
        %967 = vmatprep.subr.mxu0 0.0
        %968 = vmatpush1.xpose.msra.mxu0 0.0
        %969 = vmatprep.subr.mxu0 0.0
        %970 = vmatpush1.xpose.msra.mxu0 0.0
        %971 = vmatprep.subr.mxu0 0.0
        %972 = vmatpush1.xpose.msra.mxu0 0.0
        %973 = vmatprep.subr.mxu0 0.0
        %974 = vmatpush1.xpose.msra.mxu0 0.0
        %975 = vmatprep.subr.mxu0 0.0
        %976 = vmatpush1.xpose.msra.mxu0 0.0
        %977 = vmatprep.subr.mxu0 0.0
        %978 = vmatpush1.xpose.msra.mxu0 0.0
        %979 = vmatprep.subr.mxu0 0.0
        %980 = vmatpush1.xpose.msra.mxu0 0.0
        %981 = vmatprep.subr.mxu0 0.0
        %982 = vmatpush1.xpose.msra.mxu0 0.0
        %983 = vmatprep.subr.mxu0 0.0
        %984 = vmatpush1.xpose.msra.mxu0 0.0
        %985 = vmatprep.subr.mxu0 0.0
        %986 = vmatpush1.xpose.msra.mxu0 0.0
        %987 = vmatprep.subr.mxu0 0.0
        %988 = vmatpush1.xpose.msra.mxu0 0.0
        %989 = vmatprep.subr.mxu0 0.0
        %990 = vmatpush1.xpose.msra.mxu0 0.0
        %991 = vmatprep.mubr.f32.mxu0 0.0
        %992 = vmatmul.mubr.f32.gmra.mrb[0].mxu0 %v923
        %v993 = vpop.f32.mrb[0].mxu0
        %v994 = vadd.f32 %v918, %v993
        %v995 = vpop.f32.mrb[0].mxu0
        %996 = vdwg.mxu0
        %v997 = vsel %vm922, %v994, -inf
        %998 = vmax.xlane.f32.xlu0 %v997
        %v999 = vpop.xlane.xlu0 %998
        %v1000 = vsub.f32 %v994, %v999
        %v1001 = vmul.f32 %v1000, 1.442695
        %v1002 = vpow.pop %v1001
        %v1003 = vsel %vm922, %v1002, 0.0
        %1004 = vadd.xlane.f32.xlu0 %v1003
        %v1005 = vpop.xlane.xlu0 %1004
        %v1006 = vrcp.pop %v1005
        %v1007 = vmul.f32 %v1002, %v1006
        %1008 = vrot.lane.b32.xlu0 %v908, 64
        %v1009 = vpop.permute.xlu0 %1008
        %v1012 = vsel %vm922, %v1007, 0
        %1014 = vmatprep.subr.mxu0 0.0
        %1015 = vmatpush1.msra.mxu0 %v1009
        %1016 = vmatprep.subr.mxu0 0.0
        %1017 = vmatpush1.msra.mxu0 0.0
        %1018 = vmatprep.subr.mxu0 0.0
        %1019 = vmatpush1.msra.mxu0 0.0
        %1020 = vmatprep.subr.mxu0 0.0
        %1021 = vmatpush1.msra.mxu0 0.0
        %1022 = vmatprep.subr.mxu0 0.0
        %1023 = vmatpush1.msra.mxu0 0.0
        %1024 = vmatprep.subr.mxu0 0.0
        %1025 = vmatpush1.msra.mxu0 0.0
        %1026 = vmatprep.subr.mxu0 0.0
        %1027 = vmatpush1.msra.mxu0 0.0
        %1028 = vmatprep.subr.mxu0 0.0
        %1029 = vmatpush1.msra.mxu0 0.0
        %1030 = vmatprep.subr.mxu0 0.0
        %1031 = vmatpush1.msra.mxu0 0.0
        %1032 = vmatprep.subr.mxu0 0.0
        %1033 = vmatpush1.msra.mxu0 0.0
        %1034 = vmatprep.subr.mxu0 0.0
        %1035 = vmatpush1.msra.mxu0 0.0
        %1036 = vmatprep.subr.mxu0 0.0
        %1037 = vmatpush1.msra.mxu0 0.0
        %1038 = vmatprep.subr.mxu0 0.0
        %1039 = vmatpush1.msra.mxu0 0.0
        %1040 = vmatprep.subr.mxu0 0.0
        %1041 = vmatpush1.msra.mxu0 0.0
        %1042 = vmatprep.subr.mxu0 0.0
        %1043 = vmatpush1.msra.mxu0 0.0
        %1044 = vmatprep.subr.mxu0 0.0
        %1045 = vmatpush1.msra.mxu0 0.0
        %1046 = vmatprep.subr.mxu0 0.0
        %1047 = vmatpush1.msra.mxu0 0.0
        %1048 = vmatprep.subr.mxu0 0.0
        %1049 = vmatpush1.msra.mxu0 0.0
        %1050 = vmatprep.subr.mxu0 0.0
        %1051 = vmatpush1.msra.mxu0 0.0
        %1052 = vmatprep.subr.mxu0 0.0
        %1053 = vmatpush1.msra.mxu0 0.0
        %1054 = vmatprep.subr.mxu0 0.0
        %1055 = vmatpush1.msra.mxu0 0.0
        %1056 = vmatprep.subr.mxu0 0.0
        %1057 = vmatpush1.msra.mxu0 0.0
        %1058 = vmatprep.subr.mxu0 0.0
        %1059 = vmatpush1.msra.mxu0 0.0
        %1060 = vmatprep.subr.mxu0 0.0
        %1061 = vmatpush1.msra.mxu0 0.0
        %1062 = vmatprep.subr.mxu0 0.0
        %1063 = vmatpush1.msra.mxu0 0.0
        %1064 = vmatprep.subr.mxu0 0.0
        %1065 = vmatpush1.msra.mxu0 0.0
        %1066 = vmatprep.subr.mxu0 0.0
        %1067 = vmatpush1.msra.mxu0 0.0
        %1068 = vmatprep.subr.mxu0 0.0
        %1069 = vmatpush1.msra.mxu0 0.0
        %1070 = vmatprep.subr.mxu0 0.0
        %1071 = vmatpush1.msra.mxu0 0.0
        %1072 = vmatprep.subr.mxu0 0.0
        %1073 = vmatpush1.msra.mxu0 0.0
        %1074 = vmatprep.subr.mxu0 0.0
        %1075 = vmatpush1.msra.mxu0 0.0
        %1076 = vmatprep.subr.mxu0 0.0
        %1077 = vmatpush1.msra.mxu0 0.0
        %1078 = vmatprep.mubr.f32.mxu0 0.0
        %1079 = vmatmul.mubr.f32.gmra.mrb[0].mxu0 %v1012
        %v1080 = vpop.f32.mrb[0].mxu0
        %v1081 = vadd.f32 0.0, %v1080
        %v1082 = vpop.f32.mrb[0].mxu0
        %1083 = vdwg.mxu0
        %1084 = vrot.lane.b32.xlu0 %v908, 120
        %v1085 = vpop.permute.xlu0 %1084
        %1086 = vrot.lane.b32.xlu0 %v908, 88
        %v1087 = vpop.permute.xlu0 %1086
        %v1088 = vsel %vm922, %v1085, 0
        %v1090 = vsel %vm922, %v1087, 0
        %1092 = vmatprep.subr.mxu0 0.0
        %1093 = vmatpush1.xpose.msra.mxu0 %v1090
        %1094 = vmatprep.subr.mxu0 0.0
        %1095 = vmatpush1.xpose.msra.mxu0 0.0
        %1096 = vmatprep.subr.mxu0 0.0
        %1097 = vmatpush1.xpose.msra.mxu0 0.0
        %1098 = vmatprep.subr.mxu0 0.0
        %1099 = vmatpush1.xpose.msra.mxu0 0.0
        %1100 = vmatprep.subr.mxu0 0.0
        %1101 = vmatpush1.xpose.msra.mxu0 0.0
        %1102 = vmatprep.subr.mxu0 0.0
        %1103 = vmatpush1.xpose.msra.mxu0 0.0
        %1104 = vmatprep.subr.mxu0 0.0
        %1105 = vmatpush1.xpose.msra.mxu0 0.0
        %1106 = vmatprep.subr.mxu0 0.0
        %1107 = vmatpush1.xpose.msra.mxu0 0.0
        %1108 = vmatprep.subr.mxu0 0.0
        %1109 = vmatpush1.xpose.msra.mxu0 0.0
        %1110 = vmatprep.subr.mxu0 0.0
        %1111 = vmatpush1.xpose.msra.mxu0 0.0
        %1112 = vmatprep.subr.mxu0 0.0
        %1113 = vmatpush1.xpose.msra.mxu0 0.0
        %1114 = vmatprep.subr.mxu0 0.0
        %1115 = vmatpush1.xpose.msra.mxu0 0.0
        %1116 = vmatprep.subr.mxu0 0.0
        %1117 = vmatpush1.xpose.msra.mxu0 0.0
        %1118 = vmatprep.subr.mxu0 0.0
        %1119 = vmatpush1.xpose.msra.mxu0 0.0
        %1120 = vmatprep.subr.mxu0 0.0
        %1121 = vmatpush1.xpose.msra.mxu0 0.0
        %1122 = vmatprep.subr.mxu0 0.0
        %1123 = vmatpush1.xpose.msra.mxu0 0.0
        %1124 = vmatprep.subr.mxu0 0.0
        %1125 = vmatpush1.xpose.msra.mxu0 0.0
        %1126 = vmatprep.subr.mxu0 0.0
        %1127 = vmatpush1.xpose.msra.mxu0 0.0
        %1128 = vmatprep.subr.mxu0 0.0
        %1129 = vmatpush1.xpose.msra.mxu0 0.0
        %1130 = vmatprep.subr.mxu0 0.0
        %1131 = vmatpush1.xpose.msra.mxu0 0.0
        %1132 = vmatprep.subr.mxu0 0.0
        %1133 = vmatpush1.xpose.msra.mxu0 0.0
        %1134 = vmatprep.subr.mxu0 0.0
        %1135 = vmatpush1.xpose.msra.mxu0 0.0
        %1136 = vmatprep.subr.mxu0 0.0
        %1137 = vmatpush1.xpose.msra.mxu0 0.0
        %1138 = vmatprep.subr.mxu0 0.0
        %1139 = vmatpush1.xpose.msra.mxu0 0.0
        %1140 = vmatprep.subr.mxu0 0.0
        %1141 = vmatpush1.xpose.msra.mxu0 0.0
        %1142 = vmatprep.subr.mxu0 0.0
        %1143 = vmatpush1.xpose.msra.mxu0 0.0
        %1144 = vmatprep.subr.mxu0 0.0
        %1145 = vmatpush1.xpose.msra.mxu0 0.0
        %1146 = vmatprep.subr.mxu0 0.0
        %1147 = vmatpush1.xpose.msra.mxu0 0.0
        %1148 = vmatprep.subr.mxu0 0.0
        %1149 = vmatpush1.xpose.msra.mxu0 0.0
        %1150 = vmatprep.subr.mxu0 0.0
        %1151 = vmatpush1.xpose.msra.mxu0 0.0
        %1152 = vmatprep.subr.mxu0 0.0
        %1153 = vmatpush1.xpose.msra.mxu0 0.0
        %1154 = vmatprep.subr.mxu0 0.0
        %1155 = vmatpush1.xpose.msra.mxu0 0.0
        %1156 = vmatprep.mubr.f32.mxu0 0.0
        %1157 = vmatmul.mubr.f32.gmra.mrb[0].mxu0 %v1088
        %v1158 = vpop.f32.mrb[0].mxu0
        %v1159 = vadd.f32 %v918, %v1158
        %v1160 = vpop.f32.mrb[0].mxu0
        %1161 = vdwg.mxu0
        %v1162 = vsel %vm922, %v1159, -inf
        %1163 = vmax.xlane.f32.xlu0 %v1162
        %v1164 = vpop.xlane.xlu0 %1163
        %v1165 = vsub.f32 %v1159, %v1164
        %v1166 = vmul.f32 %v1165, 1.442695
        %v1167 = vpow.pop %v1166
        %v1168 = vsel %vm922, %v1167, 0.0
        %1169 = vadd.xlane.f32.xlu0 %v1168
        %v1170 = vpop.xlane.xlu0 %1169
        %v1171 = vrcp.pop %v1170
        %v1172 = vmul.f32 %v1167, %v1171
        %1173 = vrot.lane.b32.xlu0 %v908, 56
        %v1174 = vpop.permute.xlu0 %1173
        %v1177 = vsel %vm922, %v1172, 0
        %1179 = vmatprep.subr.mxu0 0.0
        %1180 = vmatpush1.msra.mxu0 %v1174
        %1181 = vmatprep.subr.mxu0 0.0
        %1182 = vmatpush1.msra.mxu0 0.0
        %1183 = vmatprep.subr.mxu0 0.0
        %1184 = vmatpush1.msra.mxu0 0.0
        %1185 = vmatprep.subr.mxu0 0.0
        %1186 = vmatpush1.msra.mxu0 0.0
        %1187 = vmatprep.subr.mxu0 0.0
        %1188 = vmatpush1.msra.mxu0 0.0
        %1189 = vmatprep.subr.mxu0 0.0
        %1190 = vmatpush1.msra.mxu0 0.0
        %1191 = vmatprep.subr.mxu0 0.0
        %1192 = vmatpush1.msra.mxu0 0.0
        %1193 = vmatprep.subr.mxu0 0.0
        %1194 = vmatpush1.msra.mxu0 0.0
        %1195 = vmatprep.subr.mxu0 0.0
        %1196 = vmatpush1.msra.mxu0 0.0
        %1197 = vmatprep.subr.mxu0 0.0
        %1198 = vmatpush1.msra.mxu0 0.0
        %1199 = vmatprep.subr.mxu0 0.0
        %1200 = vmatpush1.msra.mxu0 0.0
        %1201 = vmatprep.subr.mxu0 0.0
        %1202 = vmatpush1.msra.mxu0 0.0
        %1203 = vmatprep.subr.mxu0 0.0
        %1204 = vmatpush1.msra.mxu0 0.0
        %1205 = vmatprep.subr.mxu0 0.0
        %1206 = vmatpush1.msra.mxu0 0.0
        %1207 = vmatprep.subr.mxu0 0.0
        %1208 = vmatpush1.msra.mxu0 0.0
        %1209 = vmatprep.subr.mxu0 0.0
        %1210 = vmatpush1.msra.mxu0 0.0
        %1211 = vmatprep.subr.mxu0 0.0
        %1212 = vmatpush1.msra.mxu0 0.0
        %1213 = vmatprep.subr.mxu0 0.0
        %1214 = vmatpush1.msra.mxu0 0.0
        %1215 = vmatprep.subr.mxu0 0.0
        %1216 = vmatpush1.msra.mxu0 0.0
        %1217 = vmatprep.subr.mxu0 0.0
        %1218 = vmatpush1.msra.mxu0 0.0
        %1219 = vmatprep.subr.mxu0 0.0
        %1220 = vmatpush1.msra.mxu0 0.0
        %1221 = vmatprep.subr.mxu0 0.0
        %1222 = vmatpush1.msra.mxu0 0.0
        %1223 = vmatprep.subr.mxu0 0.0
        %1224 = vmatpush1.msra.mxu0 0.0
        %1225 = vmatprep.subr.mxu0 0.0
        %1226 = vmatpush1.msra.mxu0 0.0
        %1227 = vmatprep.subr.mxu0 0.0
        %1228 = vmatpush1.msra.mxu0 0.0
        %1229 = vmatprep.subr.mxu0 0.0
        %1230 = vmatpush1.msra.mxu0 0.0
        %1231 = vmatprep.subr.mxu0 0.0
        %1232 = vmatpush1.msra.mxu0 0.0
        %1233 = vmatprep.subr.mxu0 0.0
        %1234 = vmatpush1.msra.mxu0 0.0
        %1235 = vmatprep.subr.mxu0 0.0
        %1236 = vmatpush1.msra.mxu0 0.0
        %1237 = vmatprep.subr.mxu0 0.0
        %1238 = vmatpush1.msra.mxu0 0.0
        %1239 = vmatprep.subr.mxu0 0.0
        %1240 = vmatpush1.msra.mxu0 0.0
        %1241 = vmatprep.subr.mxu0 0.0
        %1242 = vmatpush1.msra.mxu0 0.0
        %1243 = vmatprep.mubr.f32.mxu0 0.0
        %1244 = vmatmul.mubr.f32.gmra.mrb[0].mxu0 %v1177
        %v1245 = vpop.f32.mrb[0].mxu0
        %v1246 = vadd.f32 0.0, %v1245
        %v1247 = vpop.f32.mrb[0].mxu0
        %1248 = vdwg.mxu0
        %1249 = vrot.lane.b32.xlu0 %v908, 112
        %v1250 = vpop.permute.xlu0 %1249
        %1251 = vrot.lane.b32.xlu0 %v908, 80
        %v1252 = vpop.permute.xlu0 %1251
        %v1253 = vsel %vm922, %v1250, 0
        %v1255 = vsel %vm922, %v1252, 0
        %1257 = vmatprep.subr.mxu0 0.0
        %1258 = vmatpush1.xpose.msra.mxu0 %v1255
        %1259 = vmatprep.subr.mxu0 0.0
        %1260 = vmatpush1.xpose.msra.mxu0 0.0
        %1261 = vmatprep.subr.mxu0 0.0
        %1262 = vmatpush1.xpose.msra.mxu0 0.0
        %1263 = vmatprep.subr.mxu0 0.0
        %1264 = vmatpush1.xpose.msra.mxu0 0.0
        %1265 = vmatprep.subr.mxu0 0.0
        %1266 = vmatpush1.xpose.msra.mxu0 0.0
        %1267 = vmatprep.subr.mxu0 0.0
        %1268 = vmatpush1.xpose.msra.mxu0 0.0
        %1269 = vmatprep.subr.mxu0 0.0
        %1270 = vmatpush1.xpose.msra.mxu0 0.0
        %1271 = vmatprep.subr.mxu0 0.0
        %1272 = vmatpush1.xpose.msra.mxu0 0.0
        %1273 = vmatprep.subr.mxu0 0.0
        %1274 = vmatpush1.xpose.msra.mxu0 0.0
        %1275 = vmatprep.subr.mxu0 0.0
        %1276 = vmatpush1.xpose.msra.mxu0 0.0
        %1277 = vmatprep.subr.mxu0 0.0
        %1278 = vmatpush1.xpose.msra.mxu0 0.0
        %1279 = vmatprep.subr.mxu0 0.0
        %1280 = vmatpush1.xpose.msra.mxu0 0.0
        %1281 = vmatprep.subr.mxu0 0.0
        %1282 = vmatpush1.xpose.msra.mxu0 0.0
        %1283 = vmatprep.subr.mxu0 0.0
        %1284 = vmatpush1.xpose.msra.mxu0 0.0
        %1285 = vmatprep.subr.mxu0 0.0
        %1286 = vmatpush1.xpose.msra.mxu0 0.0
        %1287 = vmatprep.subr.mxu0 0.0
        %1288 = vmatpush1.xpose.msra.mxu0 0.0
        %1289 = vmatprep.subr.mxu0 0.0
        %1290 = vmatpush1.xpose.msra.mxu0 0.0
        %1291 = vmatprep.subr.mxu0 0.0
        %1292 = vmatpush1.xpose.msra.mxu0 0.0
        %1293 = vmatprep.subr.mxu0 0.0
        %1294 = vmatpush1.xpose.msra.mxu0 0.0
        %1295 = vmatprep.subr.mxu0 0.0
        %1296 = vmatpush1.xpose.msra.mxu0 0.0
        %1297 = vmatprep.subr.mxu0 0.0
        %1298 = vmatpush1.xpose.msra.mxu0 0.0
        %1299 = vmatprep.subr.mxu0 0.0
        %1300 = vmatpush1.xpose.msra.mxu0 0.0
        %1301 = vmatprep.subr.mxu0 0.0
        %1302 = vmatpush1.xpose.msra.mxu0 0.0
        %1303 = vmatprep.subr.mxu0 0.0
        %1304 = vmatpush1.xpose.msra.mxu0 0.0
        %1305 = vmatprep.subr.mxu0 0.0
        %1306 = vmatpush1.xpose.msra.mxu0 0.0
        %1307 = vmatprep.subr.mxu0 0.0
        %1308 = vmatpush1.xpose.msra.mxu0 0.0
        %1309 = vmatprep.subr.mxu0 0.0
        %1310 = vmatpush1.xpose.msra.mxu0 0.0
        %1311 = vmatprep.subr.mxu0 0.0
        %1312 = vmatpush1.xpose.msra.mxu0 0.0
        %1313 = vmatprep.subr.mxu0 0.0
        %1314 = vmatpush1.xpose.msra.mxu0 0.0
        %1315 = vmatprep.subr.mxu0 0.0
        %1316 = vmatpush1.xpose.msra.mxu0 0.0
        %1317 = vmatprep.subr.mxu0 0.0
        %1318 = vmatpush1.xpose.msra.mxu0 0.0
        %1319 = vmatprep.subr.mxu0 0.0
        %1320 = vmatpush1.xpose.msra.mxu0 0.0
        %1321 = vmatprep.mubr.f32.mxu0 0.0
        %1322 = vmatmul.mubr.f32.gmra.mrb[0].mxu0 %v1253
        %v1323 = vpop.f32.mrb[0].mxu0
        %v1324 = vadd.f32 %v918, %v1323
        %v1325 = vpop.f32.mrb[0].mxu0
        %1326 = vdwg.mxu0
        %v1327 = vsel %vm922, %v1324, -inf
        %1328 = vmax.xlane.f32.xlu0 %v1327
        %v1329 = vpop.xlane.xlu0 %1328
        %v1330 = vsub.f32 %v1324, %v1329
        %v1331 = vmul.f32 %v1330, 1.442695
        %v1332 = vpow.pop %v1331
        %v1333 = vsel %vm922, %v1332, 0.0
        %1334 = vadd.xlane.f32.xlu0 %v1333
        %v1335 = vpop.xlane.xlu0 %1334
        %v1336 = vrcp.pop %v1335
        %v1337 = vmul.f32 %v1332, %v1336
        %1338 = vrot.lane.b32.xlu0 %v908, 48
        %v1339 = vpop.permute.xlu0 %1338
        %v1342 = vsel %vm922, %v1337, 0
        %1344 = vmatprep.subr.mxu0 0.0
        %1345 = vmatpush1.msra.mxu0 %v1339
        %1346 = vmatprep.subr.mxu0 0.0
        %1347 = vmatpush1.msra.mxu0 0.0
        %1348 = vmatprep.subr.mxu0 0.0
        %1349 = vmatpush1.msra.mxu0 0.0
        %1350 = vmatprep.subr.mxu0 0.0
        %1351 = vmatpush1.msra.mxu0 0.0
        %1352 = vmatprep.subr.mxu0 0.0
        %1353 = vmatpush1.msra.mxu0 0.0
        %1354 = vmatprep.subr.mxu0 0.0
        %1355 = vmatpush1.msra.mxu0 0.0
        %1356 = vmatprep.subr.mxu0 0.0
        %1357 = vmatpush1.msra.mxu0 0.0
        %1358 = vmatprep.subr.mxu0 0.0
        %1359 = vmatpush1.msra.mxu0 0.0
        %1360 = vmatprep.subr.mxu0 0.0
        %1361 = vmatpush1.msra.mxu0 0.0
        %1362 = vmatprep.subr.mxu0 0.0
        %1363 = vmatpush1.msra.mxu0 0.0
        %1364 = vmatprep.subr.mxu0 0.0
        %1365 = vmatpush1.msra.mxu0 0.0
        %1366 = vmatprep.subr.mxu0 0.0
        %1367 = vmatpush1.msra.mxu0 0.0
        %1368 = vmatprep.subr.mxu0 0.0
        %1369 = vmatpush1.msra.mxu0 0.0
        %1370 = vmatprep.subr.mxu0 0.0
        %1371 = vmatpush1.msra.mxu0 0.0
        %1372 = vmatprep.subr.mxu0 0.0
        %1373 = vmatpush1.msra.mxu0 0.0
        %1374 = vmatprep.subr.mxu0 0.0
        %1375 = vmatpush1.msra.mxu0 0.0
        %1376 = vmatprep.subr.mxu0 0.0
        %1377 = vmatpush1.msra.mxu0 0.0
        %1378 = vmatprep.subr.mxu0 0.0
        %1379 = vmatpush1.msra.mxu0 0.0
        %1380 = vmatprep.subr.mxu0 0.0
        %1381 = vmatpush1.msra.mxu0 0.0
        %1382 = vmatprep.subr.mxu0 0.0
        %1383 = vmatpush1.msra.mxu0 0.0
        %1384 = vmatprep.subr.mxu0 0.0
        %1385 = vmatpush1.msra.mxu0 0.0
        %1386 = vmatprep.subr.mxu0 0.0
        %1387 = vmatpush1.msra.mxu0 0.0
        %1388 = vmatprep.subr.mxu0 0.0
        %1389 = vmatpush1.msra.mxu0 0.0
        %1390 = vmatprep.subr.mxu0 0.0
        %1391 = vmatpush1.msra.mxu0 0.0
        %1392 = vmatprep.subr.mxu0 0.0
        %1393 = vmatpush1.msra.mxu0 0.0
        %1394 = vmatprep.subr.mxu0 0.0
        %1395 = vmatpush1.msra.mxu0 0.0
        %1396 = vmatprep.subr.mxu0 0.0
        %1397 = vmatpush1.msra.mxu0 0.0
        %1398 = vmatprep.subr.mxu0 0.0
        %1399 = vmatpush1.msra.mxu0 0.0
        %1400 = vmatprep.subr.mxu0 0.0
        %1401 = vmatpush1.msra.mxu0 0.0
        %1402 = vmatprep.subr.mxu0 0.0
        %1403 = vmatpush1.msra.mxu0 0.0
        %1404 = vmatprep.subr.mxu0 0.0
        %1405 = vmatpush1.msra.mxu0 0.0
        %1406 = vmatprep.subr.mxu0 0.0
        %1407 = vmatpush1.msra.mxu0 0.0
        %1408 = vmatprep.mubr.f32.mxu0 0.0
        %1409 = vmatmul.mubr.f32.gmra.mrb[0].mxu0 %v1342
        %v1410 = vpop.f32.mrb[0].mxu0
        %v1411 = vadd.f32 0.0, %v1410
        %v1412 = vpop.f32.mrb[0].mxu0
        %1413 = vdwg.mxu0
        %1414 = vrot.lane.b32.xlu0 %v908, 104
        %v1415 = vpop.permute.xlu0 %1414
        %1416 = vrot.lane.b32.xlu0 %v908, 72
        %v1417 = vpop.permute.xlu0 %1416
        %v1418 = vsel %vm922, %v1415, 0
        %v1420 = vsel %vm922, %v1417, 0
        %1422 = vmatprep.subr.mxu0 0.0
        %1423 = vmatpush1.xpose.msra.mxu0 %v1420
        %1424 = vmatprep.subr.mxu0 0.0
        %1425 = vmatpush1.xpose.msra.mxu0 0.0
        %1426 = vmatprep.subr.mxu0 0.0
        %1427 = vmatpush1.xpose.msra.mxu0 0.0
        %1428 = vmatprep.subr.mxu0 0.0
        %1429 = vmatpush1.xpose.msra.mxu0 0.0
        %1430 = vmatprep.subr.mxu0 0.0
        %1431 = vmatpush1.xpose.msra.mxu0 0.0
        %1432 = vmatprep.subr.mxu0 0.0
        %1433 = vmatpush1.xpose.msra.mxu0 0.0
        %1434 = vmatprep.subr.mxu0 0.0
        %1435 = vmatpush1.xpose.msra.mxu0 0.0
        %1436 = vmatprep.subr.mxu0 0.0
        %1437 = vmatpush1.xpose.msra.mxu0 0.0
        %1438 = vmatprep.subr.mxu0 0.0
        %1439 = vmatpush1.xpose.msra.mxu0 0.0
        %1440 = vmatprep.subr.mxu0 0.0
        %1441 = vmatpush1.xpose.msra.mxu0 0.0
        %1442 = vmatprep.subr.mxu0 0.0
        %1443 = vmatpush1.xpose.msra.mxu0 0.0
        %1444 = vmatprep.subr.mxu0 0.0
        %1445 = vmatpush1.xpose.msra.mxu0 0.0
        %1446 = vmatprep.subr.mxu0 0.0
        %1447 = vmatpush1.xpose.msra.mxu0 0.0
        %1448 = vmatprep.subr.mxu0 0.0
        %1449 = vmatpush1.xpose.msra.mxu0 0.0
        %1450 = vmatprep.subr.mxu0 0.0
        %1451 = vmatpush1.xpose.msra.mxu0 0.0
        %1452 = vmatprep.subr.mxu0 0.0
        %1453 = vmatpush1.xpose.msra.mxu0 0.0
        %1454 = vmatprep.subr.mxu0 0.0
        %1455 = vmatpush1.xpose.msra.mxu0 0.0
        %1456 = vmatprep.subr.mxu0 0.0
        %1457 = vmatpush1.xpose.msra.mxu0 0.0
        %1458 = vmatprep.subr.mxu0 0.0
        %1459 = vmatpush1.xpose.msra.mxu0 0.0
        %1460 = vmatprep.subr.mxu0 0.0
        %1461 = vmatpush1.xpose.msra.mxu0 0.0
        %1462 = vmatprep.subr.mxu0 0.0
        %1463 = vmatpush1.xpose.msra.mxu0 0.0
        %1464 = vmatprep.subr.mxu0 0.0
        %1465 = vmatpush1.xpose.msra.mxu0 0.0
        %1466 = vmatprep.subr.mxu0 0.0
        %1467 = vmatpush1.xpose.msra.mxu0 0.0
        %1468 = vmatprep.subr.mxu0 0.0
        %1469 = vmatpush1.xpose.msra.mxu0 0.0
        %1470 = vmatprep.subr.mxu0 0.0
        %1471 = vmatpush1.xpose.msra.mxu0 0.0
        %1472 = vmatprep.subr.mxu0 0.0
        %1473 = vmatpush1.xpose.msra.mxu0 0.0
        %1474 = vmatprep.subr.mxu0 0.0
        %1475 = vmatpush1.xpose.msra.mxu0 0.0
        %1476 = vmatprep.subr.mxu0 0.0
        %1477 = vmatpush1.xpose.msra.mxu0 0.0
        %1478 = vmatprep.subr.mxu0 0.0
        %1479 = vmatpush1.xpose.msra.mxu0 0.0
        %1480 = vmatprep.subr.mxu0 0.0
        %1481 = vmatpush1.xpose.msra.mxu0 0.0
        %1482 = vmatprep.subr.mxu0 0.0
        %1483 = vmatpush1.xpose.msra.mxu0 0.0
        %1484 = vmatprep.subr.mxu0 0.0
        %1485 = vmatpush1.xpose.msra.mxu0 0.0
        %1486 = vmatprep.mubr.f32.mxu0 0.0
        %1487 = vmatmul.mubr.f32.gmra.mrb[0].mxu0 %v1418
        %v1488 = vpop.f32.mrb[0].mxu0
        %v1489 = vadd.f32 %v918, %v1488
        %v1490 = vpop.f32.mrb[0].mxu0
        %1491 = vdwg.mxu0
        %v1492 = vsel %vm922, %v1489, -inf
        %1493 = vmax.xlane.f32.xlu0 %v1492
        %v1494 = vpop.xlane.xlu0 %1493
        %v1495 = vsub.f32 %v1489, %v1494
        %v1496 = vmul.f32 %v1495, 1.442695
        %v1497 = vpow.pop %v1496
        %v1498 = vsel %vm922, %v1497, 0.0
        %1499 = vadd.xlane.f32.xlu0 %v1498
        %v1500 = vpop.xlane.xlu0 %1499
        %v1501 = vrcp.pop %v1500
        %v1502 = vmul.f32 %v1497, %v1501
        %1503 = vrot.lane.b32.xlu0 %v908, 40
        %v1504 = vpop.permute.xlu0 %1503
        %v1507 = vsel %vm922, %v1502, 0
        %1509 = vmatprep.subr.mxu0 0.0
        %1510 = vmatpush1.msra.mxu0 %v1504
        %1511 = vmatprep.subr.mxu0 0.0
        %1512 = vmatpush1.msra.mxu0 0.0
        %1513 = vmatprep.subr.mxu0 0.0
        %1514 = vmatpush1.msra.mxu0 0.0
        %1515 = vmatprep.subr.mxu0 0.0
        %1516 = vmatpush1.msra.mxu0 0.0
        %1517 = vmatprep.subr.mxu0 0.0
        %1518 = vmatpush1.msra.mxu0 0.0
        %1519 = vmatprep.subr.mxu0 0.0
        %1520 = vmatpush1.msra.mxu0 0.0
        %1521 = vmatprep.subr.mxu0 0.0
        %1522 = vmatpush1.msra.mxu0 0.0
        %1523 = vmatprep.subr.mxu0 0.0
        %1524 = vmatpush1.msra.mxu0 0.0
        %1525 = vmatprep.subr.mxu0 0.0
        %1526 = vmatpush1.msra.mxu0 0.0
        %1527 = vmatprep.subr.mxu0 0.0
        %1528 = vmatpush1.msra.mxu0 0.0
        %1529 = vmatprep.subr.mxu0 0.0
        %1530 = vmatpush1.msra.mxu0 0.0
        %1531 = vmatprep.subr.mxu0 0.0
        %1532 = vmatpush1.msra.mxu0 0.0
        %1533 = vmatprep.subr.mxu0 0.0
        %1534 = vmatpush1.msra.mxu0 0.0
        %1535 = vmatprep.subr.mxu0 0.0
        %1536 = vmatpush1.msra.mxu0 0.0
        %1537 = vmatprep.subr.mxu0 0.0
        %1538 = vmatpush1.msra.mxu0 0.0
        %1539 = vmatprep.subr.mxu0 0.0
        %1540 = vmatpush1.msra.mxu0 0.0
        %1541 = vmatprep.subr.mxu0 0.0
        %1542 = vmatpush1.msra.mxu0 0.0
        %1543 = vmatprep.subr.mxu0 0.0
        %1544 = vmatpush1.msra.mxu0 0.0
        %1545 = vmatprep.subr.mxu0 0.0
        %1546 = vmatpush1.msra.mxu0 0.0
        %1547 = vmatprep.subr.mxu0 0.0
        %1548 = vmatpush1.msra.mxu0 0.0
        %1549 = vmatprep.subr.mxu0 0.0
        %1550 = vmatpush1.msra.mxu0 0.0
        %1551 = vmatprep.subr.mxu0 0.0
        %1552 = vmatpush1.msra.mxu0 0.0
        %1553 = vmatprep.subr.mxu0 0.0
        %1554 = vmatpush1.msra.mxu0 0.0
        %1555 = vmatprep.subr.mxu0 0.0
        %1556 = vmatpush1.msra.mxu0 0.0
        %1557 = vmatprep.subr.mxu0 0.0
        %1558 = vmatpush1.msra.mxu0 0.0
        %1559 = vmatprep.subr.mxu0 0.0
        %1560 = vmatpush1.msra.mxu0 0.0
        %1561 = vmatprep.subr.mxu0 0.0
        %1562 = vmatpush1.msra.mxu0 0.0
        %1563 = vmatprep.subr.mxu0 0.0
        %1564 = vmatpush1.msra.mxu0 0.0
        %1565 = vmatprep.subr.mxu0 0.0
        %1566 = vmatpush1.msra.mxu0 0.0
        %1567 = vmatprep.subr.mxu0 0.0
        %1568 = vmatpush1.msra.mxu0 0.0
        %1569 = vmatprep.subr.mxu0 0.0
        %1570 = vmatpush1.msra.mxu0 0.0
        %1571 = vmatprep.subr.mxu0 0.0
        %1572 = vmatpush1.msra.mxu0 0.0
        %1573 = vmatprep.mubr.f32.mxu0 0.0
        %1574 = vmatmul.mubr.f32.gmra.mrb[0].mxu0 %v1507
        %v1575 = vpop.f32.mrb[0].mxu0
        %v1576 = vadd.f32 0.0, %v1575
        %v1577 = vpop.f32.mrb[0].mxu0
        %1578 = vdwg.mxu0
        %1580 = vrot.lane.b32.xlu0 %v1246, 8
        %v1581 = vpop.permute.xlu0 %1580
        %1584 = vrot.lane.b32.xlu0 %v1411, 16
        %v1585 = vpop.permute.xlu0 %1584
        %1588 = vrot.lane.b32.xlu0 %v1576, 24
        %v1589 = vpop.permute.xlu0 %1588
        %v1591 = vsel %vm922, %v1081, %v1581
        %vm1592 = vcmask 130048
        %v1593 = vsel %vm1592, %v1591, %v1585
        %vm1594 = vcmask 195584
        %v1595 = vsel %vm1594, %v1593, %v1589
        %v1596 = vlaneseq
        %v1597 = vshrl.u32 %v1596, 7
        %v1598 = vsub.s32 1, %v1597
        %v1599 = vrot.slane %v914, %v1598
        %1601 = vrot.lane.b32.xlu0 %v911, 96
        %v1602 = vpop.permute.xlu0 %1601
        %v1603 = vsel %vm922, %v911, 0
        %v1605 = vsel %vm922, %v1602, 0
        %1607 = vmatprep.subr.mxu0 0.0
        %1608 = vmatpush1.xpose.msra.mxu0 %v1605
        %1609 = vmatprep.subr.mxu0 0.0
        %1610 = vmatpush1.xpose.msra.mxu0 0.0
        %1611 = vmatprep.subr.mxu0 0.0
        %1612 = vmatpush1.xpose.msra.mxu0 0.0
        %1613 = vmatprep.subr.mxu0 0.0
        %1614 = vmatpush1.xpose.msra.mxu0 0.0
        %1615 = vmatprep.subr.mxu0 0.0
        %1616 = vmatpush1.xpose.msra.mxu0 0.0
        %1617 = vmatprep.subr.mxu0 0.0
        %1618 = vmatpush1.xpose.msra.mxu0 0.0
        %1619 = vmatprep.subr.mxu0 0.0
        %1620 = vmatpush1.xpose.msra.mxu0 0.0
        %1621 = vmatprep.subr.mxu0 0.0
        %1622 = vmatpush1.xpose.msra.mxu0 0.0
        %1623 = vmatprep.subr.mxu0 0.0
        %1624 = vmatpush1.xpose.msra.mxu0 0.0
        %1625 = vmatprep.subr.mxu0 0.0
        %1626 = vmatpush1.xpose.msra.mxu0 0.0
        %1627 = vmatprep.subr.mxu0 0.0
        %1628 = vmatpush1.xpose.msra.mxu0 0.0
        %1629 = vmatprep.subr.mxu0 0.0
        %1630 = vmatpush1.xpose.msra.mxu0 0.0
        %1631 = vmatprep.subr.mxu0 0.0
        %1632 = vmatpush1.xpose.msra.mxu0 0.0
        %1633 = vmatprep.subr.mxu0 0.0
        %1634 = vmatpush1.xpose.msra.mxu0 0.0
        %1635 = vmatprep.subr.mxu0 0.0
        %1636 = vmatpush1.xpose.msra.mxu0 0.0
        %1637 = vmatprep.subr.mxu0 0.0
        %1638 = vmatpush1.xpose.msra.mxu0 0.0
        %1639 = vmatprep.subr.mxu0 0.0
        %1640 = vmatpush1.xpose.msra.mxu0 0.0
        %1641 = vmatprep.subr.mxu0 0.0
        %1642 = vmatpush1.xpose.msra.mxu0 0.0
        %1643 = vmatprep.subr.mxu0 0.0
        %1644 = vmatpush1.xpose.msra.mxu0 0.0
        %1645 = vmatprep.subr.mxu0 0.0
        %1646 = vmatpush1.xpose.msra.mxu0 0.0
        %1647 = vmatprep.subr.mxu0 0.0
        %1648 = vmatpush1.xpose.msra.mxu0 0.0
        %1649 = vmatprep.subr.mxu0 0.0
        %1650 = vmatpush1.xpose.msra.mxu0 0.0
        %1651 = vmatprep.subr.mxu0 0.0
        %1652 = vmatpush1.xpose.msra.mxu0 0.0
        %1653 = vmatprep.subr.mxu0 0.0
        %1654 = vmatpush1.xpose.msra.mxu0 0.0
        %1655 = vmatprep.subr.mxu0 0.0
        %1656 = vmatpush1.xpose.msra.mxu0 0.0
        %1657 = vmatprep.subr.mxu0 0.0
        %1658 = vmatpush1.xpose.msra.mxu0 0.0
        %1659 = vmatprep.subr.mxu0 0.0
        %1660 = vmatpush1.xpose.msra.mxu0 0.0
        %1661 = vmatprep.subr.mxu0 0.0
        %1662 = vmatpush1.xpose.msra.mxu0 0.0
        %1663 = vmatprep.subr.mxu0 0.0
        %1664 = vmatpush1.xpose.msra.mxu0 0.0
        %1665 = vmatprep.subr.mxu0 0.0
        %1666 = vmatpush1.xpose.msra.mxu0 0.0
        %1667 = vmatprep.subr.mxu0 0.0
        %1668 = vmatpush1.xpose.msra.mxu0 0.0
        %1669 = vmatprep.subr.mxu0 0.0
        %1670 = vmatpush1.xpose.msra.mxu0 0.0
        %1671 = vmatprep.mubr.f32.mxu0 0.0
        %1672 = vmatmul.mubr.f32.gmra.mrb[0].mxu0 %v1603
        %v1673 = vpop.f32.mrb[0].mxu0
        %v1674 = vadd.f32 %v1599, %v1673
        %v1675 = vpop.f32.mrb[0].mxu0
        %1676 = vdwg.mxu0
        %v1677 = vsel %vm922, %v1674, -inf
        %1678 = vmax.xlane.f32.xlu0 %v1677
        %v1679 = vpop.xlane.xlu0 %1678
        %v1680 = vsub.f32 %v1674, %v1679
        %v1681 = vmul.f32 %v1680, 1.442695
        %v1682 = vpow.pop %v1681
        %v1683 = vsel %vm922, %v1682, 0.0
        %1684 = vadd.xlane.f32.xlu0 %v1683
        %v1685 = vpop.xlane.xlu0 %1684
        %v1686 = vrcp.pop %v1685
        %v1687 = vmul.f32 %v1682, %v1686
        %1688 = vrot.lane.b32.xlu0 %v911, 64
        %v1689 = vpop.permute.xlu0 %1688
        %v1692 = vsel %vm922, %v1687, 0
        %1694 = vmatprep.subr.mxu0 0.0
        %1695 = vmatpush1.msra.mxu0 %v1689
        %1696 = vmatprep.subr.mxu0 0.0
        %1697 = vmatpush1.msra.mxu0 0.0
        %1698 = vmatprep.subr.mxu0 0.0
        %1699 = vmatpush1.msra.mxu0 0.0
        %1700 = vmatprep.subr.mxu0 0.0
        %1701 = vmatpush1.msra.mxu0 0.0
        %1702 = vmatprep.subr.mxu0 0.0
        %1703 = vmatpush1.msra.mxu0 0.0
        %1704 = vmatprep.subr.mxu0 0.0
        %1705 = vmatpush1.msra.mxu0 0.0
        %1706 = vmatprep.subr.mxu0 0.0
        %1707 = vmatpush1.msra.mxu0 0.0
        %1708 = vmatprep.subr.mxu0 0.0
        %1709 = vmatpush1.msra.mxu0 0.0
        %1710 = vmatprep.subr.mxu0 0.0
        %1711 = vmatpush1.msra.mxu0 0.0
        %1712 = vmatprep.subr.mxu0 0.0
        %1713 = vmatpush1.msra.mxu0 0.0
        %1714 = vmatprep.subr.mxu0 0.0
        %1715 = vmatpush1.msra.mxu0 0.0
        %1716 = vmatprep.subr.mxu0 0.0
        %1717 = vmatpush1.msra.mxu0 0.0
        %1718 = vmatprep.subr.mxu0 0.0
        %1719 = vmatpush1.msra.mxu0 0.0
        %1720 = vmatprep.subr.mxu0 0.0
        %1721 = vmatpush1.msra.mxu0 0.0
        %1722 = vmatprep.subr.mxu0 0.0
        %1723 = vmatpush1.msra.mxu0 0.0
        %1724 = vmatprep.subr.mxu0 0.0
        %1725 = vmatpush1.msra.mxu0 0.0
        %1726 = vmatprep.subr.mxu0 0.0
        %1727 = vmatpush1.msra.mxu0 0.0
        %1728 = vmatprep.subr.mxu0 0.0
        %1729 = vmatpush1.msra.mxu0 0.0
        %1730 = vmatprep.subr.mxu0 0.0
        %1731 = vmatpush1.msra.mxu0 0.0
        %1732 = vmatprep.subr.mxu0 0.0
        %1733 = vmatpush1.msra.mxu0 0.0
        %1734 = vmatprep.subr.mxu0 0.0
        %1735 = vmatpush1.msra.mxu0 0.0
        %1736 = vmatprep.subr.mxu0 0.0
        %1737 = vmatpush1.msra.mxu0 0.0
        %1738 = vmatprep.subr.mxu0 0.0
        %1739 = vmatpush1.msra.mxu0 0.0
        %1740 = vmatprep.subr.mxu0 0.0
        %1741 = vmatpush1.msra.mxu0 0.0
        %1742 = vmatprep.subr.mxu0 0.0
        %1743 = vmatpush1.msra.mxu0 0.0
        %1744 = vmatprep.subr.mxu0 0.0
        %1745 = vmatpush1.msra.mxu0 0.0
        %1746 = vmatprep.subr.mxu0 0.0
        %1747 = vmatpush1.msra.mxu0 0.0
        %1748 = vmatprep.subr.mxu0 0.0
        %1749 = vmatpush1.msra.mxu0 0.0
        %1750 = vmatprep.subr.mxu0 0.0
        %1751 = vmatpush1.msra.mxu0 0.0
        %1752 = vmatprep.subr.mxu0 0.0
        %1753 = vmatpush1.msra.mxu0 0.0
        %1754 = vmatprep.subr.mxu0 0.0
        %1755 = vmatpush1.msra.mxu0 0.0
        %1756 = vmatprep.subr.mxu0 0.0
        %1757 = vmatpush1.msra.mxu0 0.0
        %1758 = vmatprep.mubr.f32.mxu0 0.0
        %1759 = vmatmul.mubr.f32.gmra.mrb[0].mxu0 %v1692
        %v1760 = vpop.f32.mrb[0].mxu0
        %v1761 = vadd.f32 0.0, %v1760
        %v1762 = vpop.f32.mrb[0].mxu0
        %1763 = vdwg.mxu0
        %1764 = vrot.lane.b32.xlu0 %v911, 120
        %v1765 = vpop.permute.xlu0 %1764
        %1766 = vrot.lane.b32.xlu0 %v911, 88
        %v1767 = vpop.permute.xlu0 %1766
        %v1768 = vsel %vm922, %v1765, 0
        %v1770 = vsel %vm922, %v1767, 0
        %1772 = vmatprep.subr.mxu0 0.0
        %1773 = vmatpush1.xpose.msra.mxu0 %v1770
        %1774 = vmatprep.subr.mxu0 0.0
        %1775 = vmatpush1.xpose.msra.mxu0 0.0
        %1776 = vmatprep.subr.mxu0 0.0
        %1777 = vmatpush1.xpose.msra.mxu0 0.0
        %1778 = vmatprep.subr.mxu0 0.0
        %1779 = vmatpush1.xpose.msra.mxu0 0.0
        %1780 = vmatprep.subr.mxu0 0.0
        %1781 = vmatpush1.xpose.msra.mxu0 0.0
        %1782 = vmatprep.subr.mxu0 0.0
        %1783 = vmatpush1.xpose.msra.mxu0 0.0
        %1784 = vmatprep.subr.mxu0 0.0
        %1785 = vmatpush1.xpose.msra.mxu0 0.0
        %1786 = vmatprep.subr.mxu0 0.0
        %1787 = vmatpush1.xpose.msra.mxu0 0.0
        %1788 = vmatprep.subr.mxu0 0.0
        %1789 = vmatpush1.xpose.msra.mxu0 0.0
        %1790 = vmatprep.subr.mxu0 0.0
        %1791 = vmatpush1.xpose.msra.mxu0 0.0
        %1792 = vmatprep.subr.mxu0 0.0
        %1793 = vmatpush1.xpose.msra.mxu0 0.0
        %1794 = vmatprep.subr.mxu0 0.0
        %1795 = vmatpush1.xpose.msra.mxu0 0.0
        %1796 = vmatprep.subr.mxu0 0.0
        %1797 = vmatpush1.xpose.msra.mxu0 0.0
        %1798 = vmatprep.subr.mxu0 0.0
        %1799 = vmatpush1.xpose.msra.mxu0 0.0
        %1800 = vmatprep.subr.mxu0 0.0
        %1801 = vmatpush1.xpose.msra.mxu0 0.0
        %1802 = vmatprep.subr.mxu0 0.0
        %1803 = vmatpush1.xpose.msra.mxu0 0.0
        %1804 = vmatprep.subr.mxu0 0.0
        %1805 = vmatpush1.xpose.msra.mxu0 0.0
        %1806 = vmatprep.subr.mxu0 0.0
        %1807 = vmatpush1.xpose.msra.mxu0 0.0
        %1808 = vmatprep.subr.mxu0 0.0
        %1809 = vmatpush1.xpose.msra.mxu0 0.0
        %1810 = vmatprep.subr.mxu0 0.0
        %1811 = vmatpush1.xpose.msra.mxu0 0.0
        %1812 = vmatprep.subr.mxu0 0.0
        %1813 = vmatpush1.xpose.msra.mxu0 0.0
        %1814 = vmatprep.subr.mxu0 0.0
        %1815 = vmatpush1.xpose.msra.mxu0 0.0
        %1816 = vmatprep.subr.mxu0 0.0
        %1817 = vmatpush1.xpose.msra.mxu0 0.0
        %1818 = vmatprep.subr.mxu0 0.0
        %1819 = vmatpush1.xpose.msra.mxu0 0.0
        %1820 = vmatprep.subr.mxu0 0.0
        %1821 = vmatpush1.xpose.msra.mxu0 0.0
        %1822 = vmatprep.subr.mxu0 0.0
        %1823 = vmatpush1.xpose.msra.mxu0 0.0
        %1824 = vmatprep.subr.mxu0 0.0
        %1825 = vmatpush1.xpose.msra.mxu0 0.0
        %1826 = vmatprep.subr.mxu0 0.0
        %1827 = vmatpush1.xpose.msra.mxu0 0.0
        %1828 = vmatprep.subr.mxu0 0.0
        %1829 = vmatpush1.xpose.msra.mxu0 0.0
        %1830 = vmatprep.subr.mxu0 0.0
        %1831 = vmatpush1.xpose.msra.mxu0 0.0
        %1832 = vmatprep.subr.mxu0 0.0
        %1833 = vmatpush1.xpose.msra.mxu0 0.0
        %1834 = vmatprep.subr.mxu0 0.0
        %1835 = vmatpush1.xpose.msra.mxu0 0.0
        %1836 = vmatprep.mubr.f32.mxu0 0.0
        %1837 = vmatmul.mubr.f32.gmra.mrb[0].mxu0 %v1768
        %v1838 = vpop.f32.mrb[0].mxu0
        %v1839 = vadd.f32 %v1599, %v1838
        %v1840 = vpop.f32.mrb[0].mxu0
        %1841 = vdwg.mxu0
        %v1842 = vsel %vm922, %v1839, -inf
        %1843 = vmax.xlane.f32.xlu0 %v1842
        %v1844 = vpop.xlane.xlu0 %1843
        %v1845 = vsub.f32 %v1839, %v1844
        %v1846 = vmul.f32 %v1845, 1.442695
        %v1847 = vpow.pop %v1846
        %v1848 = vsel %vm922, %v1847, 0.0
        %1849 = vadd.xlane.f32.xlu0 %v1848
        %v1850 = vpop.xlane.xlu0 %1849
        %v1851 = vrcp.pop %v1850
        %v1852 = vmul.f32 %v1847, %v1851
        %1853 = vrot.lane.b32.xlu0 %v911, 56
        %v1854 = vpop.permute.xlu0 %1853
        %v1857 = vsel %vm922, %v1852, 0
        %1859 = vmatprep.subr.mxu0 0.0
        %1860 = vmatpush1.msra.mxu0 %v1854
        %1861 = vmatprep.subr.mxu0 0.0
        %1862 = vmatpush1.msra.mxu0 0.0
        %1863 = vmatprep.subr.mxu0 0.0
        %1864 = vmatpush1.msra.mxu0 0.0
        %1865 = vmatprep.subr.mxu0 0.0
        %1866 = vmatpush1.msra.mxu0 0.0
        %1867 = vmatprep.subr.mxu0 0.0
        %1868 = vmatpush1.msra.mxu0 0.0
        %1869 = vmatprep.subr.mxu0 0.0
        %1870 = vmatpush1.msra.mxu0 0.0
        %1871 = vmatprep.subr.mxu0 0.0
        %1872 = vmatpush1.msra.mxu0 0.0
        %1873 = vmatprep.subr.mxu0 0.0
        %1874 = vmatpush1.msra.mxu0 0.0
        %1875 = vmatprep.subr.mxu0 0.0
        %1876 = vmatpush1.msra.mxu0 0.0
        %1877 = vmatprep.subr.mxu0 0.0
        %1878 = vmatpush1.msra.mxu0 0.0
        %1879 = vmatprep.subr.mxu0 0.0
        %1880 = vmatpush1.msra.mxu0 0.0
        %1881 = vmatprep.subr.mxu0 0.0
        %1882 = vmatpush1.msra.mxu0 0.0
        %1883 = vmatprep.subr.mxu0 0.0
        %1884 = vmatpush1.msra.mxu0 0.0
        %1885 = vmatprep.subr.mxu0 0.0
        %1886 = vmatpush1.msra.mxu0 0.0
        %1887 = vmatprep.subr.mxu0 0.0
        %1888 = vmatpush1.msra.mxu0 0.0
        %1889 = vmatprep.subr.mxu0 0.0
        %1890 = vmatpush1.msra.mxu0 0.0
        %1891 = vmatprep.subr.mxu0 0.0
        %1892 = vmatpush1.msra.mxu0 0.0
        %1893 = vmatprep.subr.mxu0 0.0
        %1894 = vmatpush1.msra.mxu0 0.0
        %1895 = vmatprep.subr.mxu0 0.0
        %1896 = vmatpush1.msra.mxu0 0.0
        %1897 = vmatprep.subr.mxu0 0.0
        %1898 = vmatpush1.msra.mxu0 0.0
        %1899 = vmatprep.subr.mxu0 0.0
        %1900 = vmatpush1.msra.mxu0 0.0
        %1901 = vmatprep.subr.mxu0 0.0
        %1902 = vmatpush1.msra.mxu0 0.0
        %1903 = vmatprep.subr.mxu0 0.0
        %1904 = vmatpush1.msra.mxu0 0.0
        %1905 = vmatprep.subr.mxu0 0.0
        %1906 = vmatpush1.msra.mxu0 0.0
        %1907 = vmatprep.subr.mxu0 0.0
        %1908 = vmatpush1.msra.mxu0 0.0
        %1909 = vmatprep.subr.mxu0 0.0
        %1910 = vmatpush1.msra.mxu0 0.0
        %1911 = vmatprep.subr.mxu0 0.0
        %1912 = vmatpush1.msra.mxu0 0.0
        %1913 = vmatprep.subr.mxu0 0.0
        %1914 = vmatpush1.msra.mxu0 0.0
        %1915 = vmatprep.subr.mxu0 0.0
        %1916 = vmatpush1.msra.mxu0 0.0
        %1917 = vmatprep.subr.mxu0 0.0
        %1918 = vmatpush1.msra.mxu0 0.0
        %1919 = vmatprep.subr.mxu0 0.0
        %1920 = vmatpush1.msra.mxu0 0.0
        %1921 = vmatprep.subr.mxu0 0.0
        %1922 = vmatpush1.msra.mxu0 0.0
        %1923 = vmatprep.mubr.f32.mxu0 0.0
        %1924 = vmatmul.mubr.f32.gmra.mrb[0].mxu0 %v1857
        %v1925 = vpop.f32.mrb[0].mxu0
        %v1926 = vadd.f32 0.0, %v1925
        %v1927 = vpop.f32.mrb[0].mxu0
        %1928 = vdwg.mxu0
        %1929 = vrot.lane.b32.xlu0 %v911, 112
        %v1930 = vpop.permute.xlu0 %1929
        %1931 = vrot.lane.b32.xlu0 %v911, 80
        %v1932 = vpop.permute.xlu0 %1931
        %v1933 = vsel %vm922, %v1930, 0
        %v1935 = vsel %vm922, %v1932, 0
        %1937 = vmatprep.subr.mxu0 0.0
        %1938 = vmatpush1.xpose.msra.mxu0 %v1935
        %1939 = vmatprep.subr.mxu0 0.0
        %1940 = vmatpush1.xpose.msra.mxu0 0.0
        %1941 = vmatprep.subr.mxu0 0.0
        %1942 = vmatpush1.xpose.msra.mxu0 0.0
        %1943 = vmatprep.subr.mxu0 0.0
        %1944 = vmatpush1.xpose.msra.mxu0 0.0
        %1945 = vmatprep.subr.mxu0 0.0
        %1946 = vmatpush1.xpose.msra.mxu0 0.0
        %1947 = vmatprep.subr.mxu0 0.0
        %1948 = vmatpush1.xpose.msra.mxu0 0.0
        %1949 = vmatprep.subr.mxu0 0.0
        %1950 = vmatpush1.xpose.msra.mxu0 0.0
        %1951 = vmatprep.subr.mxu0 0.0
        %1952 = vmatpush1.xpose.msra.mxu0 0.0
        %1953 = vmatprep.subr.mxu0 0.0
        %1954 = vmatpush1.xpose.msra.mxu0 0.0
        %1955 = vmatprep.subr.mxu0 0.0
        %1956 = vmatpush1.xpose.msra.mxu0 0.0
        %1957 = vmatprep.subr.mxu0 0.0
        %1958 = vmatpush1.xpose.msra.mxu0 0.0
        %1959 = vmatprep.subr.mxu0 0.0
        %1960 = vmatpush1.xpose.msra.mxu0 0.0
        %1961 = vmatprep.subr.mxu0 0.0
        %1962 = vmatpush1.xpose.msra.mxu0 0.0
        %1963 = vmatprep.subr.mxu0 0.0
        %1964 = vmatpush1.xpose.msra.mxu0 0.0
        %1965 = vmatprep.subr.mxu0 0.0
        %1966 = vmatpush1.xpose.msra.mxu0 0.0
        %1967 = vmatprep.subr.mxu0 0.0
        %1968 = vmatpush1.xpose.msra.mxu0 0.0
        %1969 = vmatprep.subr.mxu0 0.0
        %1970 = vmatpush1.xpose.msra.mxu0 0.0
        %1971 = vmatprep.subr.mxu0 0.0
        %1972 = vmatpush1.xpose.msra.mxu0 0.0
        %1973 = vmatprep.subr.mxu0 0.0
        %1974 = vmatpush1.xpose.msra.mxu0 0.0
        %1975 = vmatprep.subr.mxu0 0.0
        %1976 = vmatpush1.xpose.msra.mxu0 0.0
        %1977 = vmatprep.subr.mxu0 0.0
        %1978 = vmatpush1.xpose.msra.mxu0 0.0
        %1979 = vmatprep.subr.mxu0 0.0
        %1980 = vmatpush1.xpose.msra.mxu0 0.0
        %1981 = vmatprep.subr.mxu0 0.0
        %1982 = vmatpush1.xpose.msra.mxu0 0.0
        %1983 = vmatprep.subr.mxu0 0.0
        %1984 = vmatpush1.xpose.msra.mxu0 0.0
        %1985 = vmatprep.subr.mxu0 0.0
        %1986 = vmatpush1.xpose.msra.mxu0 0.0
        %1987 = vmatprep.subr.mxu0 0.0
        %1988 = vmatpush1.xpose.msra.mxu0 0.0
        %1989 = vmatprep.subr.mxu0 0.0
        %1990 = vmatpush1.xpose.msra.mxu0 0.0
        %1991 = vmatprep.subr.mxu0 0.0
        %1992 = vmatpush1.xpose.msra.mxu0 0.0
        %1993 = vmatprep.subr.mxu0 0.0
        %1994 = vmatpush1.xpose.msra.mxu0 0.0
        %1995 = vmatprep.subr.mxu0 0.0
        %1996 = vmatpush1.xpose.msra.mxu0 0.0
        %1997 = vmatprep.subr.mxu0 0.0
        %1998 = vmatpush1.xpose.msra.mxu0 0.0
        %1999 = vmatprep.subr.mxu0 0.0
        %2000 = vmatpush1.xpose.msra.mxu0 0.0
        %2001 = vmatprep.mubr.f32.mxu0 0.0
        %2002 = vmatmul.mubr.f32.gmra.mrb[0].mxu0 %v1933
        %v2003 = vpop.f32.mrb[0].mxu0
        %v2004 = vadd.f32 %v1599, %v2003
        %v2005 = vpop.f32.mrb[0].mxu0
        %2006 = vdwg.mxu0
        %v2007 = vsel %vm922, %v2004, -inf
        %2008 = vmax.xlane.f32.xlu0 %v2007
        %v2009 = vpop.xlane.xlu0 %2008
        %v2010 = vsub.f32 %v2004, %v2009
        %v2011 = vmul.f32 %v2010, 1.442695
        %v2012 = vpow.pop %v2011
        %v2013 = vsel %vm922, %v2012, 0.0
        %2014 = vadd.xlane.f32.xlu0 %v2013
        %v2015 = vpop.xlane.xlu0 %2014
        %v2016 = vrcp.pop %v2015
        %v2017 = vmul.f32 %v2012, %v2016
        %2018 = vrot.lane.b32.xlu0 %v911, 48
        %v2019 = vpop.permute.xlu0 %2018
        %v2022 = vsel %vm922, %v2017, 0
        %2024 = vmatprep.subr.mxu0 0.0
        %2025 = vmatpush1.msra.mxu0 %v2019
        %2026 = vmatprep.subr.mxu0 0.0
        %2027 = vmatpush1.msra.mxu0 0.0
        %2028 = vmatprep.subr.mxu0 0.0
        %2029 = vmatpush1.msra.mxu0 0.0
        %2030 = vmatprep.subr.mxu0 0.0
        %2031 = vmatpush1.msra.mxu0 0.0
        %2032 = vmatprep.subr.mxu0 0.0
        %2033 = vmatpush1.msra.mxu0 0.0
        %2034 = vmatprep.subr.mxu0 0.0
        %2035 = vmatpush1.msra.mxu0 0.0
        %2036 = vmatprep.subr.mxu0 0.0
        %2037 = vmatpush1.msra.mxu0 0.0
        %2038 = vmatprep.subr.mxu0 0.0
        %2039 = vmatpush1.msra.mxu0 0.0
        %2040 = vmatprep.subr.mxu0 0.0
        %2041 = vmatpush1.msra.mxu0 0.0
        %2042 = vmatprep.subr.mxu0 0.0
        %2043 = vmatpush1.msra.mxu0 0.0
        %2044 = vmatprep.subr.mxu0 0.0
        %2045 = vmatpush1.msra.mxu0 0.0
        %2046 = vmatprep.subr.mxu0 0.0
        %2047 = vmatpush1.msra.mxu0 0.0
        %2048 = vmatprep.subr.mxu0 0.0
        %2049 = vmatpush1.msra.mxu0 0.0
        %2050 = vmatprep.subr.mxu0 0.0
        %2051 = vmatpush1.msra.mxu0 0.0
        %2052 = vmatprep.subr.mxu0 0.0
        %2053 = vmatpush1.msra.mxu0 0.0
        %2054 = vmatprep.subr.mxu0 0.0
        %2055 = vmatpush1.msra.mxu0 0.0
        %2056 = vmatprep.subr.mxu0 0.0
        %2057 = vmatpush1.msra.mxu0 0.0
        %2058 = vmatprep.subr.mxu0 0.0
        %2059 = vmatpush1.msra.mxu0 0.0
        %2060 = vmatprep.subr.mxu0 0.0
        %2061 = vmatpush1.msra.mxu0 0.0
        %2062 = vmatprep.subr.mxu0 0.0
        %2063 = vmatpush1.msra.mxu0 0.0
        %2064 = vmatprep.subr.mxu0 0.0
        %2065 = vmatpush1.msra.mxu0 0.0
        %2066 = vmatprep.subr.mxu0 0.0
        %2067 = vmatpush1.msra.mxu0 0.0
        %2068 = vmatprep.subr.mxu0 0.0
        %2069 = vmatpush1.msra.mxu0 0.0
        %2070 = vmatprep.subr.mxu0 0.0
        %2071 = vmatpush1.msra.mxu0 0.0
        %2072 = vmatprep.subr.mxu0 0.0
        %2073 = vmatpush1.msra.mxu0 0.0
        %2074 = vmatprep.subr.mxu0 0.0
        %2075 = vmatpush1.msra.mxu0 0.0
        %2076 = vmatprep.subr.mxu0 0.0
        %2077 = vmatpush1.msra.mxu0 0.0
        %2078 = vmatprep.subr.mxu0 0.0
        %2079 = vmatpush1.msra.mxu0 0.0
        %2080 = vmatprep.subr.mxu0 0.0
        %2081 = vmatpush1.msra.mxu0 0.0
        %2082 = vmatprep.subr.mxu0 0.0
        %2083 = vmatpush1.msra.mxu0 0.0
        %2084 = vmatprep.subr.mxu0 0.0
        %2085 = vmatpush1.msra.mxu0 0.0
        %2086 = vmatprep.subr.mxu0 0.0
        %2087 = vmatpush1.msra.mxu0 0.0
        %2088 = vmatprep.mubr.f32.mxu0 0.0
        %2089 = vmatmul.mubr.f32.gmra.mrb[0].mxu0 %v2022
        %v2090 = vpop.f32.mrb[0].mxu0
        %v2091 = vadd.f32 0.0, %v2090
        %v2092 = vpop.f32.mrb[0].mxu0
        %2093 = vdwg.mxu0
        %2094 = vrot.lane.b32.xlu0 %v911, 104
        %v2095 = vpop.permute.xlu0 %2094
        %2096 = vrot.lane.b32.xlu0 %v911, 72
        %v2097 = vpop.permute.xlu0 %2096
        %v2098 = vsel %vm922, %v2095, 0
        %v2100 = vsel %vm922, %v2097, 0
        %2102 = vmatprep.subr.mxu0 0.0
        %2103 = vmatpush1.xpose.msra.mxu0 %v2100
        %2104 = vmatprep.subr.mxu0 0.0
        %2105 = vmatpush1.xpose.msra.mxu0 0.0
        %2106 = vmatprep.subr.mxu0 0.0
        %2107 = vmatpush1.xpose.msra.mxu0 0.0
        %2108 = vmatprep.subr.mxu0 0.0
        %2109 = vmatpush1.xpose.msra.mxu0 0.0
        %2110 = vmatprep.subr.mxu0 0.0
        %2111 = vmatpush1.xpose.msra.mxu0 0.0
        %2112 = vmatprep.subr.mxu0 0.0
        %2113 = vmatpush1.xpose.msra.mxu0 0.0
        %2114 = vmatprep.subr.mxu0 0.0
        %2115 = vmatpush1.xpose.msra.mxu0 0.0
        %2116 = vmatprep.subr.mxu0 0.0
        %2117 = vmatpush1.xpose.msra.mxu0 0.0
        %2118 = vmatprep.subr.mxu0 0.0
        %2119 = vmatpush1.xpose.msra.mxu0 0.0
        %2120 = vmatprep.subr.mxu0 0.0
        %2121 = vmatpush1.xpose.msra.mxu0 0.0
        %2122 = vmatprep.subr.mxu0 0.0
        %2123 = vmatpush1.xpose.msra.mxu0 0.0
        %2124 = vmatprep.subr.mxu0 0.0
        %2125 = vmatpush1.xpose.msra.mxu0 0.0
        %2126 = vmatprep.subr.mxu0 0.0
        %2127 = vmatpush1.xpose.msra.mxu0 0.0
        %2128 = vmatprep.subr.mxu0 0.0
        %2129 = vmatpush1.xpose.msra.mxu0 0.0
        %2130 = vmatprep.subr.mxu0 0.0
        %2131 = vmatpush1.xpose.msra.mxu0 0.0
        %2132 = vmatprep.subr.mxu0 0.0
        %2133 = vmatpush1.xpose.msra.mxu0 0.0
        %2134 = vmatprep.subr.mxu0 0.0
        %2135 = vmatpush1.xpose.msra.mxu0 0.0
        %2136 = vmatprep.subr.mxu0 0.0
        %2137 = vmatpush1.xpose.msra.mxu0 0.0
        %2138 = vmatprep.subr.mxu0 0.0
        %2139 = vmatpush1.xpose.msra.mxu0 0.0
        %2140 = vmatprep.subr.mxu0 0.0
        %2141 = vmatpush1.xpose.msra.mxu0 0.0
        %2142 = vmatprep.subr.mxu0 0.0
        %2143 = vmatpush1.xpose.msra.mxu0 0.0
        %2144 = vmatprep.subr.mxu0 0.0
        %2145 = vmatpush1.xpose.msra.mxu0 0.0
        %2146 = vmatprep.subr.mxu0 0.0
        %2147 = vmatpush1.xpose.msra.mxu0 0.0
        %2148 = vmatprep.subr.mxu0 0.0
        %2149 = vmatpush1.xpose.msra.mxu0 0.0
        %2150 = vmatprep.subr.mxu0 0.0
        %2151 = vmatpush1.xpose.msra.mxu0 0.0
        %2152 = vmatprep.subr.mxu0 0.0
        %2153 = vmatpush1.xpose.msra.mxu0 0.0
        %2154 = vmatprep.subr.mxu0 0.0
        %2155 = vmatpush1.xpose.msra.mxu0 0.0
        %2156 = vmatprep.subr.mxu0 0.0
        %2157 = vmatpush1.xpose.msra.mxu0 0.0
        %2158 = vmatprep.subr.mxu0 0.0
        %2159 = vmatpush1.xpose.msra.mxu0 0.0
        %2160 = vmatprep.subr.mxu0 0.0
        %2161 = vmatpush1.xpose.msra.mxu0 0.0
        %2162 = vmatprep.subr.mxu0 0.0
        %2163 = vmatpush1.xpose.msra.mxu0 0.0
        %2164 = vmatprep.subr.mxu0 0.0
        %2165 = vmatpush1.xpose.msra.mxu0 0.0
        %2166 = vmatprep.mubr.f32.mxu0 0.0
        %2167 = vmatmul.mubr.f32.gmra.mrb[0].mxu0 %v2098
        %v2168 = vpop.f32.mrb[0].mxu0
        %v2169 = vadd.f32 %v1599, %v2168
        %v2170 = vpop.f32.mrb[0].mxu0
        %2171 = vdwg.mxu0
        %v2172 = vsel %vm922, %v2169, -inf
        %2173 = vmax.xlane.f32.xlu0 %v2172
        %v2174 = vpop.xlane.xlu0 %2173
        %v2175 = vsub.f32 %v2169, %v2174
        %v2176 = vmul.f32 %v2175, 1.442695
        %v2177 = vpow.pop %v2176
        %v2178 = vsel %vm922, %v2177, 0.0
        %2179 = vadd.xlane.f32.xlu0 %v2178
        %v2180 = vpop.xlane.xlu0 %2179
        %v2181 = vrcp.pop %v2180
        %v2182 = vmul.f32 %v2177, %v2181
        %2183 = vrot.lane.b32.xlu0 %v911, 40
        %v2184 = vpop.permute.xlu0 %2183
        %v2187 = vsel %vm922, %v2182, 0
        %2189 = vmatprep.subr.mxu0 0.0
        %2190 = vmatpush1.msra.mxu0 %v2184
        %2191 = vmatprep.subr.mxu0 0.0
        %2192 = vmatpush1.msra.mxu0 0.0
        %2193 = vmatprep.subr.mxu0 0.0
        %2194 = vmatpush1.msra.mxu0 0.0
        %2195 = vmatprep.subr.mxu0 0.0
        %2196 = vmatpush1.msra.mxu0 0.0
        %2197 = vmatprep.subr.mxu0 0.0
        %2198 = vmatpush1.msra.mxu0 0.0
        %2199 = vmatprep.subr.mxu0 0.0
        %2200 = vmatpush1.msra.mxu0 0.0
        %2201 = vmatprep.subr.mxu0 0.0
        %2202 = vmatpush1.msra.mxu0 0.0
        %2203 = vmatprep.subr.mxu0 0.0
        %2204 = vmatpush1.msra.mxu0 0.0
        %2205 = vmatprep.subr.mxu0 0.0
        %2206 = vmatpush1.msra.mxu0 0.0
        %2207 = vmatprep.subr.mxu0 0.0
        %2208 = vmatpush1.msra.mxu0 0.0
        %2209 = vmatprep.subr.mxu0 0.0
        %2210 = vmatpush1.msra.mxu0 0.0
        %2211 = vmatprep.subr.mxu0 0.0
        %2212 = vmatpush1.msra.mxu0 0.0
        %2213 = vmatprep.subr.mxu0 0.0
        %2214 = vmatpush1.msra.mxu0 0.0
        %2215 = vmatprep.subr.mxu0 0.0
        %2216 = vmatpush1.msra.mxu0 0.0
        %2217 = vmatprep.subr.mxu0 0.0
        %2218 = vmatpush1.msra.mxu0 0.0
        %2219 = vmatprep.subr.mxu0 0.0
        %2220 = vmatpush1.msra.mxu0 0.0
        %2221 = vmatprep.subr.mxu0 0.0
        %2222 = vmatpush1.msra.mxu0 0.0
        %2223 = vmatprep.subr.mxu0 0.0
        %2224 = vmatpush1.msra.mxu0 0.0
        %2225 = vmatprep.subr.mxu0 0.0
        %2226 = vmatpush1.msra.mxu0 0.0
        %2227 = vmatprep.subr.mxu0 0.0
        %2228 = vmatpush1.msra.mxu0 0.0
        %2229 = vmatprep.subr.mxu0 0.0
        %2230 = vmatpush1.msra.mxu0 0.0
        %2231 = vmatprep.subr.mxu0 0.0
        %2232 = vmatpush1.msra.mxu0 0.0
        %2233 = vmatprep.subr.mxu0 0.0
        %2234 = vmatpush1.msra.mxu0 0.0
        %2235 = vmatprep.subr.mxu0 0.0
        %2236 = vmatpush1.msra.mxu0 0.0
        %2237 = vmatprep.subr.mxu0 0.0
        %2238 = vmatpush1.msra.mxu0 0.0
        %2239 = vmatprep.subr.mxu0 0.0
        %2240 = vmatpush1.msra.mxu0 0.0
        %2241 = vmatprep.subr.mxu0 0.0
        %2242 = vmatpush1.msra.mxu0 0.0
        %2243 = vmatprep.subr.mxu0 0.0
        %2244 = vmatpush1.msra.mxu0 0.0
        %2245 = vmatprep.subr.mxu0 0.0
        %2246 = vmatpush1.msra.mxu0 0.0
        %2247 = vmatprep.subr.mxu0 0.0
        %2248 = vmatpush1.msra.mxu0 0.0
        %2249 = vmatprep.subr.mxu0 0.0
        %2250 = vmatpush1.msra.mxu0 0.0
        %2251 = vmatprep.subr.mxu0 0.0
        %2252 = vmatpush1.msra.mxu0 0.0
        %2253 = vmatprep.mubr.f32.mxu0 0.0
        %2254 = vmatmul.mubr.f32.gmra.mrb[0].mxu0 %v2187
        %v2255 = vpop.f32.mrb[0].mxu0
        %v2256 = vadd.f32 0.0, %v2255
        %v2257 = vpop.f32.mrb[0].mxu0
        %2258 = vdwg.mxu0
        %2260 = vrot.lane.b32.xlu0 %v1926, 8
        %v2261 = vpop.permute.xlu0 %2260
        %2264 = vrot.lane.b32.xlu0 %v2091, 16
        %v2265 = vpop.permute.xlu0 %2264
        %2268 = vrot.lane.b32.xlu0 %v2256, 24
        %v2269 = vpop.permute.xlu0 %2268
        %v2271 = vsel %vm922, %v1761, %v2261
        %v2272 = vsel %vm1592, %v2271, %v2265
        %v2273 = vsel %vm1594, %v2272, %v2269
        %v2274 = vpack.c.bf16 %v2273, %v1595
        %v2275 = vld [vmem:[%s756] sm:$0xf]
        %v2276 = vld [vmem:[%s756 + $0x4] sm:$0xf]
        %v2277 = vld [vmem:[%s756 + $0x8] sm:$0xf]
        %v2278 = vld [vmem:[%s756 + $0xc] sm:$0xf]
        %v2279 = vld [vmem:[%s759] sm:$0x1]
        %v2281 = vlaneseq
        %v2282 = vshrl.u32 %v2281, 7
        %v2283 = vsub.s32 0, %v2282
        %v2284 = vrot.slane %v2279, %v2283
        %v2290 = vunpack.c.l.b16 %v2275
        %v2291 = vunpack.c.l.b16 %v2276
        %v2292 = vunpack.c.l.b16 %v2277
        %v2293 = vunpack.c.l.b16 %v2278
        %v2294 = vpack.c.b16 %v2291, %v2290
        %v2295 = vpack.c.b16 %v2293, %v2292
        %v2299 = vsel %vm869, %v2274, 0
        %2301 = vmatprep.subr.bf16.mxu0 0
        %2302 = vmatpush1.bf16.msra.mxu0 %v2294
        %2303 = vmatprep.subr.bf16.mxu0 0
        %2304 = vmatpush1.bf16.msra.mxu0 %v2295
        %2305 = vmatprep.subr.bf16.mxu0 0
        %2306 = vmatpush1.bf16.msra.mxu0 0
        %2307 = vmatprep.subr.bf16.mxu0 0
        %2308 = vmatpush1.bf16.msra.mxu0 0
        %2309 = vmatprep.subr.bf16.mxu0 0
        %2310 = vmatpush1.bf16.msra.mxu0 0
        %2311 = vmatprep.subr.bf16.mxu0 0
        %2312 = vmatpush1.bf16.msra.mxu0 0
        %2313 = vmatprep.subr.bf16.mxu0 0
        %2314 = vmatpush1.bf16.msra.mxu0 0
        %2315 = vmatprep.subr.bf16.mxu0 0
        %2316 = vmatpush1.bf16.msra.mxu0 0
        %2317 = vmatprep.subr.bf16.mxu0 0
        %2318 = vmatpush1.bf16.msra.mxu0 0
        %2319 = vmatprep.subr.bf16.mxu0 0
        %2320 = vmatpush1.bf16.msra.mxu0 0
        %2321 = vmatprep.subr.bf16.mxu0 0
        %2322 = vmatpush1.bf16.msra.mxu0 0
        %2323 = vmatprep.subr.bf16.mxu0 0
        %2324 = vmatpush1.bf16.msra.mxu0 0
        %2325 = vmatprep.subr.bf16.mxu0 0
        %2326 = vmatpush1.bf16.msra.mxu0 0
        %2327 = vmatprep.subr.bf16.mxu0 0
        %2328 = vmatpush1.bf16.msra.mxu0 0
        %2329 = vmatprep.subr.bf16.mxu0 0
        %2330 = vmatpush1.bf16.msra.mxu0 0
        %2331 = vmatprep.subr.bf16.mxu0 0
        %2332 = vmatpush1.bf16.msra.mxu0 0
        %2333 = vmatprep.mubr.bf16.mxu0 0
        %2334 = vmatmul.mubr.bf16.gmra.mrb[0].mxu0 %v2299
        %v2335 = vpop.f32.mrb[0].mxu0
        %v2336 = vadd.f32 %v2284, %v2335
        %v2337 = vpop.f32.mrb[0].mxu0
        %v2338 = vpop.f32.mrb[0].mxu0
        %v2339 = vadd.f32 %v2284, %v2338
        %v2340 = vpop.f32.mrb[0].mxu0
        %2341 = vdwg.mxu0
        %v2342 = vadd.f32 %v843, %v2336
        %v2343 = vadd.f32 %v844, %v2339
        %v2344 = vld [vmem:[%s762] sm:$0x1]
        %v2345 = vld [vmem:[%s765] sm:$0x1]
        %v2346 = vsel %vm869, %v2342, 0.0
        %2347 = vadd.xlane.f32.xlu0 %v2346
        %v2348 = vpop.xlane.xlu0 %2347
        %v2349 = vsel %vm869, %v2343, 0.0
        %2350 = vadd.xlane.f32.xlu0 %v2349
        %v2351 = vpop.xlane.xlu0 %2350
        %v2352 = vrcp.pop 32.0
        %v2353 = vmul.f32 %v2348, %v2352
        %v2354 = vmul.f32 %v2351, %v2352
        %v2355 = vsub.f32 %v2342, %v2353
        %v2356 = vsub.f32 %v2343, %v2354
        %v2357 = vmul.f32 %v2355, %v2355
        %v2358 = vmul.f32 %v2356, %v2356
        %v2359 = vsel %vm869, %v2357, 0.0
        %2360 = vadd.xlane.f32.xlu0 %v2359
        %v2361 = vpop.xlane.xlu0 %2360
        %v2362 = vsel %vm869, %v2358, 0.0
        %2363 = vadd.xlane.f32.xlu0 %v2362
        %v2364 = vpop.xlane.xlu0 %2363
        %v2365 = vmul.f32 %v2361, %v2352
        %v2366 = vmul.f32 %v2364, %v2352
        %v2367 = vadd.f32 %v2365, 1e-12
        %v2368 = vadd.f32 %v2366, 1e-12
        %v2369 = vrsqrt.pop %v2367
        %v2370 = vrsqrt.pop %v2368
        %v2371 = vmul.f32 %v2355, %v2369
        %v2372 = vmul.f32 %v2356, %v2370
        %v2374 = vlaneseq
        %v2375 = vshrl.u32 %v2374, 7
        %v2376 = vsub.s32 0, %v2375
        %v2377 = vrot.slane %v2344, %v2376
        %v2379 = vmul.f32 %v2371, %v2377
        %v2380 = vmul.f32 %v2372, %v2377
        %v2382 = vlaneseq
        %v2383 = vshrl.u32 %v2382, 7
        %v2384 = vsub.s32 0, %v2383
        %v2385 = vrot.slane %v2345, %v2384
        %v2387 = vadd.f32 %v2379, %v2385
        %v2388 = vadd.f32 %v2380, %v2385
        %v2389 = vpack.c.bf16 %v2388, %v2387
        %v2390 = vld [vmem:[%s770] sm:$0xf]
        %v2391 = vld [vmem:[%s770 + $0x4] sm:$0xf]
        %v2392 = vld [vmem:[%s770 + $0x8] sm:$0xf]
        %v2393 = vld [vmem:[%s770 + $0xc] sm:$0xf]
        %v2394 = vld [vmem:[%s773] sm:$0x1]
        %v2396 = vlaneseq
        %v2397 = vshrl.u32 %v2396, 7
        %v2398 = vsub.s32 0, %v2397
        %v2399 = vrot.slane %v2394, %v2398
        %v2405 = vunpack.c.l.b16 %v2390
        %v2406 = vunpack.c.l.b16 %v2391
        %v2407 = vunpack.c.l.b16 %v2392
        %v2408 = vunpack.c.l.b16 %v2393
        %v2409 = vpack.c.b16 %v2406, %v2405
        %v2410 = vpack.c.b16 %v2408, %v2407
        %v2414 = vsel %vm869, %v2389, 0
        %2416 = vmatprep.subr.bf16.mxu0 0
        %2417 = vmatpush1.bf16.msra.mxu0 %v2409
        %2418 = vmatprep.subr.bf16.mxu0 0
        %2419 = vmatpush1.bf16.msra.mxu0 %v2410
        %2420 = vmatprep.subr.bf16.mxu0 0
        %2421 = vmatpush1.bf16.msra.mxu0 0
        %2422 = vmatprep.subr.bf16.mxu0 0
        %2423 = vmatpush1.bf16.msra.mxu0 0
        %2424 = vmatprep.subr.bf16.mxu0 0
        %2425 = vmatpush1.bf16.msra.mxu0 0
        %2426 = vmatprep.subr.bf16.mxu0 0
        %2427 = vmatpush1.bf16.msra.mxu0 0
        %2428 = vmatprep.subr.bf16.mxu0 0
        %2429 = vmatpush1.bf16.msra.mxu0 0
        %2430 = vmatprep.subr.bf16.mxu0 0
        %2431 = vmatpush1.bf16.msra.mxu0 0
        %2432 = vmatprep.subr.bf16.mxu0 0
        %2433 = vmatpush1.bf16.msra.mxu0 0
        %2434 = vmatprep.subr.bf16.mxu0 0
        %2435 = vmatpush1.bf16.msra.mxu0 0
        %2436 = vmatprep.subr.bf16.mxu0 0
        %2437 = vmatpush1.bf16.msra.mxu0 0
        %2438 = vmatprep.subr.bf16.mxu0 0
        %2439 = vmatpush1.bf16.msra.mxu0 0
        %2440 = vmatprep.subr.bf16.mxu0 0
        %2441 = vmatpush1.bf16.msra.mxu0 0
        %2442 = vmatprep.subr.bf16.mxu0 0
        %2443 = vmatpush1.bf16.msra.mxu0 0
        %2444 = vmatprep.subr.bf16.mxu0 0
        %2445 = vmatpush1.bf16.msra.mxu0 0
        %2446 = vmatprep.subr.bf16.mxu0 0
        %2447 = vmatpush1.bf16.msra.mxu0 0
        %2448 = vmatprep.mubr.bf16.mxu0 0
        %2449 = vmatmul.mubr.bf16.gmra.mrb[0].mxu0 %v2414
        %v2450 = vpop.f32.mrb[0].mxu0
        %v2451 = vadd.f32 %v2399, %v2450
        %v2452 = vpop.f32.mrb[0].mxu0
        %v2453 = vpop.f32.mrb[0].mxu0
        %v2454 = vadd.f32 %v2399, %v2453
        %v2455 = vpop.f32.mrb[0].mxu0
        %2456 = vdwg.mxu0
        %v2457 = vmul.f32 %v2451, 0.5
        %v2458 = vmul.f32 %v2454, 0.5
        %v2459 = vmul.f32 %v2451, 0.70710677
        %v2460 = vmul.f32 %v2454, 0.70710677
        %v2461 = verf.f32.pop %v2459
        %v2462 = verf.f32.pop %v2460
        %v2463 = vadd.f32 %v2461, 1.0
        %v2464 = vadd.f32 %v2462, 1.0
        %v2465 = vmul.f32 %v2457, %v2463
        %v2466 = vmul.f32 %v2458, %v2464
        %v2467 = vpack.c.bf16 %v2466, %v2465
        %v2468 = vld [vmem:[%s778] sm:$0xf]
        %v2469 = vld [vmem:[%s778 + $0x4] sm:$0xf]
        %v2470 = vld [vmem:[%s778 + $0x8] sm:$0xf]
        %v2471 = vld [vmem:[%s778 + $0xc] sm:$0xf]
        %v2472 = vld [vmem:[%s778 + $0x10] sm:$0xf]
        %v2473 = vld [vmem:[%s778 + $0x14] sm:$0xf]
        %v2474 = vld [vmem:[%s778 + $0x18] sm:$0xf]
        %v2475 = vld [vmem:[%s778 + $0x1c] sm:$0xf]
        %v2476 = vld [vmem:[%s781] sm:$0x1]
        %v2478 = vlaneseq
        %v2479 = vshrl.u32 %v2478, 7
        %v2480 = vsub.s32 0, %v2479
        %v2481 = vrot.slane %v2476, %v2480
        %v2491 = vunpack.c.l.b16 %v2468
        %v2492 = vunpack.c.l.b16 %v2469
        %v2493 = vunpack.c.l.b16 %v2470
        %v2494 = vunpack.c.l.b16 %v2471
        %v2495 = vunpack.c.l.b16 %v2472
        %v2496 = vunpack.c.l.b16 %v2473
        %v2497 = vunpack.c.l.b16 %v2474
        %v2498 = vunpack.c.l.b16 %v2475
        %v2499 = vpack.c.b16 %v2492, %v2491
        %v2500 = vpack.c.b16 %v2494, %v2493
        %v2501 = vpack.c.b16 %v2496, %v2495
        %v2502 = vpack.c.b16 %v2498, %v2497
        %vm2507 = vcmask 523264
        %v2509 = vsel %vm2507, %v2467, 0
        %2511 = vmatprep.subr.bf16.mxu0 0
        %2512 = vmatpush1.bf16.msra.mxu0 %v2499
        %2513 = vmatprep.subr.bf16.mxu0 0
        %2514 = vmatpush1.bf16.msra.mxu0 %v2500
        %2515 = vmatprep.subr.bf16.mxu0 0
        %2516 = vmatpush1.bf16.msra.mxu0 %v2501
        %2517 = vmatprep.subr.bf16.mxu0 0
        %2518 = vmatpush1.bf16.msra.mxu0 %v2502
        %2519 = vmatprep.subr.bf16.mxu0 0
        %2520 = vmatpush1.bf16.msra.mxu0 0
        %2521 = vmatprep.subr.bf16.mxu0 0
        %2522 = vmatpush1.bf16.msra.mxu0 0
        %2523 = vmatprep.subr.bf16.mxu0 0
        %2524 = vmatpush1.bf16.msra.mxu0 0
        %2525 = vmatprep.subr.bf16.mxu0 0
        %2526 = vmatpush1.bf16.msra.mxu0 0
        %2527 = vmatprep.subr.bf16.mxu0 0
        %2528 = vmatpush1.bf16.msra.mxu0 0
        %2529 = vmatprep.subr.bf16.mxu0 0
        %2530 = vmatpush1.bf16.msra.mxu0 0
        %2531 = vmatprep.subr.bf16.mxu0 0
        %2532 = vmatpush1.bf16.msra.mxu0 0
        %2533 = vmatprep.subr.bf16.mxu0 0
        %2534 = vmatpush1.bf16.msra.mxu0 0
        %2535 = vmatprep.subr.bf16.mxu0 0
        %2536 = vmatpush1.bf16.msra.mxu0 0
        %2537 = vmatprep.subr.bf16.mxu0 0
        %2538 = vmatpush1.bf16.msra.mxu0 0
        %2539 = vmatprep.subr.bf16.mxu0 0
        %2540 = vmatpush1.bf16.msra.mxu0 0
        %2541 = vmatprep.subr.bf16.mxu0 0
        %2542 = vmatpush1.bf16.msra.mxu0 0
        %2543 = vmatprep.mubr.bf16.mxu0 0
        %2544 = vmatmul.mubr.bf16.gmra.mrb[0].mxu0 %v2509
        %v2545 = vpop.f32.mrb[0].mxu0
        %v2546 = vadd.f32 %v2481, %v2545
        %v2547 = vpop.f32.mrb[0].mxu0
        %v2548 = vpop.f32.mrb[0].mxu0
        %v2549 = vadd.f32 %v2481, %v2548
        %v2550 = vpop.f32.mrb[0].mxu0
        %2551 = vdwg.mxu0
        %v2552 = vadd.f32 %v2387, %v2546
        %v2553 = vadd.f32 %v2388, %v2549
        %v2554 = vld [vmem:[%s784] sm:$0x1]
        %v2555 = vld [vmem:[%s787] sm:$0x1]
        %v2556 = vsel %vm869, %v2552, 0.0
        %2557 = vadd.xlane.f32.xlu0 %v2556
        %v2558 = vpop.xlane.xlu0 %2557
        %v2559 = vsel %vm869, %v2553, 0.0
        %2560 = vadd.xlane.f32.xlu0 %v2559
        %v2561 = vpop.xlane.xlu0 %2560
        %v2562 = vmul.f32 %v2558, %v2352
        %v2563 = vmul.f32 %v2561, %v2352
        %v2564 = vsub.f32 %v2552, %v2562
        %v2565 = vsub.f32 %v2553, %v2563
        %v2566 = vmul.f32 %v2564, %v2564
        %v2567 = vmul.f32 %v2565, %v2565
        %v2568 = vsel %vm869, %v2566, 0.0
        %2569 = vadd.xlane.f32.xlu0 %v2568
        %v2570 = vpop.xlane.xlu0 %2569
        %v2571 = vsel %vm869, %v2567, 0.0
        %2572 = vadd.xlane.f32.xlu0 %v2571
        %v2573 = vpop.xlane.xlu0 %2572
        %v2574 = vmul.f32 %v2570, %v2352
        %v2575 = vmul.f32 %v2573, %v2352
        %v2576 = vadd.f32 %v2574, 1e-12
        %v2577 = vadd.f32 %v2575, 1e-12
        %v2578 = vrsqrt.pop %v2576
        %v2579 = vrsqrt.pop %v2577
        %v2580 = vmul.f32 %v2564, %v2578
        %v2581 = vmul.f32 %v2565, %v2579
        %v2583 = vlaneseq
        %v2584 = vshrl.u32 %v2583, 7
        %v2585 = vsub.s32 0, %v2584
        %v2586 = vrot.slane %v2554, %v2585
        %v2588 = vmul.f32 %v2580, %v2586
        %v2589 = vmul.f32 %v2581, %v2586
        %v2591 = vlaneseq
        %v2592 = vshrl.u32 %v2591, 7
        %v2593 = vsub.s32 0, %v2592
        %v2594 = vrot.slane %v2555, %v2593
        %v2596 = vadd.f32 %v2588, %v2594
        %v2597 = vadd.f32 %v2589, %v2594
        %2598 = vst.msk [vmem:[#allocation2] sm:$0xff] %vm869, %v2596
        %2599 = vst.msk [vmem:[#allocation2 + $0x8] sm:$0xff] %vm869, %v2597
        %p2600 = scmp.eq.s32.totalorder %s32, 1
        // Predicated region
        $region105: #{bert_cased_forward.1} parent=99 // pred_check
          %p2601 = pneg %p2600
        $region106: #{bert_cased_forward.1} parent=99 // pred_check_branch
          %2603 = sbr.rel (%p2601) target = $region108
        $region107: #{bert_cased_forward.1} parent=99 // pred_region
          %v2605 = vrot.slane %v2597, 7
          %vm2607 = vcmask 1040384
          %v2608 = vsel %vm2607, %v2596, %v2605
          %v2609 = vpack.c.bf16 %v2608, %v2608
          %v2610 = vld [vmem:[%s16] sm:$0xf]
          %v2611 = vld [vmem:[%s16 + $0x4] sm:$0xf]
          %v2612 = vld [vmem:[%s16 + $0x8] sm:$0xf]
          %v2613 = vld [vmem:[%s16 + $0xc] sm:$0xf]
          %v2614 = vld [vmem:[%s17] sm:$0x1]
          %v2616 = vlaneseq
          %v2617 = vshrl.u32 %v2616, 7
          %v2618 = vsub.s32 0, %v2617
          %v2619 = vrot.slane %v2614, %v2618
          %v2625 = vunpack.c.l.b16 %v2610
          %v2626 = vunpack.c.l.b16 %v2611
          %v2627 = vunpack.c.l.b16 %v2612
          %v2628 = vunpack.c.l.b16 %v2613
          %v2629 = vpack.c.b16 %v2626, %v2625
          %v2630 = vpack.c.b16 %v2628, %v2627
          %v2634 = vsel %vm869, %v2609, 0
          %2636 = vmatprep.subr.bf16.mxu0 0
          %2637 = vmatpush1.bf16.msra.mxu0 %v2629
          %2638 = vmatprep.subr.bf16.mxu0 0
          %2639 = vmatpush1.bf16.msra.mxu0 %v2630
          %2640 = vmatprep.subr.bf16.mxu0 0
          %2641 = vmatpush1.bf16.msra.mxu0 0
          %2642 = vmatprep.subr.bf16.mxu0 0
          %2643 = vmatpush1.bf16.msra.mxu0 0
          %2644 = vmatprep.subr.bf16.mxu0 0
          %2645 = vmatpush1.bf16.msra.mxu0 0
          %2646 = vmatprep.subr.bf16.mxu0 0
          %2647 = vmatpush1.bf16.msra.mxu0 0
          %2648 = vmatprep.subr.bf16.mxu0 0
          %2649 = vmatpush1.bf16.msra.mxu0 0
          %2650 = vmatprep.subr.bf16.mxu0 0
          %2651 = vmatpush1.bf16.msra.mxu0 0
          %2652 = vmatprep.subr.bf16.mxu0 0
          %2653 = vmatpush1.bf16.msra.mxu0 0
          %2654 = vmatprep.subr.bf16.mxu0 0
          %2655 = vmatpush1.bf16.msra.mxu0 0
          %2656 = vmatprep.subr.bf16.mxu0 0
          %2657 = vmatpush1.bf16.msra.mxu0 0
          %2658 = vmatprep.subr.bf16.mxu0 0
          %2659 = vmatpush1.bf16.msra.mxu0 0
          %2660 = vmatprep.subr.bf16.mxu0 0
          %2661 = vmatpush1.bf16.msra.mxu0 0
          %2662 = vmatprep.subr.bf16.mxu0 0
          %2663 = vmatpush1.bf16.msra.mxu0 0
          %2664 = vmatprep.subr.bf16.mxu0 0
          %2665 = vmatpush1.bf16.msra.mxu0 0
          %2666 = vmatprep.subr.bf16.mxu0 0
          %2667 = vmatpush1.bf16.msra.mxu0 0
          %2668 = vmatprep.mubr.bf16.mxu0 0
          %2669 = vmatmul.mubr.bf16.gmra.mrb[0].mxu0 %v2634
          %v2670 = vpop.f32.mrb[0].mxu0
          %v2671 = vadd.f32 %v2619, %v2670
          %v2672 = vpop.f32.mrb[0].mxu0
          %v2673 = vpop.f32.mrb[0].mxu0
          %v2674 = vpop.f32.mrb[0].mxu0
          %2675 = vdwg.mxu0
          %v2676 = vtanh.pop %v2671
          %v2677 = vpack.c.bf16 %v2676, %v2676
          %v2678 = vld [vmem:[%s18] sm:$0xf]
          %v2679 = vld [vmem:[%s18 + $0x4] sm:$0xf]
          %v2680 = vld [vmem:[%s18 + $0x8] sm:$0xf]
          %v2681 = vld [vmem:[%s18 + $0xc] sm:$0xf]
          %v2682 = vld [vmem:[%s19] sm:$0x1]
          %v2684 = vlaneseq
          %v2685 = vshrl.u32 %v2684, 7
          %v2686 = vsub.s32 0, %v2685
          %v2687 = vrot.slane %v2682, %v2686
          %v2693 = vunpack.c.l.b16 %v2678
          %v2694 = vunpack.c.l.b16 %v2679
          %v2695 = vunpack.c.l.b16 %v2680
          %v2696 = vunpack.c.l.b16 %v2681
          %v2697 = vpack.c.b16 %v2694, %v2693
          %v2698 = vpack.c.b16 %v2696, %v2695
          %v2702 = vsel %vm869, %v2677, 0
          %2704 = vmatprep.subr.bf16.mxu0 0
          %2705 = vmatpush1.bf16.msra.mxu0 %v2697
          %2706 = vmatprep.subr.bf16.mxu0 0
          %2707 = vmatpush1.bf16.msra.mxu0 %v2698
          %2708 = vmatprep.subr.bf16.mxu0 0
          %2709 = vmatpush1.bf16.msra.mxu0 0
          %2710 = vmatprep.subr.bf16.mxu0 0
          %2711 = vmatpush1.bf16.msra.mxu0 0
          %2712 = vmatprep.subr.bf16.mxu0 0
          %2713 = vmatpush1.bf16.msra.mxu0 0
          %2714 = vmatprep.subr.bf16.mxu0 0
          %2715 = vmatpush1.bf16.msra.mxu0 0
          %2716 = vmatprep.subr.bf16.mxu0 0
          %2717 = vmatpush1.bf16.msra.mxu0 0
          %2718 = vmatprep.subr.bf16.mxu0 0
          %2719 = vmatpush1.bf16.msra.mxu0 0
          %2720 = vmatprep.subr.bf16.mxu0 0
          %2721 = vmatpush1.bf16.msra.mxu0 0
          %2722 = vmatprep.subr.bf16.mxu0 0
          %2723 = vmatpush1.bf16.msra.mxu0 0
          %2724 = vmatprep.subr.bf16.mxu0 0
          %2725 = vmatpush1.bf16.msra.mxu0 0
          %2726 = vmatprep.subr.bf16.mxu0 0
          %2727 = vmatpush1.bf16.msra.mxu0 0
          %2728 = vmatprep.subr.bf16.mxu0 0
          %2729 = vmatpush1.bf16.msra.mxu0 0
          %2730 = vmatprep.subr.bf16.mxu0 0
          %2731 = vmatpush1.bf16.msra.mxu0 0
          %2732 = vmatprep.subr.bf16.mxu0 0
          %2733 = vmatpush1.bf16.msra.mxu0 0
          %2734 = vmatprep.subr.bf16.mxu0 0
          %2735 = vmatpush1.bf16.msra.mxu0 0
          %2736 = vmatprep.mubr.bf16.mxu0 0
          %2737 = vmatmul.mubr.bf16.gmra.mrb[0].mxu0 %v2702
          %v2738 = vpop.f32.mrb[0].mxu0
          %v2739 = vadd.f32 %v2687, %v2738
          %v2740 = vpop.f32.mrb[0].mxu0
          %v2741 = vpop.f32.mrb[0].mxu0
          %v2742 = vpop.f32.mrb[0].mxu0
          %2743 = vdwg.mxu0
          %v2744 = vmax.f32 %v2739, 0.0
          %vm2745 = vcmask 25600
          %2746 = vst.msk [vmem:[#allocation3] sm:$0x3] %vm2745, %v2744
        $region108: #{bert_cased_forward.1} parent=99 // pred_fallthru
          _
        // Predicated region
        $region109: #{bert_cased_forward.1} parent=99 // pred_check
          %p2747 = pneg %p525
        $region110: #{bert_cased_forward.1} parent=99 // pred_check_branch
          %2749 = sbr.rel (%p2747) target = $region112
        $region111: #{bert_cased_forward.1} parent=99 // pred_region
          %s2751 = ssub.s32 32, 32
          %2752 = vsyncadd [#allocation4], %s2751
          %s2754 = sshll.u32 [#allocation3], 4
          %s2755 = int_to_ptr.vmem [resolvable:$true] %s2754
          %2757 = dma.vmem_to_hbm [thread:$0]  %s2755, 32, %s20, [#allocation4]
        $region112: #{bert_cased_forward.1} parent=99 // pred_fallthru
          _
        // Predicated region
        $region113: #{bert_cased_forward.1} parent=99 // pred_check
          %p2758 = pneg %p525
        $region114: #{bert_cased_forward.1} parent=99 // pred_check_branch
          %2760 = sbr.rel (%p2758) target = $region116
        $region115: #{bert_cased_forward.1} parent=99 // pred_region
          %2761 = dma.done [#allocation4], 32
        $region116: #{bert_cased_forward.1} parent=99 // pred_fallthru
          _
      $region100: #{bert_cased_forward.1} parent=5 // pred_fallthru
        _
      %p2762 = scmp.le.s32.totalorder 2, %s27
      // Predicated region
      $region117: #{bert_cased_forward.1} parent=5 // pred_check
        %p2763 = pneg %p2762
      $region118: #{bert_cased_forward.1} parent=5 // pred_check_branch
        %2765 = sbr.rel (%p2763) target = $region120
      $region119: #{bert_cased_forward.1} parent=5 // pred_region
        %s2766 = ssub.s32 %s27, 2
      $region120: #{bert_cased_forward.1} parent=5 // pred_fallthru
        _
    $region6: #{bert_cased_forward.1} parent=1 // loop_footer
      %s31 = sadd.s32 1, %s27
    $region7: #{bert_cased_forward.1} parent=1 // loop_footer_branch
      %26 = sbr.rel target = $region3
    $region8: #{bert_cased_forward.1} parent=1 // loop_exit
      _
    %2767 = vsyncpa [#allocation4], 1
    %s2768 = scalar_lea.sflag [#allocation4], 1
    %2769 = vsyncpa %s2768, 1

</llo_original>
